<compile_context>
chip_gen: v6e
topology: v6e:2x2x1
jax: 0.10.0
libtpu: 0.0.40
codegen_flags: <defaults>
</compile_context>

<pallas_src>
import functools

import jax
import jax.numpy as jnp
from jax import lax
from jax.experimental import pallas as pl
from jax.experimental.pallas import tpu as pltpu

LANE = 128


def _round_up(x, m):
    return (x + m - 1) // m * m


def _pick_batch_tile(n, bytes_per_image, budget_bytes):
    """Largest divisor of n whose per-step VMEM footprint fits the budget."""
    best = 1
    for d in range(1, n + 1):
        if n % d == 0 and d * bytes_per_image <= budget_bytes:
            best = d
    return best


# ---------------------------------------------------------------------------
# Kernel A: wide conv (stride-1 over the padded image) + bias,
#           optionally fused BN batch-stats accumulation and fused ReLU (no-BN case).
# ---------------------------------------------------------------------------
def _conv_bias_stats_kernel(x_ref, w_ref, b_ref, m_ref, y_ref, sum_ref, sq_ref,
                            *, n_tile, rw, wp, kh, kw, compute_stats, do_relu):
    @pl.when(pl.program_id(0) == 0)
    def _init_stats():
        sum_ref[...] = jnp.zeros_like(sum_ref)
        sq_ref[...] = jnp.zeros_like(sq_ref)

    bias = b_ref[...]                                   # (1, Cpad) f32
    cpad = bias.shape[-1]
    if compute_stats:
        mask = m_ref[...]                               # (RW, 1) f32: 1.0 at valid output pos
        s_acc = jnp.zeros((1, cpad), jnp.float32)
        q_acc = jnp.zeros((1, cpad), jnp.float32)

    for b in range(n_tile):                             # static unroll over images in block
        xb = x_ref[b]                                   # (RF, Cin) bf16
        acc = jnp.broadcast_to(bias, (rw, cpad))        # f32 accumulator with bias pre-added
        for dy in range(kh):
            for dx in range(kw):
                off = dy * wp + dx                      # flat row shift for this tap
                acc = acc + jnp.dot(xb[off:off + rw, :], w_ref[dy * kw + dx],
                                    preferred_element_type=jnp.float32)
        if do_relu:                                     # only when BN is absent
            acc = jnp.maximum(acc, 0.0)
        y_ref[b] = acc
        if compute_stats:
            am = acc * mask                             # mask out padded / out-of-window cols
            s_acc = s_acc + jnp.sum(am, axis=0, keepdims=True)
            q_acc = q_acc + jnp.sum(acc * am, axis=0, keepdims=True)

    if compute_stats:
        sum_ref[...] += s_acc                           # resident accumulators across the grid
        sq_ref[...] += q_acc


def _conv_pallas(x_flat, w3, bias2, mask2, *, n, rf, rw, cin, cpad, kh, kw, wp,
                 n_tile, compute_stats, do_relu):
    grid = (n // n_tile,)
    kern = functools.partial(
        _conv_bias_stats_kernel, n_tile=n_tile, rw=rw, wp=wp, kh=kh, kw=kw,
        compute_stats=compute_stats, do_relu=do_relu)
    out_shapes = (
        jax.ShapeDtypeStruct((n, rw, cpad), jnp.float32),   # wide conv output
        jax.ShapeDtypeStruct((1, cpad), jnp.float32),       # per-channel sum
        jax.ShapeDtypeStruct((1, cpad), jnp.float32),       # per-channel sum of squares
    )
    return pl.pallas_call(
        kern,
        out_shape=out_shapes,
        grid_spec=pltpu.PrefetchScalarGridSpec(
            num_scalar_prefetch=0,
            grid=grid,
            in_specs=[
                pl.BlockSpec((n_tile, rf, cin), lambda i: (i, 0, 0)),      # padded input (bf16)
                pl.BlockSpec((kh * kw, cin, cpad), lambda i: (0, 0, 0)),   # weights, resident
                pl.BlockSpec((1, cpad), lambda i: (0, 0)),                 # bias, resident
                pl.BlockSpec((rw, 1), lambda i: (0, 0)),                   # validity mask
            ],
            out_specs=(
                pl.BlockSpec((n_tile, rw, cpad), lambda i: (i, 0, 0)),
                pl.BlockSpec((1, cpad), lambda i: (0, 0)),                 # resident accumulator
                pl.BlockSpec((1, cpad), lambda i: (0, 0)),                 # resident accumulator
            ),
        ),
        compiler_params=pltpu.CompilerParams(
            # stats accumulate across the grid -> must stay sequential
            dimension_semantics=("arbitrary",),
            vmem_limit_bytes=32 * 1024 * 1024,
        ),
    )(x_flat, w3, bias2, mask2)


# ---------------------------------------------------------------------------
# Kernel B: BatchNorm affine (y*scale + shift) + optional ReLU, tiled over images.
# ---------------------------------------------------------------------------
def _affine_act_kernel(y_ref, sc_ref, sh_ref, o_ref, *, n_tile, do_relu):
    sc = sc_ref[...]                                    # (1, Cpad)
    sh = sh_ref[...]
    for b in range(n_tile):
        out = y_ref[b] * sc + sh                        # (RW, Cpad), lane-dense
        if do_relu:
            out = jnp.maximum(out, 0.0)
        o_ref[b] = out


def _affine_act(y, scale2, shift2, *, n_tile, do_relu):
    n, rw, cpad = y.shape
    grid = (n // n_tile,)
    kern = functools.partial(_affine_act_kernel, n_tile=n_tile, do_relu=do_relu)
    return pl.pallas_call(
        kern,
        out_shape=jax.ShapeDtypeStruct((n, rw, cpad), jnp.float32),
        grid_spec=pltpu.PrefetchScalarGridSpec(
            num_scalar_prefetch=0,
            grid=grid,
            in_specs=[
                pl.BlockSpec((n_tile, rw, cpad), lambda i: (i, 0, 0)),
                pl.BlockSpec((1, cpad), lambda i: (0, 0)),
                pl.BlockSpec((1, cpad), lambda i: (0, 0)),
            ],
            out_specs=pl.BlockSpec((n_tile, rw, cpad), lambda i: (i, 0, 0)),
        ),
        compiler_params=pltpu.CompilerParams(
            dimension_semantics=("parallel",),          # independent per image -> megacore
            vmem_limit_bytes=32 * 1024 * 1024,
        ),
    )(y, scale2, shift2)


# ---------------------------------------------------------------------------
# Wrapper: ConvModule forward. NCHW in / NCHW out (PyTorch interface).
# ---------------------------------------------------------------------------
def conv_module_forward(x, weight, bias, gamma, beta, *, stride=1, padding=0,
                        norm=None, act=None):
    n, cin, h, w = x.shape
    cout, cin_w, kh, kw = weight.shape
    assert cin == cin_w
    s = stride
    hp, wp = h + 2 * padding, w + 2 * padding
    oh = (hp - kh) // s + 1
    ow = (wp - kw) // s + 1
    hw1 = hp - kh + 1                    # stride-1 ("wide") output rows
    rw = hw1 * wp                        # wide output rows per image (flattened)
    rf = (hp + 1) * wp                   # flattened padded-input rows per image (+1 slack row)
    cpad = _round_up(cout, LANE)         # lane-dense output channels
    do_bn = (norm == 'BN')
    do_relu = (act == 'ReLU')

    # ---- layout prep (plain-JAX glue; no patch materialization, no data inflation) ----
    x_nhwc = jnp.transpose(x, (0, 2, 3, 1))                                      # (N,H,W,Cin)
    x_pad = jnp.pad(x_nhwc, ((0, 0), (padding, padding + 1), (padding, padding), (0, 0)))
    x_flat = x_pad.reshape(n, rf, cin).astype(jnp.bfloat16)                      # bf16 MXU input

    w3 = jnp.transpose(weight, (2, 3, 1, 0)).reshape(kh * kw, cin, cout)
    w3 = jnp.pad(w3, ((0, 0), (0, 0), (0, cpad - cout))).astype(jnp.bfloat16)
    bias2 = jnp.pad(bias.astype(jnp.float32).reshape(1, cout), ((0, 0), (0, cpad - cout)))

    # Validity mask over the wide stride-1 grid -> exact BN batch statistics.
    i_idx = jnp.arange(hw1)
    j_idx = jnp.arange(wp)
    row_ok = (i_idx % s == 0) & (i_idx < oh * s)
    col_ok = (j_idx % s == 0) & (j_idx < ow * s)
    mask2 = (row_ok[:, None] & col_ok[None, :]).astype(jnp.float32).reshape(rw, 1)

    # ---- kernel A: conv + bias (+ fused BN stats, or fused ReLU when no BN) ----
    # TODO(synk): images too large for VMEM would need H-tiling with a manual halo DMA (P4);
    #             very large Cin would additionally want a K grid axis with an f32 accumulator.
    bytes_per_image = 2 * (rf * cin * 2) + 2 * (rw * cpad * 4)   # double-buffered x + y
    n_tile = _pick_batch_tile(n, bytes_per_image, 6 * 1024 * 1024)
    y, ssum, ssq = _conv_pallas(
        x_flat, w3, bias2, mask2, n=n, rf=rf, rw=rw, cin=cin, cpad=cpad,
        kh=kh, kw=kw, wp=wp, n_tile=n_tile,
        compute_stats=do_bn, do_relu=(do_relu and not do_bn))

    # ---- kernel B: BatchNorm affine (+ ReLU) using the fused batch statistics ----
    if do_bn:
        m_count = float(n * oh * ow)
        mean = ssum / m_count
        var = ssq / m_count - mean * mean          # biased variance (PyTorch normalization)
        g2 = jnp.pad(gamma.astype(jnp.float32).reshape(1, cout), ((0, 0), (0, cpad - cout)))
        b2 = jnp.pad(beta.astype(jnp.float32).reshape(1, cout), ((0, 0), (0, cpad - cout)))
        scale = g2 * lax.rsqrt(var + 1e-5)
        shift = b2 - mean * scale
        nb = _pick_batch_tile(n, 4 * rw * cpad * 4, 6 * 1024 * 1024)
        y = _affine_act(y, scale, shift, n_tile=nb, do_relu=do_relu)

    # ---- extract valid positions + back to NCHW (single fused slice+transpose, model boundary) ----
    # TODO(synk): for stride>1 the kernel computes the dense (stride-1) conv and the strided
    #             subsampling happens here; a strided output BlockSpec would avoid the overcompute.
    y4 = y.reshape(n, hw1, wp, cpad)
    out = y4[:, 0:(oh - 1) * s + 1:s, 0:(ow - 1) * s + 1:s, :cout]
    return jnp.transpose(out, (0, 3, 1, 2))


# ---------------------------------------------------------------------------
# Pure-JAX reference for validation
# ---------------------------------------------------------------------------
def _reference(x, weight, bias, gamma, beta, *, stride, padding, norm, act):
    y = lax.conv_general_dilated(
        x.astype(jnp.float32), weight.astype(jnp.float32),
        window_strides=(stride, stride),
        padding=[(padding, padding), (padding, padding)],
        dimension_numbers=('NCHW', 'OIHW', 'NCHW'),
    ) + bias.reshape(1, -1, 1, 1)
    if norm == 'BN':
        mean = jnp.mean(y, axis=(0, 2, 3), keepdims=True)
        var = jnp.mean((y - mean) ** 2, axis=(0, 2, 3), keepdims=True)
        y = (y - mean) * lax.rsqrt(var + 1e-5) * gamma.reshape(1, -1, 1, 1) \
            + beta.reshape(1, -1, 1, 1)
    if act == 'ReLU':
        y = jnp.maximum(y, 0.0)
    return y


if __name__ == "__main__":
    key = jax.random.PRNGKey(0)
    k_x, k_w, k_b = jax.random.split(key, 3)

    # ConvModule(in_channels=4, out_channels=8, kernel_size=3, stride=1, padding=1,
    #            norm='BN', act='ReLU')
    N, CIN, H, W = 2, 4, 16, 16
    COUT, KH, KW = 8, 3, 3
    STRIDE, PAD = 1, 1

    x = jax.random.normal(k_x, (N, CIN, H, W), dtype=jnp.float32)
    weight = jax.random.normal(k_w, (COUT, CIN, KH, KW), dtype=jnp.float32) * 0.1
    bias = jax.random.normal(k_b, (COUT,), dtype=jnp.float32) * 0.1
    gamma = jnp.ones((COUT,), dtype=jnp.float32)   # BatchNorm2d default init
    beta = jnp.zeros((COUT,), dtype=jnp.float32)

    out = conv_module_forward(
        x, weight, bias, gamma, beta,
        stride=STRIDE, padding=PAD, norm='BN', act='ReLU',
    )
    out = jax.block_until_ready(out)

    ref = _reference(
        x, weight, bias, gamma, beta,
        stride=STRIDE, padding=PAD, norm='BN', act='ReLU',
    )
    assert out.shape == (N, COUT, H, W), out.shape
    max_err = float(jnp.max(jnp.abs(out - ref)))
    # bf16 MXU inputs (f32 accumulation) -> relaxed tolerance vs the f32 reference.
    assert jnp.allclose(out, ref, atol=5e-2, rtol=5e-2), max_err

    print("KERNEL_OK")
</pallas_src>

<mosaic_0001>
module attributes {stable_mosaic.version = 11 : i64} {
  func.func @_conv_bias_stats_kernel(%arg0: i32, %arg1: memref<2x342x4xbf16, #tpu.memory_space<vmem>>, %arg2: memref<9x4x128xbf16, #tpu.memory_space<vmem>>, %arg3: memref<1x128xf32, #tpu.memory_space<vmem>>, %arg4: memref<288x1xf32, #tpu.memory_space<vmem>>, %arg5: memref<2x288x128xf32, #tpu.memory_space<vmem>>, %arg6: memref<1x128xf32, #tpu.memory_space<vmem>>, %arg7: memref<1x128xf32, #tpu.memory_space<vmem>>) attributes {dimension_semantics = [#tpu.dimension_semantics<arbitrary>], iteration_bounds = array<i64: 1>, scalar_prefetch = 0 : i64, scratch_operands = 0 : i64, tpu.core_type = #tpu.core_type<tc>, window_params = [{transform_indices = @transform_0, window_bounds = array<i64: 2, 342, 4>}, {pipeline_mode = #tpu.pipeline_mode<synchronous>, transform_indices = @transform_1, window_bounds = array<i64: 9, 4, 128>}, {pipeline_mode = #tpu.pipeline_mode<synchronous>, transform_indices = @transform_2, window_bounds = array<i64: 1, 128>}, {pipeline_mode = #tpu.pipeline_mode<synchronous>, transform_indices = @transform_3, window_bounds = array<i64: 288, 1>}, {transform_indices = @transform_4, window_bounds = array<i64: 2, 288, 128>}, {pipeline_mode = #tpu.pipeline_mode<synchronous>, transform_indices = @transform_5, window_bounds = array<i64: 1, 128>}, {pipeline_mode = #tpu.pipeline_mode<synchronous>, transform_indices = @transform_6, window_bounds = array<i64: 1, 128>}]} {
    %c0_i32 = arith.constant 0 : i32
    %0 = arith.cmpi eq, %arg0, %c0_i32 : i32
    %1 = arith.extui %0 : i1 to i32
    %c0_i32_0 = arith.constant 0 : i32
    %2 = arith.cmpi ne, %1, %c0_i32_0 : i32
    scf.if %2 {
      %cst_93 = arith.constant 0.000000e+00 : f32
      %135 = vector.broadcast %cst_93 : f32 to vector<1x128xf32>
      %c0_94 = arith.constant 0 : index
      %c0_95 = arith.constant 0 : index
      %136 = vector.load %arg6[%c0_94, %c0_95] : memref<1x128xf32, #tpu.memory_space<vmem>>, vector<1x128xf32>
      tpu.vector_store %arg6[%c0_94, %c0_95], %135 {strides = array<i32>} : memref<1x128xf32, #tpu.memory_space<vmem>>, vector<1x128xf32>,
      %cst_96 = arith.constant 0.000000e+00 : f32
      %137 = vector.broadcast %cst_96 : f32 to vector<1x128xf32>
      %c0_97 = arith.constant 0 : index
      %c0_98 = arith.constant 0 : index
      %138 = vector.load %arg7[%c0_97, %c0_98] : memref<1x128xf32, #tpu.memory_space<vmem>>, vector<1x128xf32>
      tpu.vector_store %arg7[%c0_97, %c0_98], %137 {strides = array<i32>} : memref<1x128xf32, #tpu.memory_space<vmem>>, vector<1x128xf32>,
    } else {
    }
    %c0 = arith.constant 0 : index
    %c0_1 = arith.constant 0 : index
    %3 = vector.load %arg3[%c0, %c0_1] : memref<1x128xf32, #tpu.memory_space<vmem>>, vector<1x128xf32>
    %c0_2 = arith.constant 0 : index
    %c0_3 = arith.constant 0 : index
    %4 = vector.load %arg4[%c0_2, %c0_3] : memref<288x1xf32, #tpu.memory_space<vmem>>, vector<288x1xf32>
    %cst = arith.constant 0.000000e+00 : f32
    %5 = vector.broadcast %cst : f32 to vector<1x128xf32>
    %cst_4 = arith.constant 0.000000e+00 : f32
    %6 = vector.broadcast %cst_4 : f32 to vector<1x128xf32>
    %c0_5 = arith.constant 0 : index
    %c0_6 = arith.constant 0 : index
    %c0_7 = arith.constant 0 : index
    %7 = vector.load %arg1[%c0_5, %c0_6, %c0_7] : memref<2x342x4xbf16, #tpu.memory_space<vmem>>, vector<1x342x4xbf16>
    %8 = vector.shape_cast %7 : vector<1x342x4xbf16> to vector<342x4xbf16>
    %9 = vector.shape_cast %3 : vector<1x128xf32> to vector<1x128xf32>
    %10 = vector.broadcast %9 : vector<1x128xf32> to vector<288x128xf32>
    %11 = vector.extract_strided_slice %8 {offsets = [0, 0], sizes = [288, 4], strides = [1, 1]} : vector<342x4xbf16> to vector<288x4xbf16>
    %c0_8 = arith.constant 0 : index
    %c0_9 = arith.constant 0 : index
    %c0_10 = arith.constant 0 : index
    %12 = vector.load %arg2[%c0_8, %c0_9, %c0_10] : memref<9x4x128xbf16, #tpu.memory_space<vmem>>, vector<1x4x128xbf16>
    %13 = vector.shape_cast %12 : vector<1x4x128xbf16> to vector<4x128xbf16>
    %cst_11 = arith.constant dense<0.000000e+00> : vector<288x128xf32>
    %14 = tpu.matmul %11, %13, %cst_11 {dimension_numbers = #tpu.dot_dimension_numbers<[1], [0], [0], [1], [0, 0, 1, 1], [], []>} : vector<288x4xbf16>, vector<4x128xbf16>, vector<288x128xf32> -> vector<288x128xf32>
    %15 = arith.addf %10, %14 : vector<288x128xf32>
    %16 = vector.extract_strided_slice %8 {offsets = [1, 0], sizes = [288, 4], strides = [1, 1]} : vector<342x4xbf16> to vector<288x4xbf16>
    %c1 = arith.constant 1 : index
    %c0_12 = arith.constant 0 : index
    %c0_13 = arith.constant 0 : index
    %17 = vector.load %arg2[%c1, %c0_12, %c0_13] : memref<9x4x128xbf16, #tpu.memory_space<vmem>>, vector<1x4x128xbf16>
    %18 = vector.shape_cast %17 : vector<1x4x128xbf16> to vector<4x128xbf16>
    %cst_14 = arith.constant dense<0.000000e+00> : vector<288x128xf32>
    %19 = tpu.matmul %16, %18, %cst_14 {dimension_numbers = #tpu.dot_dimension_numbers<[1], [0], [0], [1], [0, 0, 1, 1], [], []>} : vector<288x4xbf16>, vector<4x128xbf16>, vector<288x128xf32> -> vector<288x128xf32>
    %20 = arith.addf %15, %19 : vector<288x128xf32>
    %21 = vector.extract_strided_slice %8 {offsets = [2, 0], sizes = [288, 4], strides = [1, 1]} : vector<342x4xbf16> to vector<288x4xbf16>
    %c2 = arith.constant 2 : index
    %c0_15 = arith.constant 0 : index
    %c0_16 = arith.constant 0 : index
    %22 = vector.load %arg2[%c2, %c0_15, %c0_16] : memref<9x4x128xbf16, #tpu.memory_space<vmem>>, vector<1x4x128xbf16>
    %23 = vector.shape_cast %22 : vector<1x4x128xbf16> to vector<4x128xbf16>
    %cst_17 = arith.constant dense<0.000000e+00> : vector<288x128xf32>
    %24 = tpu.matmul %21, %23, %cst_17 {dimension_numbers = #tpu.dot_dimension_numbers<[1], [0], [0], [1], [0, 0, 1, 1], [], []>} : vector<288x4xbf16>, vector<4x128xbf16>, vector<288x128xf32> -> vector<288x128xf32>
    %25 = arith.addf %20, %24 : vector<288x128xf32>
    %26 = vector.extract_strided_slice %8 {offsets = [18, 0], sizes = [288, 4], strides = [1, 1]} : vector<342x4xbf16> to vector<288x4xbf16>
    %c3 = arith.constant 3 : index
    %c0_18 = arith.constant 0 : index
    %c0_19 = arith.constant 0 : index
    %27 = vector.load %arg2[%c3, %c0_18, %c0_19] : memref<9x4x128xbf16, #tpu.memory_space<vmem>>, vector<1x4x128xbf16>
    %28 = vector.shape_cast %27 : vector<1x4x128xbf16> to vector<4x128xbf16>
    %cst_20 = arith.constant dense<0.000000e+00> : vector<288x128xf32>
    %29 = tpu.matmul %26, %28, %cst_20 {dimension_numbers = #tpu.dot_dimension_numbers<[1], [0], [0], [1], [0, 0, 1, 1], [], []>} : vector<288x4xbf16>, vector<4x128xbf16>, vector<288x128xf32> -> vector<288x128xf32>
    %30 = arith.addf %25, %29 : vector<288x128xf32>
    %31 = vector.extract_strided_slice %8 {offsets = [19, 0], sizes = [288, 4], strides = [1, 1]} : vector<342x4xbf16> to vector<288x4xbf16>
    %c4 = arith.constant 4 : index
    %c0_21 = arith.constant 0 : index
    %c0_22 = arith.constant 0 : index
    %32 = vector.load %arg2[%c4, %c0_21, %c0_22] : memref<9x4x128xbf16, #tpu.memory_space<vmem>>, vector<1x4x128xbf16>
    %33 = vector.shape_cast %32 : vector<1x4x128xbf16> to vector<4x128xbf16>
    %cst_23 = arith.constant dense<0.000000e+00> : vector<288x128xf32>
    %34 = tpu.matmul %31, %33, %cst_23 {dimension_numbers = #tpu.dot_dimension_numbers<[1], [0], [0], [1], [0, 0, 1, 1], [], []>} : vector<288x4xbf16>, vector<4x128xbf16>, vector<288x128xf32> -> vector<288x128xf32>
    %35 = arith.addf %30, %34 : vector<288x128xf32>
    %36 = vector.extract_strided_slice %8 {offsets = [20, 0], sizes = [288, 4], strides = [1, 1]} : vector<342x4xbf16> to vector<288x4xbf16>
    %c5 = arith.constant 5 : index
    %c0_24 = arith.constant 0 : index
    %c0_25 = arith.constant 0 : index
    %37 = vector.load %arg2[%c5, %c0_24, %c0_25] : memref<9x4x128xbf16, #tpu.memory_space<vmem>>, vector<1x4x128xbf16>
    %38 = vector.shape_cast %37 : vector<1x4x128xbf16> to vector<4x128xbf16>
    %cst_26 = arith.constant dense<0.000000e+00> : vector<288x128xf32>
    %39 = tpu.matmul %36, %38, %cst_26 {dimension_numbers = #tpu.dot_dimension_numbers<[1], [0], [0], [1], [0, 0, 1, 1], [], []>} : vector<288x4xbf16>, vector<4x128xbf16>, vector<288x128xf32> -> vector<288x128xf32>
    %40 = arith.addf %35, %39 : vector<288x128xf32>
    %41 = vector.extract_strided_slice %8 {offsets = [36, 0], sizes = [288, 4], strides = [1, 1]} : vector<342x4xbf16> to vector<288x4xbf16>
    %c6 = arith.constant 6 : index
    %c0_27 = arith.constant 0 : index
    %c0_28 = arith.constant 0 : index
    %42 = vector.load %arg2[%c6, %c0_27, %c0_28] : memref<9x4x128xbf16, #tpu.memory_space<vmem>>, vector<1x4x128xbf16>
    %43 = vector.shape_cast %42 : vector<1x4x128xbf16> to vector<4x128xbf16>
    %cst_29 = arith.constant dense<0.000000e+00> : vector<288x128xf32>
    %44 = tpu.matmul %41, %43, %cst_29 {dimension_numbers = #tpu.dot_dimension_numbers<[1], [0], [0], [1], [0, 0, 1, 1], [], []>} : vector<288x4xbf16>, vector<4x128xbf16>, vector<288x128xf32> -> vector<288x128xf32>
    %45 = arith.addf %40, %44 : vector<288x128xf32>
    %46 = vector.extract_strided_slice %8 {offsets = [37, 0], sizes = [288, 4], strides = [1, 1]} : vector<342x4xbf16> to vector<288x4xbf16>
    %c7 = arith.constant 7 : index
    %c0_30 = arith.constant 0 : index
    %c0_31 = arith.constant 0 : index
    %47 = vector.load %arg2[%c7, %c0_30, %c0_31] : memref<9x4x128xbf16, #tpu.memory_space<vmem>>, vector<1x4x128xbf16>
    %48 = vector.shape_cast %47 : vector<1x4x128xbf16> to vector<4x128xbf16>
    %cst_32 = arith.constant dense<0.000000e+00> : vector<288x128xf32>
    %49 = tpu.matmul %46, %48, %cst_32 {dimension_numbers = #tpu.dot_dimension_numbers<[1], [0], [0], [1], [0, 0, 1, 1], [], []>} : vector<288x4xbf16>, vector<4x128xbf16>, vector<288x128xf32> -> vector<288x128xf32>
    %50 = arith.addf %45, %49 : vector<288x128xf32>
    %51 = vector.extract_strided_slice %8 {offsets = [38, 0], sizes = [288, 4], strides = [1, 1]} : vector<342x4xbf16> to vector<288x4xbf16>
    %c8 = arith.constant 8 : index
    %c0_33 = arith.constant 0 : index
    %c0_34 = arith.constant 0 : index
    %52 = vector.load %arg2[%c8, %c0_33, %c0_34] : memref<9x4x128xbf16, #tpu.memory_space<vmem>>, vector<1x4x128xbf16>
    %53 = vector.shape_cast %52 : vector<1x4x128xbf16> to vector<4x128xbf16>
    %cst_35 = arith.constant dense<0.000000e+00> : vector<288x128xf32>
    %54 = tpu.matmul %51, %53, %cst_35 {dimension_numbers = #tpu.dot_dimension_numbers<[1], [0], [0], [1], [0, 0, 1, 1], [], []>} : vector<288x4xbf16>, vector<4x128xbf16>, vector<288x128xf32> -> vector<288x128xf32>
    %55 = arith.addf %50, %54 : vector<288x128xf32>
    %c0_36 = arith.constant 0 : index
    %c0_37 = arith.constant 0 : index
    %c0_38 = arith.constant 0 : index
    %56 = vector.load %arg5[%c0_36, %c0_37, %c0_38] : memref<2x288x128xf32, #tpu.memory_space<vmem>>, vector<1x288x128xf32>
    %57 = vector.shape_cast %56 : vector<1x288x128xf32> to vector<288x128xf32>
    %58 = vector.shape_cast %55 : vector<288x128xf32> to vector<1x288x128xf32>
    tpu.vector_store %arg5[%c0_36, %c0_37, %c0_38], %58 {strides = array<i32>} : memref<2x288x128xf32, #tpu.memory_space<vmem>>, vector<1x288x128xf32>,
    %59 = vector.broadcast %4 : vector<288x1xf32> to vector<288x128xf32>
    %60 = arith.mulf %55, %59 : vector<288x128xf32>
    %cst_39 = arith.constant dense<0.000000e+00> : vector<128xf32>
    %61 = vector.multi_reduction <add>, %60, %cst_39 [0] : vector<288x128xf32> to vector<128xf32>
    %62 = vector.shape_cast %61 : vector<128xf32> to vector<1x128xf32>
    %63 = arith.addf %5, %62 : vector<1x128xf32>
    %64 = arith.mulf %55, %60 : vector<288x128xf32>
    %cst_40 = arith.constant dense<0.000000e+00> : vector<128xf32>
    %65 = vector.multi_reduction <add>, %64, %cst_40 [0] : vector<288x128xf32> to vector<128xf32>
    %66 = vector.shape_cast %65 : vector<128xf32> to vector<1x128xf32>
    %67 = arith.addf %6, %66 : vector<1x128xf32>
    %c1_41 = arith.constant 1 : index
    %c0_42 = arith.constant 0 : index
    %c0_43 = arith.constant 0 : index
    %68 = vector.load %arg1[%c1_41, %c0_42, %c0_43] : memref<2x342x4xbf16, #tpu.memory_space<vmem>>, vector<1x342x4xbf16>
    %69 = vector.shape_cast %68 : vector<1x342x4xbf16> to vector<342x4xbf16>
    %70 = vector.shape_cast %3 : vector<1x128xf32> to vector<1x128xf32>
    %71 = vector.broadcast %70 : vector<1x128xf32> to vector<288x128xf32>
    %72 = vector.extract_strided_slice %69 {offsets = [0, 0], sizes = [288, 4], strides = [1, 1]} : vector<342x4xbf16> to vector<288x4xbf16>
    %c0_44 = arith.constant 0 : index
    %c0_45 = arith.constant 0 : index
    %c0_46 = arith.constant 0 : index
    %73 = vector.load %arg2[%c0_44, %c0_45, %c0_46] : memref<9x4x128xbf16, #tpu.memory_space<vmem>>, vector<1x4x128xbf16>
    %74 = vector.shape_cast %73 : vector<1x4x128xbf16> to vector<4x128xbf16>
    %cst_47 = arith.constant dense<0.000000e+00> : vector<288x128xf32>
    %75 = tpu.matmul %72, %74, %cst_47 {dimension_numbers = #tpu.dot_dimension_numbers<[1], [0], [0], [1], [0, 0, 1, 1], [], []>} : vector<288x4xbf16>, vector<4x128xbf16>, vector<288x128xf32> -> vector<288x128xf32>
    %76 = arith.addf %71, %75 : vector<288x128xf32>
    %77 = vector.extract_strided_slice %69 {offsets = [1, 0], sizes = [288, 4], strides = [1, 1]} : vector<342x4xbf16> to vector<288x4xbf16>
    %c1_48 = arith.constant 1 : index
    %c0_49 = arith.constant 0 : index
    %c0_50 = arith.constant 0 : index
    %78 = vector.load %arg2[%c1_48, %c0_49, %c0_50] : memref<9x4x128xbf16, #tpu.memory_space<vmem>>, vector<1x4x128xbf16>
    %79 = vector.shape_cast %78 : vector<1x4x128xbf16> to vector<4x128xbf16>
    %cst_51 = arith.constant dense<0.000000e+00> : vector<288x128xf32>
    %80 = tpu.matmul %77, %79, %cst_51 {dimension_numbers = #tpu.dot_dimension_numbers<[1], [0], [0], [1], [0, 0, 1, 1], [], []>} : vector<288x4xbf16>, vector<4x128xbf16>, vector<288x128xf32> -> vector<288x128xf32>
    %81 = arith.addf %76, %80 : vector<288x128xf32>
    %82 = vector.extract_strided_slice %69 {offsets = [2, 0], sizes = [288, 4], strides = [1, 1]} : vector<342x4xbf16> to vector<288x4xbf16>
    %c2_52 = arith.constant 2 : index
    %c0_53 = arith.constant 0 : index
    %c0_54 = arith.constant 0 : index
    %83 = vector.load %arg2[%c2_52, %c0_53, %c0_54] : memref<9x4x128xbf16, #tpu.memory_space<vmem>>, vector<1x4x128xbf16>
    %84 = vector.shape_cast %83 : vector<1x4x128xbf16> to vector<4x128xbf16>
    %cst_55 = arith.constant dense<0.000000e+00> : vector<288x128xf32>
    %85 = tpu.matmul %82, %84, %cst_55 {dimension_numbers = #tpu.dot_dimension_numbers<[1], [0], [0], [1], [0, 0, 1, 1], [], []>} : vector<288x4xbf16>, vector<4x128xbf16>, vector<288x128xf32> -> vector<288x128xf32>
    %86 = arith.addf %81, %85 : vector<288x128xf32>
    %87 = vector.extract_strided_slice %69 {offsets = [18, 0], sizes = [288, 4], strides = [1, 1]} : vector<342x4xbf16> to vector<288x4xbf16>
    %c3_56 = arith.constant 3 : index
    %c0_57 = arith.constant 0 : index
    %c0_58 = arith.constant 0 : index
    %88 = vector.load %arg2[%c3_56, %c0_57, %c0_58] : memref<9x4x128xbf16, #tpu.memory_space<vmem>>, vector<1x4x128xbf16>
    %89 = vector.shape_cast %88 : vector<1x4x128xbf16> to vector<4x128xbf16>
    %cst_59 = arith.constant dense<0.000000e+00> : vector<288x128xf32>
    %90 = tpu.matmul %87, %89, %cst_59 {dimension_numbers = #tpu.dot_dimension_numbers<[1], [0], [0], [1], [0, 0, 1, 1], [], []>} : vector<288x4xbf16>, vector<4x128xbf16>, vector<288x128xf32> -> vector<288x128xf32>
    %91 = arith.addf %86, %90 : vector<288x128xf32>
    %92 = vector.extract_strided_slice %69 {offsets = [19, 0], sizes = [288, 4], strides = [1, 1]} : vector<342x4xbf16> to vector<288x4xbf16>
    %c4_60 = arith.constant 4 : index
    %c0_61 = arith.constant 0 : index
    %c0_62 = arith.constant 0 : index
    %93 = vector.load %arg2[%c4_60, %c0_61, %c0_62] : memref<9x4x128xbf16, #tpu.memory_space<vmem>>, vector<1x4x128xbf16>
    %94 = vector.shape_cast %93 : vector<1x4x128xbf16> to vector<4x128xbf16>
    %cst_63 = arith.constant dense<0.000000e+00> : vector<288x128xf32>
    %95 = tpu.matmul %92, %94, %cst_63 {dimension_numbers = #tpu.dot_dimension_numbers<[1], [0], [0], [1], [0, 0, 1, 1], [], []>} : vector<288x4xbf16>, vector<4x128xbf16>, vector<288x128xf32> -> vector<288x128xf32>
    %96 = arith.addf %91, %95 : vector<288x128xf32>
    %97 = vector.extract_strided_slice %69 {offsets = [20, 0], sizes = [288, 4], strides = [1, 1]} : vector<342x4xbf16> to vector<288x4xbf16>
    %c5_64 = arith.constant 5 : index
    %c0_65 = arith.constant 0 : index
    %c0_66 = arith.constant 0 : index
    %98 = vector.load %arg2[%c5_64, %c0_65, %c0_66] : memref<9x4x128xbf16, #tpu.memory_space<vmem>>, vector<1x4x128xbf16>
    %99 = vector.shape_cast %98 : vector<1x4x128xbf16> to vector<4x128xbf16>
    %cst_67 = arith.constant dense<0.000000e+00> : vector<288x128xf32>
    %100 = tpu.matmul %97, %99, %cst_67 {dimension_numbers = #tpu.dot_dimension_numbers<[1], [0], [0], [1], [0, 0, 1, 1], [], []>} : vector<288x4xbf16>, vector<4x128xbf16>, vector<288x128xf32> -> vector<288x128xf32>
    %101 = arith.addf %96, %100 : vector<288x128xf32>
    %102 = vector.extract_strided_slice %69 {offsets = [36, 0], sizes = [288, 4], strides = [1, 1]} : vector<342x4xbf16> to vector<288x4xbf16>
    %c6_68 = arith.constant 6 : index
    %c0_69 = arith.constant 0 : index
    %c0_70 = arith.constant 0 : index
    %103 = vector.load %arg2[%c6_68, %c0_69, %c0_70] : memref<9x4x128xbf16, #tpu.memory_space<vmem>>, vector<1x4x128xbf16>
    %104 = vector.shape_cast %103 : vector<1x4x128xbf16> to vector<4x128xbf16>
    %cst_71 = arith.constant dense<0.000000e+00> : vector<288x128xf32>
    %105 = tpu.matmul %102, %104, %cst_71 {dimension_numbers = #tpu.dot_dimension_numbers<[1], [0], [0], [1], [0, 0, 1, 1], [], []>} : vector<288x4xbf16>, vector<4x128xbf16>, vector<288x128xf32> -> vector<288x128xf32>
    %106 = arith.addf %101, %105 : vector<288x128xf32>
    %107 = vector.extract_strided_slice %69 {offsets = [37, 0], sizes = [288, 4], strides = [1, 1]} : vector<342x4xbf16> to vector<288x4xbf16>
    %c7_72 = arith.constant 7 : index
    %c0_73 = arith.constant 0 : index
    %c0_74 = arith.constant 0 : index
    %108 = vector.load %arg2[%c7_72, %c0_73, %c0_74] : memref<9x4x128xbf16, #tpu.memory_space<vmem>>, vector<1x4x128xbf16>
    %109 = vector.shape_cast %108 : vector<1x4x128xbf16> to vector<4x128xbf16>
    %cst_75 = arith.constant dense<0.000000e+00> : vector<288x128xf32>
    %110 = tpu.matmul %107, %109, %cst_75 {dimension_numbers = #tpu.dot_dimension_numbers<[1], [0], [0], [1], [0, 0, 1, 1], [], []>} : vector<288x4xbf16>, vector<4x128xbf16>, vector<288x128xf32> -> vector<288x128xf32>
    %111 = arith.addf %106, %110 : vector<288x128xf32>
    %112 = vector.extract_strided_slice %69 {offsets = [38, 0], sizes = [288, 4], strides = [1, 1]} : vector<342x4xbf16> to vector<288x4xbf16>
    %c8_76 = arith.constant 8 : index
    %c0_77 = arith.constant 0 : index
    %c0_78 = arith.constant 0 : index
    %113 = vector.load %arg2[%c8_76, %c0_77, %c0_78] : memref<9x4x128xbf16, #tpu.memory_space<vmem>>, vector<1x4x128xbf16>
    %114 = vector.shape_cast %113 : vector<1x4x128xbf16> to vector<4x128xbf16>
    %cst_79 = arith.constant dense<0.000000e+00> : vector<288x128xf32>
    %115 = tpu.matmul %112, %114, %cst_79 {dimension_numbers = #tpu.dot_dimension_numbers<[1], [0], [0], [1], [0, 0, 1, 1], [], []>} : vector<288x4xbf16>, vector<4x128xbf16>, vector<288x128xf32> -> vector<288x128xf32>
    %116 = arith.addf %111, %115 : vector<288x128xf32>
    %c1_80 = arith.constant 1 : index
    %c0_81 = arith.constant 0 : index
    %c0_82 = arith.constant 0 : index
    %117 = vector.load %arg5[%c1_80, %c0_81, %c0_82] : memref<2x288x128xf32, #tpu.memory_space<vmem>>, vector<1x288x128xf32>
    %118 = vector.shape_cast %117 : vector<1x288x128xf32> to vector<288x128xf32>
    %119 = vector.shape_cast %116 : vector<288x128xf32> to vector<1x288x128xf32>
    tpu.vector_store %arg5[%c1_80, %c0_81, %c0_82], %119 {strides = array<i32>} : memref<2x288x128xf32, #tpu.memory_space<vmem>>, vector<1x288x128xf32>,
    %120 = vector.broadcast %4 : vector<288x1xf32> to vector<288x128xf32>
    %121 = arith.mulf %116, %120 : vector<288x128xf32>
    %cst_83 = arith.constant dense<0.000000e+00> : vector<128xf32>
    %122 = vector.multi_reduction <add>, %121, %cst_83 [0] : vector<288x128xf32> to vector<128xf32>
    %123 = vector.shape_cast %122 : vector<128xf32> to vector<1x128xf32>
    %124 = arith.addf %63, %123 : vector<1x128xf32>
    %125 = arith.mulf %116, %121 : vector<288x128xf32>
    %cst_84 = arith.constant dense<0.000000e+00> : vector<128xf32>
    %126 = vector.multi_reduction <add>, %125, %cst_84 [0] : vector<288x128xf32> to vector<128xf32>
    %127 = vector.shape_cast %126 : vector<128xf32> to vector<1x128xf32>
    %128 = arith.addf %67, %127 : vector<1x128xf32>
    %c0_85 = arith.constant 0 : index
    %c0_86 = arith.constant 0 : index
    %129 = vector.load %arg6[%c0_85, %c0_86] : memref<1x128xf32, #tpu.memory_space<vmem>>, vector<1x128xf32>
    %130 = arith.addf %129, %124 : vector<1x128xf32>
    %c0_87 = arith.constant 0 : index
    %c0_88 = arith.constant 0 : index
    %131 = vector.load %arg6[%c0_87, %c0_88] : memref<1x128xf32, #tpu.memory_space<vmem>>, vector<1x128xf32>
    tpu.vector_store %arg6[%c0_87, %c0_88], %130 {strides = array<i32>} : memref<1x128xf32, #tpu.memory_space<vmem>>, vector<1x128xf32>,
    %c0_89 = arith.constant 0 : index
    %c0_90 = arith.constant 0 : index
    %132 = vector.load %arg7[%c0_89, %c0_90] : memref<1x128xf32, #tpu.memory_space<vmem>>, vector<1x128xf32>
    %133 = arith.addf %132, %128 : vector<1x128xf32>
    %c0_91 = arith.constant 0 : index
    %c0_92 = arith.constant 0 : index
    %134 = vector.load %arg7[%c0_91, %c0_92] : memref<1x128xf32, #tpu.memory_space<vmem>>, vector<1x128xf32>
    tpu.vector_store %arg7[%c0_91, %c0_92], %133 {strides = array<i32>} : memref<1x128xf32, #tpu.memory_space<vmem>>, vector<1x128xf32>,
    return
  }
  func.func @transform_0(%arg0: i32) -> (i32, i32, i32) {
    %c0_i32 = arith.constant 0 : i32
    %c0_i32_0 = arith.constant 0 : i32
    %c0_i32_1 = arith.constant 0 : i32
    return %arg0, %c0_i32, %c0_i32_0 : i32, i32, i32
  }
  func.func @transform_1(%arg0: i32) -> (i32, i32, i32) {
    %c0_i32 = arith.constant 0 : i32
    %c0_i32_0 = arith.constant 0 : i32
    %c0_i32_1 = arith.constant 0 : i32
    %c0_i32_2 = arith.constant 0 : i32
    return %c0_i32, %c0_i32_0, %c0_i32_1 : i32, i32, i32
  }
  func.func @transform_2(%arg0: i32) -> (i32, i32) {
    %c0_i32 = arith.constant 0 : i32
    %c0_i32_0 = arith.constant 0 : i32
    %c0_i32_1 = arith.constant 0 : i32
    return %c0_i32, %c0_i32_0 : i32, i32
  }
  func.func @transform_3(%arg0: i32) -> (i32, i32) {
    %c0_i32 = arith.constant 0 : i32
    %c0_i32_0 = arith.constant 0 : i32
    %c0_i32_1 = arith.constant 0 : i32
    return %c0_i32, %c0_i32_0 : i32, i32
  }
  func.func @transform_4(%arg0: i32) -> (i32, i32, i32) {
    %c0_i32 = arith.constant 0 : i32
    %c0_i32_0 = arith.constant 0 : i32
    %c0_i32_1 = arith.constant 0 : i32
    return %arg0, %c0_i32, %c0_i32_0 : i32, i32, i32
  }
  func.func @transform_5(%arg0: i32) -> (i32, i32) {
    %c0_i32 = arith.constant 0 : i32
    %c0_i32_0 = arith.constant 0 : i32
    %c0_i32_1 = arith.constant 0 : i32
    return %c0_i32, %c0_i32_0 : i32, i32
  }
  func.func @transform_6(%arg0: i32) -> (i32, i32) {
    %c0_i32 = arith.constant 0 : i32
    %c0_i32_0 = arith.constant 0 : i32
    %c0_i32_1 = arith.constant 0 : i32
    return %c0_i32, %c0_i32_0 : i32, i32
  }
}

</mosaic_0001>

<llo_original>
// kernel: tpu_custom_call.1
$region0: #{tpu_custom_call.1}
  #allocation0 [shape = 'u32[]', space=smem, size = 0x4, offset = 0x4, fixed_abs, tag = 'smem constant byte address 0x4 - core index']
  #allocation1 [shape = 'u32[144,128]{1,0:T(1,128)}', space=vmem, size = 0x12000, scoped, tag = 'internal scratch']
  %s0 = inlined_call_operand.vmem [shape: bf16[2,342,4], index: 0, kind: input, shape index: {}]
  %s1 = inlined_call_operand.vmem [shape: bf16[9,4,128], index: 1, kind: input, shape index: {}]
  %s2 = inlined_call_operand.vmem [shape: f32[1,128], index: 2, kind: input, shape index: {}]
  %s3 = inlined_call_operand.vmem [shape: f32[288,1], index: 3, kind: input, shape index: {}]
  %s4 = inlined_call_operand.hbm [shape: f32[2,288,128], index: 4, kind: output, shape index: {0}]
  %s5 = inlined_call_operand.hbm [shape: f32[1,128], index: 5, kind: output, shape index: {1}]
  %s6 = inlined_call_operand.hbm [shape: f32[1,128], index: 6, kind: output, shape index: {2}]
  %7 = xla_tuple %s4, %s5, %s6
  %s8 = sld [smem:[#allocation0]]
  $region46: #{tpu_custom_call.1} parent=0
    _
  %s10 = ssub.s32 1, %s8
  %s11 = scalar_select 0, %s10, %s8
  $region1: #{tpu_custom_call.1} parent=0
    #allocation2 [shape = 'u8[294912]{0}', space=vmem, size = 0x48000, scoped, tag = 'output window, operand 0, single buffered']
    #allocation3 [shape = 's32[1]{0}', space=sflag, size = 0x4, scoped, tag = 'scoped memory for tpu_custom_call.1']
    #allocation4 [shape = 'u8[512]{0}', space=vmem, size = 0x400, scoped, tag = 'output window, operand 1, single buffered']
    #allocation5 [shape = 's32[1]{0}', space=sflag, size = 0x4, scoped, tag = 'scoped memory for tpu_custom_call.1']
    #allocation6 [shape = 'u8[512]{0}', space=vmem, size = 0x400, scoped, tag = 'output window, operand 2, single buffered']
    %12 = vsyncpa [#allocation3], 0
    %13 = vsyncpa [#allocation5], 0
    // Predicated region
    $region2: #{tpu_custom_call.1} parent=1 // pred_check
      _
    $region3: #{tpu_custom_call.1} parent=1 // pred_check_branch
      %15 = sbr.rel (0) target = $region5
    $region4: #{tpu_custom_call.1} parent=1 // pred_region
      _
    $region5: #{tpu_custom_call.1} parent=1 // pred_fallthru
      _
    // Predicated region
    $region6: #{tpu_custom_call.1} parent=1 // pred_check
      _
    $region7: #{tpu_custom_call.1} parent=1 // pred_check_branch
      %17 = sbr.rel (0) target = $region9
    $region8: #{tpu_custom_call.1} parent=1 // pred_region
      _
    $region9: #{tpu_custom_call.1} parent=1 // pred_fallthru
      _
    // Predicated region
    $region10: #{tpu_custom_call.1} parent=1 // pred_check
      _
    $region11: #{tpu_custom_call.1} parent=1 // pred_check_branch
      %19 = sbr.rel (0) target = $region13
    $region12: #{tpu_custom_call.1} parent=1 // pred_region
      _
    $region13: #{tpu_custom_call.1} parent=1 // pred_fallthru
      _
    // Predicated region
    $region14: #{tpu_custom_call.1} parent=1 // pred_check
      _
    $region15: #{tpu_custom_call.1} parent=1 // pred_check_branch
      %21 = sbr.rel (0) target = $region17
    $region16: #{tpu_custom_call.1} parent=1 // pred_region
      _
    $region17: #{tpu_custom_call.1} parent=1 // pred_fallthru
      _
    %p23 = scmp.eq.s32.totalorder 0, 0
    // Predicated region
    $region18: #{tpu_custom_call.1} parent=1 // pred_check
      %p24 = pneg %p23
    $region19: #{tpu_custom_call.1} parent=1 // pred_check_branch
      %26 = sbr.rel (%p24) target = $region21
    $region20: #{tpu_custom_call.1} parent=1 // pred_region
      %27 = vst [vmem:[#allocation4] sm:$0x1] 0.0
      %28 = vst [vmem:[#allocation6] sm:$0x1] 0.0
    $region21: #{tpu_custom_call.1} parent=1 // pred_fallthru
      _
    %v29 = vld [vmem:[%s2] sm:$0x1]
    %v30 = vld [vmem:[%s3] sm:$0xff]
    %v31 = vld [vmem:[%s3 + $0x8] sm:$0xff]
    %v32 = vld [vmem:[%s3 + $0x10] sm:$0xff]
    %v33 = vld [vmem:[%s3 + $0x18] sm:$0xff]
    %v34 = vld [vmem:[%s3 + $0x20] sm:$0xff]
    %v35 = vld [vmem:[%s3 + $0x28] sm:$0xff]
    %v36 = vld [vmem:[%s3 + $0x30] sm:$0xff]
    %v37 = vld [vmem:[%s3 + $0x38] sm:$0xff]
    %v38 = vld [vmem:[%s3 + $0x40] sm:$0xff]
    %v39 = vld [vmem:[%s3 + $0x48] sm:$0xff]
    %v40 = vld [vmem:[%s3 + $0x50] sm:$0xff]
    %v41 = vld [vmem:[%s3 + $0x58] sm:$0xff]
    %v42 = vld [vmem:[%s3 + $0x60] sm:$0xff]
    %v43 = vld [vmem:[%s3 + $0x68] sm:$0xff]
    %v44 = vld [vmem:[%s3 + $0x70] sm:$0xff]
    %v45 = vld [vmem:[%s3 + $0x78] sm:$0xff]
    %v46 = vld [vmem:[%s3 + $0x80] sm:$0xff]
    %v47 = vld [vmem:[%s3 + $0x88] sm:$0xff]
    %v48 = vld [vmem:[%s3 + $0x90] sm:$0xff]
    %v49 = vld [vmem:[%s3 + $0x98] sm:$0xff]
    %v50 = vld [vmem:[%s3 + $0xa0] sm:$0xff]
    %v51 = vld [vmem:[%s3 + $0xa8] sm:$0xff]
    %v52 = vld [vmem:[%s3 + $0xb0] sm:$0xff]
    %v53 = vld [vmem:[%s3 + $0xb8] sm:$0xff]
    %v54 = vld [vmem:[%s3 + $0xc0] sm:$0xff]
    %v55 = vld [vmem:[%s3 + $0xc8] sm:$0xff]
    %v56 = vld [vmem:[%s3 + $0xd0] sm:$0xff]
    %v57 = vld [vmem:[%s3 + $0xd8] sm:$0xff]
    %v58 = vld [vmem:[%s3 + $0xe0] sm:$0xff]
    %v59 = vld [vmem:[%s3 + $0xe8] sm:$0xff]
    %v60 = vld [vmem:[%s3 + $0xf0] sm:$0xff]
    %v61 = vld [vmem:[%s3 + $0xf8] sm:$0xff]
    %v62 = vld [vmem:[%s3 + $0x100] sm:$0xff]
    %v63 = vld [vmem:[%s3 + $0x108] sm:$0xff]
    %v64 = vld [vmem:[%s3 + $0x110] sm:$0xff]
    %v65 = vld [vmem:[%s3 + $0x118] sm:$0xff]
    %v66 = vld [vmem:[%s0] sm:$0xf]
    %v67 = vld [vmem:[%s0 + $0x4] sm:$0xf]
    %v68 = vld [vmem:[%s0 + $0x8] sm:$0xf]
    %v69 = vld [vmem:[%s0 + $0xc] sm:$0xf]
    %v70 = vld [vmem:[%s0 + $0x10] sm:$0xf]
    %v71 = vld [vmem:[%s0 + $0x14] sm:$0xf]
    %v72 = vld [vmem:[%s0 + $0x18] sm:$0xf]
    %v73 = vld [vmem:[%s0 + $0x1c] sm:$0xf]
    %v74 = vld [vmem:[%s0 + $0x20] sm:$0xf]
    %v75 = vld [vmem:[%s0 + $0x24] sm:$0xf]
    %v76 = vld [vmem:[%s0 + $0x28] sm:$0xf]
    %v77 = vld [vmem:[%s0 + $0x2c] sm:$0xf]
    %v78 = vld [vmem:[%s0 + $0x30] sm:$0xf]
    %v79 = vld [vmem:[%s0 + $0x34] sm:$0xf]
    %v80 = vld [vmem:[%s0 + $0x38] sm:$0xf]
    %v81 = vld [vmem:[%s0 + $0x3c] sm:$0xf]
    %v82 = vld [vmem:[%s0 + $0x40] sm:$0xf]
    %v83 = vld [vmem:[%s0 + $0x44] sm:$0xf]
    %v84 = vld [vmem:[%s0 + $0x48] sm:$0xf]
    %v85 = vld [vmem:[%s0 + $0x4c] sm:$0xf]
    %v86 = vld [vmem:[%s0 + $0x50] sm:$0xf]
    %v87 = vld [vmem:[%s0 + $0x54] sm:$0xf]
    %v88 = vld [vmem:[%s0 + $0x58] sm:$0xf]
    %v89 = vld [vmem:[%s0 + $0x5c] sm:$0xf]
    %v90 = vld [vmem:[%s0 + $0x60] sm:$0xf]
    %v91 = vld [vmem:[%s0 + $0x64] sm:$0xf]
    %v92 = vld [vmem:[%s0 + $0x68] sm:$0xf]
    %v93 = vld [vmem:[%s0 + $0x6c] sm:$0xf]
    %v94 = vld [vmem:[%s0 + $0x70] sm:$0xf]
    %v95 = vld [vmem:[%s0 + $0x74] sm:$0xf]
    %v96 = vld [vmem:[%s0 + $0x78] sm:$0xf]
    %v97 = vld [vmem:[%s0 + $0x7c] sm:$0xf]
    %v98 = vld [vmem:[%s0 + $0x80] sm:$0xf]
    %v99 = vld [vmem:[%s0 + $0x84] sm:$0xf]
    %v100 = vld [vmem:[%s0 + $0x88] sm:$0xf]
    %v101 = vld [vmem:[%s0 + $0x8c] sm:$0xf]
    %v102 = vld [vmem:[%s0 + $0x90] sm:$0xf]
    %v103 = vld [vmem:[%s0 + $0x94] sm:$0xf]
    %v104 = vld [vmem:[%s0 + $0x98] sm:$0xf]
    %v105 = vld [vmem:[%s0 + $0x9c] sm:$0xf]
    %v106 = vld [vmem:[%s0 + $0xa0] sm:$0xf]
    %v108 = vlaneseq
    %v109 = vshrl.u32 %v108, 7
    %v110 = vsub.s32 0, %v109
    %v111 = vrot.slane %v29, %v110
    %v113 = vld [vmem:[%s1] sm:$0x3]
    %v150 = vunpack.c.l.b16 %v66
    %v151 = vunpack.c.l.b16 %v67
    %v152 = vunpack.c.l.b16 %v68
    %v153 = vunpack.c.l.b16 %v69
    %v154 = vunpack.c.l.b16 %v70
    %v155 = vunpack.c.l.b16 %v71
    %v156 = vunpack.c.l.b16 %v72
    %v157 = vunpack.c.l.b16 %v73
    %v158 = vunpack.c.l.b16 %v74
    %v159 = vunpack.c.l.b16 %v75
    %v160 = vunpack.c.l.b16 %v76
    %v161 = vunpack.c.l.b16 %v77
    %v162 = vunpack.c.l.b16 %v78
    %v163 = vunpack.c.l.b16 %v79
    %v164 = vunpack.c.l.b16 %v80
    %v165 = vunpack.c.l.b16 %v81
    %v166 = vunpack.c.l.b16 %v82
    %v167 = vunpack.c.l.b16 %v83
    %v168 = vunpack.c.l.b16 %v84
    %v169 = vunpack.c.l.b16 %v85
    %v170 = vunpack.c.l.b16 %v86
    %v171 = vunpack.c.l.b16 %v87
    %v172 = vunpack.c.l.b16 %v88
    %v173 = vunpack.c.l.b16 %v89
    %v174 = vunpack.c.l.b16 %v90
    %v175 = vunpack.c.l.b16 %v91
    %v176 = vunpack.c.l.b16 %v92
    %v177 = vunpack.c.l.b16 %v93
    %v178 = vunpack.c.l.b16 %v94
    %v179 = vunpack.c.l.b16 %v95
    %v180 = vunpack.c.l.b16 %v96
    %v181 = vunpack.c.l.b16 %v97
    %v182 = vunpack.c.l.b16 %v98
    %v183 = vunpack.c.l.b16 %v99
    %v184 = vunpack.c.l.b16 %v100
    %v185 = vunpack.c.l.b16 %v101
    %v186 = vpack.c.b16 %v151, %v150
    %v187 = vpack.c.b16 %v153, %v152
    %v188 = vpack.c.b16 %v155, %v154
    %v189 = vpack.c.b16 %v157, %v156
    %v190 = vpack.c.b16 %v159, %v158
    %v191 = vpack.c.b16 %v161, %v160
    %v192 = vpack.c.b16 %v163, %v162
    %v193 = vpack.c.b16 %v165, %v164
    %v194 = vpack.c.b16 %v167, %v166
    %v195 = vpack.c.b16 %v169, %v168
    %v196 = vpack.c.b16 %v171, %v170
    %v197 = vpack.c.b16 %v173, %v172
    %v198 = vpack.c.b16 %v175, %v174
    %v199 = vpack.c.b16 %v177, %v176
    %v200 = vpack.c.b16 %v179, %v178
    %v201 = vpack.c.b16 %v181, %v180
    %v202 = vpack.c.b16 %v183, %v182
    %v203 = vpack.c.b16 %v185, %v184
    %vm204 = vcmask 31744
    %v206 = vsel %vm204, %v186, 0
    %v209 = vsel %vm204, %v187, 0
    %v212 = vsel %vm204, %v188, 0
    %v215 = vsel %vm204, %v189, 0
    %v218 = vsel %vm204, %v190, 0
    %v221 = vsel %vm204, %v191, 0
    %v224 = vsel %vm204, %v192, 0
    %v227 = vsel %vm204, %v193, 0
    %v230 = vsel %vm204, %v194, 0
    %v233 = vsel %vm204, %v195, 0
    %v236 = vsel %vm204, %v196, 0
    %v239 = vsel %vm204, %v197, 0
    %v242 = vsel %vm204, %v198, 0
    %v245 = vsel %vm204, %v199, 0
    %v248 = vsel %vm204, %v200, 0
    %v251 = vsel %vm204, %v201, 0
    %v254 = vsel %vm204, %v202, 0
    %v257 = vsel %vm204, %v203, 0
    %vm259 = vcmask 1041408
    %v261 = vsel %vm259, %v113, 0
    %263 = vmatprep.subr.bf16.mxu0 0
    %264 = vmatpush1.bf16.msra.mxu0 0
    %265 = vmatprep.subr.bf16.mxu0 0
    %266 = vmatpush1.bf16.msra.mxu0 0
    %267 = vmatprep.subr.bf16.mxu0 0
    %268 = vmatpush1.bf16.msra.mxu0 0
    %269 = vmatprep.subr.bf16.mxu0 0
    %270 = vmatpush1.bf16.msra.mxu0 0
    %271 = vmatprep.subr.bf16.mxu0 0
    %272 = vmatpush1.bf16.msra.mxu0 0
    %273 = vmatprep.subr.bf16.mxu0 0
    %274 = vmatpush1.bf16.msra.mxu0 0
    %275 = vmatprep.subr.bf16.mxu0 0
    %276 = vmatpush1.bf16.msra.mxu0 0
    %277 = vmatprep.subr.bf16.mxu0 0
    %278 = vmatpush1.bf16.msra.mxu0 %v261
    %279 = vmatprep.subr.bf16.mxu0 0
    %280 = vmatpush2.bf16.msra.mxu0 0
    %281 = vmatprep.subr.bf16.mxu0 0
    %282 = vmatpush2.bf16.msra.mxu0 0
    %283 = vmatprep.subr.bf16.mxu0 0
    %284 = vmatpush2.bf16.msra.mxu0 0
    %285 = vmatprep.subr.bf16.mxu0 0
    %286 = vmatpush2.bf16.msra.mxu0 0
    %287 = vmatprep.subr.bf16.mxu0 0
    %288 = vmatpush2.bf16.msra.mxu0 0
    %289 = vmatprep.subr.bf16.mxu0 0
    %290 = vmatpush2.bf16.msra.mxu0 0
    %291 = vmatprep.subr.bf16.mxu0 0
    %292 = vmatpush2.bf16.msra.mxu0 0
    %293 = vmatprep.subr.bf16.mxu0 0
    %294 = vmatpush2.bf16.msra.mxu0 0
    %295 = vmatprep.mubr.bf16.mxu0 0
    %296 = vmatmul.mubr.bf16.gmra.mxu0 %v206
    %v297 = vpop.f32.mrf.mxu0
    %v298 = vadd.f32 0.0, %v297
    %v299 = vpop.f32.mrf.mxu0
    %v300 = vpop.f32.mrf.mxu0
    %v301 = vadd.f32 0.0, %v300
    %v302 = vpop.f32.mrf.mxu0
    %303 = vmatprep.mubr.bf16.mxu0 0
    %304 = vmatmul.mubr.bf16.gmra.mxu0 %v209
    %v305 = vpop.f32.mrf.mxu0
    %v306 = vadd.f32 0.0, %v305
    %v307 = vpop.f32.mrf.mxu0
    %v308 = vpop.f32.mrf.mxu0
    %v309 = vadd.f32 0.0, %v308
    %v310 = vpop.f32.mrf.mxu0
    %311 = vmatprep.mubr.bf16.mxu0 0
    %312 = vmatmul.mubr.bf16.gmra.mxu0 %v212
    %v313 = vpop.f32.mrf.mxu0
    %v314 = vadd.f32 0.0, %v313
    %v315 = vpop.f32.mrf.mxu0
    %v316 = vpop.f32.mrf.mxu0
    %v317 = vadd.f32 0.0, %v316
    %v318 = vpop.f32.mrf.mxu0
    %319 = vmatprep.mubr.bf16.mxu0 0
    %320 = vmatmul.mubr.bf16.gmra.mxu0 %v215
    %v321 = vpop.f32.mrf.mxu0
    %v322 = vadd.f32 0.0, %v321
    %v323 = vpop.f32.mrf.mxu0
    %v324 = vpop.f32.mrf.mxu0
    %v325 = vadd.f32 0.0, %v324
    %v326 = vpop.f32.mrf.mxu0
    %327 = vmatprep.mubr.bf16.mxu0 0
    %328 = vmatmul.mubr.bf16.gmra.mxu0 %v218
    %v329 = vpop.f32.mrf.mxu0
    %v330 = vadd.f32 0.0, %v329
    %v331 = vpop.f32.mrf.mxu0
    %v332 = vpop.f32.mrf.mxu0
    %v333 = vadd.f32 0.0, %v332
    %v334 = vpop.f32.mrf.mxu0
    %335 = vmatprep.mubr.bf16.mxu0 0
    %336 = vmatmul.mubr.bf16.gmra.mxu0 %v221
    %v337 = vpop.f32.mrf.mxu0
    %v338 = vadd.f32 0.0, %v337
    %v339 = vpop.f32.mrf.mxu0
    %v340 = vpop.f32.mrf.mxu0
    %v341 = vadd.f32 0.0, %v340
    %v342 = vpop.f32.mrf.mxu0
    %343 = vmatprep.mubr.bf16.mxu0 0
    %344 = vmatmul.mubr.bf16.gmra.mxu0 %v224
    %v345 = vpop.f32.mrf.mxu0
    %v346 = vadd.f32 0.0, %v345
    %v347 = vpop.f32.mrf.mxu0
    %v348 = vpop.f32.mrf.mxu0
    %v349 = vadd.f32 0.0, %v348
    %v350 = vpop.f32.mrf.mxu0
    %351 = vmatprep.mubr.bf16.mxu0 0
    %352 = vmatmul.mubr.bf16.gmra.mxu0 %v227
    %v353 = vpop.f32.mrf.mxu0
    %v354 = vadd.f32 0.0, %v353
    %v355 = vpop.f32.mrf.mxu0
    %v356 = vpop.f32.mrf.mxu0
    %v357 = vadd.f32 0.0, %v356
    %v358 = vpop.f32.mrf.mxu0
    %359 = vmatprep.mubr.bf16.mxu0 0
    %360 = vmatmul.mubr.bf16.gmra.mxu0 %v230
    %v361 = vpop.f32.mrf.mxu0
    %v362 = vadd.f32 0.0, %v361
    %v363 = vpop.f32.mrf.mxu0
    %v364 = vpop.f32.mrf.mxu0
    %v365 = vadd.f32 0.0, %v364
    %v366 = vpop.f32.mrf.mxu0
    %367 = vmatprep.mubr.bf16.mxu0 0
    %368 = vmatmul.mubr.bf16.gmra.mxu0 %v233
    %v369 = vpop.f32.mrf.mxu0
    %v370 = vadd.f32 0.0, %v369
    %v371 = vpop.f32.mrf.mxu0
    %v372 = vpop.f32.mrf.mxu0
    %v373 = vadd.f32 0.0, %v372
    %v374 = vpop.f32.mrf.mxu0
    %375 = vmatprep.mubr.bf16.mxu0 0
    %376 = vmatmul.mubr.bf16.gmra.mxu0 %v236
    %v377 = vpop.f32.mrf.mxu0
    %v378 = vadd.f32 0.0, %v377
    %v379 = vpop.f32.mrf.mxu0
    %v380 = vpop.f32.mrf.mxu0
    %v381 = vadd.f32 0.0, %v380
    %v382 = vpop.f32.mrf.mxu0
    %383 = vmatprep.mubr.bf16.mxu0 0
    %384 = vmatmul.mubr.bf16.gmra.mxu0 %v239
    %v385 = vpop.f32.mrf.mxu0
    %v386 = vadd.f32 0.0, %v385
    %v387 = vpop.f32.mrf.mxu0
    %v388 = vpop.f32.mrf.mxu0
    %v389 = vadd.f32 0.0, %v388
    %v390 = vpop.f32.mrf.mxu0
    %391 = vmatprep.mubr.bf16.mxu0 0
    %392 = vmatmul.mubr.bf16.gmra.mxu0 %v242
    %v393 = vpop.f32.mrf.mxu0
    %v394 = vadd.f32 0.0, %v393
    %v395 = vpop.f32.mrf.mxu0
    %v396 = vpop.f32.mrf.mxu0
    %v397 = vadd.f32 0.0, %v396
    %v398 = vpop.f32.mrf.mxu0
    %399 = vmatprep.mubr.bf16.mxu0 0
    %400 = vmatmul.mubr.bf16.gmra.mxu0 %v245
    %v401 = vpop.f32.mrf.mxu0
    %v402 = vadd.f32 0.0, %v401
    %v403 = vpop.f32.mrf.mxu0
    %v404 = vpop.f32.mrf.mxu0
    %v405 = vadd.f32 0.0, %v404
    %v406 = vpop.f32.mrf.mxu0
    %407 = vmatprep.mubr.bf16.mxu0 0
    %408 = vmatmul.mubr.bf16.gmra.mxu0 %v248
    %v409 = vpop.f32.mrf.mxu0
    %v410 = vadd.f32 0.0, %v409
    %v411 = vpop.f32.mrf.mxu0
    %v412 = vpop.f32.mrf.mxu0
    %v413 = vadd.f32 0.0, %v412
    %v414 = vpop.f32.mrf.mxu0
    %415 = vmatprep.mubr.bf16.mxu0 0
    %416 = vmatmul.mubr.bf16.gmra.mxu0 %v251
    %v417 = vpop.f32.mrf.mxu0
    %v418 = vadd.f32 0.0, %v417
    %v419 = vpop.f32.mrf.mxu0
    %v420 = vpop.f32.mrf.mxu0
    %v421 = vadd.f32 0.0, %v420
    %v422 = vpop.f32.mrf.mxu0
    %423 = vmatprep.mubr.bf16.mxu0 0
    %424 = vmatmul.mubr.bf16.gmra.mxu0 %v254
    %v425 = vpop.f32.mrf.mxu0
    %v426 = vadd.f32 0.0, %v425
    %v427 = vpop.f32.mrf.mxu0
    %v428 = vpop.f32.mrf.mxu0
    %v429 = vadd.f32 0.0, %v428
    %v430 = vpop.f32.mrf.mxu0
    %431 = vmatprep.mubr.bf16.mxu0 0
    %432 = vmatmul.mubr.bf16.gmra.mxu0 %v257
    %v433 = vpop.f32.mrf.mxu0
    %v434 = vadd.f32 0.0, %v433
    %v435 = vpop.f32.mrf.mxu0
    %v436 = vpop.f32.mrf.mxu0
    %v437 = vadd.f32 0.0, %v436
    %v438 = vpop.f32.mrf.mxu0
    %439 = vdwg.mxu0
    %v440 = vadd.f32 %v111, %v298
    %v441 = vadd.f32 %v111, %v301
    %v442 = vadd.f32 %v111, %v306
    %v443 = vadd.f32 %v111, %v309
    %v444 = vadd.f32 %v111, %v314
    %v445 = vadd.f32 %v111, %v317
    %v446 = vadd.f32 %v111, %v322
    %v447 = vadd.f32 %v111, %v325
    %v448 = vadd.f32 %v111, %v330
    %v449 = vadd.f32 %v111, %v333
    %v450 = vadd.f32 %v111, %v338
    %v451 = vadd.f32 %v111, %v341
    %v452 = vadd.f32 %v111, %v346
    %v453 = vadd.f32 %v111, %v349
    %v454 = vadd.f32 %v111, %v354
    %v455 = vadd.f32 %v111, %v357
    %v456 = vadd.f32 %v111, %v362
    %v457 = vadd.f32 %v111, %v365
    %v458 = vadd.f32 %v111, %v370
    %v459 = vadd.f32 %v111, %v373
    %v460 = vadd.f32 %v111, %v378
    %v461 = vadd.f32 %v111, %v381
    %v462 = vadd.f32 %v111, %v386
    %v463 = vadd.f32 %v111, %v389
    %v464 = vadd.f32 %v111, %v394
    %v465 = vadd.f32 %v111, %v397
    %v466 = vadd.f32 %v111, %v402
    %v467 = vadd.f32 %v111, %v405
    %v468 = vadd.f32 %v111, %v410
    %v469 = vadd.f32 %v111, %v413
    %v470 = vadd.f32 %v111, %v418
    %v471 = vadd.f32 %v111, %v421
    %v472 = vadd.f32 %v111, %v426
    %v473 = vadd.f32 %v111, %v429
    %v474 = vadd.f32 %v111, %v434
    %v475 = vadd.f32 %v111, %v437
    %s476 = scalar_lea.vmem %s1, 2
    %v477 = vld [vmem:[%s476] sm:$0x3]
    %v479 = vunpack.c.l.b16 %v102
    %v480 = vpack.c.b16 %v479, %v479
    %vm481 = vsmask.f32 7424
    %v482 = vshrl.u32 %v186, 16
    %v484 = vshll.u32 %v186, 16
    %v486 = vrot.slane %v484, 1
    %v487 = vor.u32 %v482, %v486
    %v488 = vshll.u32 %v187, 16
    %v490 = vrot.slane %v488, 1
    %v491 = vsel %vm481, %v487, %v490
    %v492 = vshrl.u32 %v187, 16
    %v494 = vor.u32 %v492, %v490
    %v495 = vshll.u32 %v188, 16
    %v497 = vrot.slane %v495, 1
    %v498 = vsel %vm481, %v494, %v497
    %v499 = vshrl.u32 %v188, 16
    %v501 = vor.u32 %v499, %v497
    %v502 = vshll.u32 %v189, 16
    %v504 = vrot.slane %v502, 1
    %v505 = vsel %vm481, %v501, %v504
    %v506 = vshrl.u32 %v189, 16
    %v508 = vor.u32 %v506, %v504
    %v509 = vshll.u32 %v190, 16
    %v511 = vrot.slane %v509, 1
    %v512 = vsel %vm481, %v508, %v511
    %v513 = vshrl.u32 %v190, 16
    %v515 = vor.u32 %v513, %v511
    %v516 = vshll.u32 %v191, 16
    %v518 = vrot.slane %v516, 1
    %v519 = vsel %vm481, %v515, %v518
    %v520 = vshrl.u32 %v191, 16
    %v522 = vor.u32 %v520, %v518
    %v523 = vshll.u32 %v192, 16
    %v525 = vrot.slane %v523, 1
    %v526 = vsel %vm481, %v522, %v525
    %v527 = vshrl.u32 %v192, 16
    %v529 = vor.u32 %v527, %v525
    %v530 = vshll.u32 %v193, 16
    %v532 = vrot.slane %v530, 1
    %v533 = vsel %vm481, %v529, %v532
    %v534 = vshrl.u32 %v193, 16
    %v536 = vor.u32 %v534, %v532
    %v537 = vshll.u32 %v194, 16
    %v539 = vrot.slane %v537, 1
    %v540 = vsel %vm481, %v536, %v539
    %v541 = vshrl.u32 %v194, 16
    %v543 = vor.u32 %v541, %v539
    %v544 = vshll.u32 %v195, 16
    %v546 = vrot.slane %v544, 1
    %v547 = vsel %vm481, %v543, %v546
    %v548 = vshrl.u32 %v195, 16
    %v550 = vor.u32 %v548, %v546
    %v551 = vshll.u32 %v196, 16
    %v553 = vrot.slane %v551, 1
    %v554 = vsel %vm481, %v550, %v553
    %v555 = vshrl.u32 %v196, 16
    %v557 = vor.u32 %v555, %v553
    %v558 = vshll.u32 %v197, 16
    %v560 = vrot.slane %v558, 1
    %v561 = vsel %vm481, %v557, %v560
    %v562 = vshrl.u32 %v197, 16
    %v564 = vor.u32 %v562, %v560
    %v565 = vshll.u32 %v198, 16
    %v567 = vrot.slane %v565, 1
    %v568 = vsel %vm481, %v564, %v567
    %v569 = vshrl.u32 %v198, 16
    %v571 = vor.u32 %v569, %v567
    %v572 = vshll.u32 %v199, 16
    %v574 = vrot.slane %v572, 1
    %v575 = vsel %vm481, %v571, %v574
    %v576 = vshrl.u32 %v199, 16
    %v578 = vor.u32 %v576, %v574
    %v579 = vshll.u32 %v200, 16
    %v581 = vrot.slane %v579, 1
    %v582 = vsel %vm481, %v578, %v581
    %v583 = vshrl.u32 %v200, 16
    %v585 = vor.u32 %v583, %v581
    %v586 = vshll.u32 %v201, 16
    %v588 = vrot.slane %v586, 1
    %v589 = vsel %vm481, %v585, %v588
    %v590 = vshrl.u32 %v201, 16
    %v592 = vor.u32 %v590, %v588
    %v593 = vshll.u32 %v202, 16
    %v595 = vrot.slane %v593, 1
    %v596 = vsel %vm481, %v592, %v595
    %v597 = vshrl.u32 %v202, 16
    %v599 = vor.u32 %v597, %v595
    %v600 = vshll.u32 %v203, 16
    %v602 = vrot.slane %v600, 1
    %v603 = vsel %vm481, %v599, %v602
    %v604 = vshrl.u32 %v203, 16
    %v606 = vor.u32 %v604, %v602
    %v608 = vshll.u32 %v480, 16
    %v610 = vrot.slane %v608, 1
    %v611 = vsel %vm481, %v606, %v610
    %v613 = vsel %vm204, %v491, 0
    %v616 = vsel %vm204, %v498, 0
    %v619 = vsel %vm204, %v505, 0
    %v622 = vsel %vm204, %v512, 0
    %v625 = vsel %vm204, %v519, 0
    %v628 = vsel %vm204, %v526, 0
    %v631 = vsel %vm204, %v533, 0
    %v634 = vsel %vm204, %v540, 0
    %v637 = vsel %vm204, %v547, 0
    %v640 = vsel %vm204, %v554, 0
    %v643 = vsel %vm204, %v561, 0
    %v646 = vsel %vm204, %v568, 0
    %v649 = vsel %vm204, %v575, 0
    %v652 = vsel %vm204, %v582, 0
    %v655 = vsel %vm204, %v589, 0
    %v658 = vsel %vm204, %v596, 0
    %v661 = vsel %vm204, %v603, 0
    %v664 = vsel %vm204, %v611, 0
    %v667 = vsel %vm259, %v477, 0
    %669 = vmatprep.subr.bf16.mxu0 0
    %670 = vmatpush1.bf16.msra.mxu0 0
    %671 = vmatprep.subr.bf16.mxu0 0
    %672 = vmatpush1.bf16.msra.mxu0 0
    %673 = vmatprep.subr.bf16.mxu0 0
    %674 = vmatpush1.bf16.msra.mxu0 0
    %675 = vmatprep.subr.bf16.mxu0 0
    %676 = vmatpush1.bf16.msra.mxu0 0
    %677 = vmatprep.subr.bf16.mxu0 0
    %678 = vmatpush1.bf16.msra.mxu0 0
    %679 = vmatprep.subr.bf16.mxu0 0
    %680 = vmatpush1.bf16.msra.mxu0 0
    %681 = vmatprep.subr.bf16.mxu0 0
    %682 = vmatpush1.bf16.msra.mxu0 0
    %683 = vmatprep.subr.bf16.mxu0 0
    %684 = vmatpush1.bf16.msra.mxu0 %v667
    %685 = vmatprep.subr.bf16.mxu0 0
    %686 = vmatpush2.bf16.msra.mxu0 0
    %687 = vmatprep.subr.bf16.mxu0 0
    %688 = vmatpush2.bf16.msra.mxu0 0
    %689 = vmatprep.subr.bf16.mxu0 0
    %690 = vmatpush2.bf16.msra.mxu0 0
    %691 = vmatprep.subr.bf16.mxu0 0
    %692 = vmatpush2.bf16.msra.mxu0 0
    %693 = vmatprep.subr.bf16.mxu0 0
    %694 = vmatpush2.bf16.msra.mxu0 0
    %695 = vmatprep.subr.bf16.mxu0 0
    %696 = vmatpush2.bf16.msra.mxu0 0
    %697 = vmatprep.subr.bf16.mxu0 0
    %698 = vmatpush2.bf16.msra.mxu0 0
    %699 = vmatprep.subr.bf16.mxu0 0
    %700 = vmatpush2.bf16.msra.mxu0 0
    %701 = vmatprep.mubr.bf16.mxu0 0
    %702 = vmatmul.mubr.bf16.gmra.mxu0 %v613
    %v703 = vpop.f32.mrf.mxu0
    %v704 = vadd.f32 0.0, %v703
    %v705 = vpop.f32.mrf.mxu0
    %v706 = vpop.f32.mrf.mxu0
    %v707 = vadd.f32 0.0, %v706
    %v708 = vpop.f32.mrf.mxu0
    %709 = vmatprep.mubr.bf16.mxu0 0
    %710 = vmatmul.mubr.bf16.gmra.mxu0 %v616
    %v711 = vpop.f32.mrf.mxu0
    %v712 = vadd.f32 0.0, %v711
    %v713 = vpop.f32.mrf.mxu0
    %v714 = vpop.f32.mrf.mxu0
    %v715 = vadd.f32 0.0, %v714
    %v716 = vpop.f32.mrf.mxu0
    %717 = vmatprep.mubr.bf16.mxu0 0
    %718 = vmatmul.mubr.bf16.gmra.mxu0 %v619
    %v719 = vpop.f32.mrf.mxu0
    %v720 = vadd.f32 0.0, %v719
    %v721 = vpop.f32.mrf.mxu0
    %v722 = vpop.f32.mrf.mxu0
    %v723 = vadd.f32 0.0, %v722
    %v724 = vpop.f32.mrf.mxu0
    %725 = vmatprep.mubr.bf16.mxu0 0
    %726 = vmatmul.mubr.bf16.gmra.mxu0 %v622
    %v727 = vpop.f32.mrf.mxu0
    %v728 = vadd.f32 0.0, %v727
    %v729 = vpop.f32.mrf.mxu0
    %v730 = vpop.f32.mrf.mxu0
    %v731 = vadd.f32 0.0, %v730
    %v732 = vpop.f32.mrf.mxu0
    %733 = vmatprep.mubr.bf16.mxu0 0
    %734 = vmatmul.mubr.bf16.gmra.mxu0 %v625
    %v735 = vpop.f32.mrf.mxu0
    %v736 = vadd.f32 0.0, %v735
    %v737 = vpop.f32.mrf.mxu0
    %v738 = vpop.f32.mrf.mxu0
    %v739 = vadd.f32 0.0, %v738
    %v740 = vpop.f32.mrf.mxu0
    %741 = vmatprep.mubr.bf16.mxu0 0
    %742 = vmatmul.mubr.bf16.gmra.mxu0 %v628
    %v743 = vpop.f32.mrf.mxu0
    %v744 = vadd.f32 0.0, %v743
    %v745 = vpop.f32.mrf.mxu0
    %v746 = vpop.f32.mrf.mxu0
    %v747 = vadd.f32 0.0, %v746
    %v748 = vpop.f32.mrf.mxu0
    %749 = vmatprep.mubr.bf16.mxu0 0
    %750 = vmatmul.mubr.bf16.gmra.mxu0 %v631
    %v751 = vpop.f32.mrf.mxu0
    %v752 = vadd.f32 0.0, %v751
    %v753 = vpop.f32.mrf.mxu0
    %v754 = vpop.f32.mrf.mxu0
    %v755 = vadd.f32 0.0, %v754
    %v756 = vpop.f32.mrf.mxu0
    %757 = vmatprep.mubr.bf16.mxu0 0
    %758 = vmatmul.mubr.bf16.gmra.mxu0 %v634
    %v759 = vpop.f32.mrf.mxu0
    %v760 = vadd.f32 0.0, %v759
    %v761 = vpop.f32.mrf.mxu0
    %v762 = vpop.f32.mrf.mxu0
    %v763 = vadd.f32 0.0, %v762
    %v764 = vpop.f32.mrf.mxu0
    %765 = vmatprep.mubr.bf16.mxu0 0
    %766 = vmatmul.mubr.bf16.gmra.mxu0 %v637
    %v767 = vpop.f32.mrf.mxu0
    %v768 = vadd.f32 0.0, %v767
    %v769 = vpop.f32.mrf.mxu0
    %v770 = vpop.f32.mrf.mxu0
    %v771 = vadd.f32 0.0, %v770
    %v772 = vpop.f32.mrf.mxu0
    %773 = vmatprep.mubr.bf16.mxu0 0
    %774 = vmatmul.mubr.bf16.gmra.mxu0 %v640
    %v775 = vpop.f32.mrf.mxu0
    %v776 = vadd.f32 0.0, %v775
    %v777 = vpop.f32.mrf.mxu0
    %v778 = vpop.f32.mrf.mxu0
    %v779 = vadd.f32 0.0, %v778
    %v780 = vpop.f32.mrf.mxu0
    %781 = vmatprep.mubr.bf16.mxu0 0
    %782 = vmatmul.mubr.bf16.gmra.mxu0 %v643
    %v783 = vpop.f32.mrf.mxu0
    %v784 = vadd.f32 0.0, %v783
    %v785 = vpop.f32.mrf.mxu0
    %v786 = vpop.f32.mrf.mxu0
    %v787 = vadd.f32 0.0, %v786
    %v788 = vpop.f32.mrf.mxu0
    %789 = vmatprep.mubr.bf16.mxu0 0
    %790 = vmatmul.mubr.bf16.gmra.mxu0 %v646
    %v791 = vpop.f32.mrf.mxu0
    %v792 = vadd.f32 0.0, %v791
    %v793 = vpop.f32.mrf.mxu0
    %v794 = vpop.f32.mrf.mxu0
    %v795 = vadd.f32 0.0, %v794
    %v796 = vpop.f32.mrf.mxu0
    %797 = vmatprep.mubr.bf16.mxu0 0
    %798 = vmatmul.mubr.bf16.gmra.mxu0 %v649
    %v799 = vpop.f32.mrf.mxu0
    %v800 = vadd.f32 0.0, %v799
    %v801 = vpop.f32.mrf.mxu0
    %v802 = vpop.f32.mrf.mxu0
    %v803 = vadd.f32 0.0, %v802
    %v804 = vpop.f32.mrf.mxu0
    %805 = vmatprep.mubr.bf16.mxu0 0
    %806 = vmatmul.mubr.bf16.gmra.mxu0 %v652
    %v807 = vpop.f32.mrf.mxu0
    %v808 = vadd.f32 0.0, %v807
    %v809 = vpop.f32.mrf.mxu0
    %v810 = vpop.f32.mrf.mxu0
    %v811 = vadd.f32 0.0, %v810
    %v812 = vpop.f32.mrf.mxu0
    %813 = vmatprep.mubr.bf16.mxu0 0
    %814 = vmatmul.mubr.bf16.gmra.mxu0 %v655
    %v815 = vpop.f32.mrf.mxu0
    %v816 = vadd.f32 0.0, %v815
    %v817 = vpop.f32.mrf.mxu0
    %v818 = vpop.f32.mrf.mxu0
    %v819 = vadd.f32 0.0, %v818
    %v820 = vpop.f32.mrf.mxu0
    %821 = vmatprep.mubr.bf16.mxu0 0
    %822 = vmatmul.mubr.bf16.gmra.mxu0 %v658
    %v823 = vpop.f32.mrf.mxu0
    %v824 = vadd.f32 0.0, %v823
    %v825 = vpop.f32.mrf.mxu0
    %v826 = vpop.f32.mrf.mxu0
    %v827 = vadd.f32 0.0, %v826
    %v828 = vpop.f32.mrf.mxu0
    %829 = vmatprep.mubr.bf16.mxu0 0
    %830 = vmatmul.mubr.bf16.gmra.mxu0 %v661
    %v831 = vpop.f32.mrf.mxu0
    %v832 = vadd.f32 0.0, %v831
    %v833 = vpop.f32.mrf.mxu0
    %v834 = vpop.f32.mrf.mxu0
    %v835 = vadd.f32 0.0, %v834
    %v836 = vpop.f32.mrf.mxu0
    %837 = vmatprep.mubr.bf16.mxu0 0
    %838 = vmatmul.mubr.bf16.gmra.mxu0 %v664
    %v839 = vpop.f32.mrf.mxu0
    %v840 = vadd.f32 0.0, %v839
    %v841 = vpop.f32.mrf.mxu0
    %v842 = vpop.f32.mrf.mxu0
    %v843 = vadd.f32 0.0, %v842
    %v844 = vpop.f32.mrf.mxu0
    %845 = vdwg.mxu0
    %v846 = vadd.f32 %v440, %v704
    %v847 = vadd.f32 %v441, %v707
    %v848 = vadd.f32 %v442, %v712
    %v849 = vadd.f32 %v443, %v715
    %v850 = vadd.f32 %v444, %v720
    %v851 = vadd.f32 %v445, %v723
    %v852 = vadd.f32 %v446, %v728
    %v853 = vadd.f32 %v447, %v731
    %v854 = vadd.f32 %v448, %v736
    %v855 = vadd.f32 %v449, %v739
    %v856 = vadd.f32 %v450, %v744
    %v857 = vadd.f32 %v451, %v747
    %v858 = vadd.f32 %v452, %v752
    %v859 = vadd.f32 %v453, %v755
    %v860 = vadd.f32 %v454, %v760
    %v861 = vadd.f32 %v455, %v763
    %v862 = vadd.f32 %v456, %v768
    %v863 = vadd.f32 %v457, %v771
    %v864 = vadd.f32 %v458, %v776
    %v865 = vadd.f32 %v459, %v779
    %v866 = vadd.f32 %v460, %v784
    %v867 = vadd.f32 %v461, %v787
    %v868 = vadd.f32 %v462, %v792
    %v869 = vadd.f32 %v463, %v795
    %v870 = vadd.f32 %v464, %v800
    %v871 = vadd.f32 %v465, %v803
    %v872 = vadd.f32 %v466, %v808
    %v873 = vadd.f32 %v467, %v811
    %v874 = vadd.f32 %v468, %v816
    %v875 = vadd.f32 %v469, %v819
    %v876 = vadd.f32 %v470, %v824
    %v877 = vadd.f32 %v471, %v827
    %v878 = vadd.f32 %v472, %v832
    %v879 = vadd.f32 %v473, %v835
    %v880 = vadd.f32 %v474, %v840
    %v881 = vadd.f32 %v475, %v843
    %s882 = scalar_lea.vmem %s1, 4
    %v883 = vld [vmem:[%s882] sm:$0x3]
    %vm884 = vcmask 1046528
    %v885 = vrot.slane %v186, 1
    %v886 = vrot.slane %v187, 1
    %v887 = vsel %vm884, %v885, %v886
    %v888 = vrot.slane %v188, 1
    %v889 = vsel %vm884, %v886, %v888
    %v890 = vrot.slane %v189, 1
    %v891 = vsel %vm884, %v888, %v890
    %v892 = vrot.slane %v190, 1
    %v893 = vsel %vm884, %v890, %v892
    %v894 = vrot.slane %v191, 1
    %v895 = vsel %vm884, %v892, %v894
    %v896 = vrot.slane %v192, 1
    %v897 = vsel %vm884, %v894, %v896
    %v898 = vrot.slane %v193, 1
    %v899 = vsel %vm884, %v896, %v898
    %v900 = vrot.slane %v194, 1
    %v901 = vsel %vm884, %v898, %v900
    %v902 = vrot.slane %v195, 1
    %v903 = vsel %vm884, %v900, %v902
    %v904 = vrot.slane %v196, 1
    %v905 = vsel %vm884, %v902, %v904
    %v906 = vrot.slane %v197, 1
    %v907 = vsel %vm884, %v904, %v906
    %v908 = vrot.slane %v198, 1
    %v909 = vsel %vm884, %v906, %v908
    %v910 = vrot.slane %v199, 1
    %v911 = vsel %vm884, %v908, %v910
    %v912 = vrot.slane %v200, 1
    %v913 = vsel %vm884, %v910, %v912
    %v914 = vrot.slane %v201, 1
    %v915 = vsel %vm884, %v912, %v914
    %v916 = vrot.slane %v202, 1
    %v917 = vsel %vm884, %v914, %v916
    %v918 = vrot.slane %v203, 1
    %v919 = vsel %vm884, %v916, %v918
    %v920 = vrot.slane %v480, 1
    %v921 = vsel %vm884, %v918, %v920
    %v923 = vsel %vm204, %v887, 0
    %v926 = vsel %vm204, %v889, 0
    %v929 = vsel %vm204, %v891, 0
    %v932 = vsel %vm204, %v893, 0
    %v935 = vsel %vm204, %v895, 0
    %v938 = vsel %vm204, %v897, 0
    %v941 = vsel %vm204, %v899, 0
    %v944 = vsel %vm204, %v901, 0
    %v947 = vsel %vm204, %v903, 0
    %v950 = vsel %vm204, %v905, 0
    %v953 = vsel %vm204, %v907, 0
    %v956 = vsel %vm204, %v909, 0
    %v959 = vsel %vm204, %v911, 0
    %v962 = vsel %vm204, %v913, 0
    %v965 = vsel %vm204, %v915, 0
    %v968 = vsel %vm204, %v917, 0
    %v971 = vsel %vm204, %v919, 0
    %v974 = vsel %vm204, %v921, 0
    %v977 = vsel %vm259, %v883, 0
    %979 = vmatprep.subr.bf16.mxu0 0
    %980 = vmatpush1.bf16.msra.mxu0 0
    %981 = vmatprep.subr.bf16.mxu0 0
    %982 = vmatpush1.bf16.msra.mxu0 0
    %983 = vmatprep.subr.bf16.mxu0 0
    %984 = vmatpush1.bf16.msra.mxu0 0
    %985 = vmatprep.subr.bf16.mxu0 0
    %986 = vmatpush1.bf16.msra.mxu0 0
    %987 = vmatprep.subr.bf16.mxu0 0
    %988 = vmatpush1.bf16.msra.mxu0 0
    %989 = vmatprep.subr.bf16.mxu0 0
    %990 = vmatpush1.bf16.msra.mxu0 0
    %991 = vmatprep.subr.bf16.mxu0 0
    %992 = vmatpush1.bf16.msra.mxu0 0
    %993 = vmatprep.subr.bf16.mxu0 0
    %994 = vmatpush1.bf16.msra.mxu0 %v977
    %995 = vmatprep.subr.bf16.mxu0 0
    %996 = vmatpush2.bf16.msra.mxu0 0
    %997 = vmatprep.subr.bf16.mxu0 0
    %998 = vmatpush2.bf16.msra.mxu0 0
    %999 = vmatprep.subr.bf16.mxu0 0
    %1000 = vmatpush2.bf16.msra.mxu0 0
    %1001 = vmatprep.subr.bf16.mxu0 0
    %1002 = vmatpush2.bf16.msra.mxu0 0
    %1003 = vmatprep.subr.bf16.mxu0 0
    %1004 = vmatpush2.bf16.msra.mxu0 0
    %1005 = vmatprep.subr.bf16.mxu0 0
    %1006 = vmatpush2.bf16.msra.mxu0 0
    %1007 = vmatprep.subr.bf16.mxu0 0
    %1008 = vmatpush2.bf16.msra.mxu0 0
    %1009 = vmatprep.subr.bf16.mxu0 0
    %1010 = vmatpush2.bf16.msra.mxu0 0
    %1011 = vmatprep.mubr.bf16.mxu0 0
    %1012 = vmatmul.mubr.bf16.gmra.mxu0 %v923
    %v1013 = vpop.f32.mrf.mxu0
    %v1014 = vadd.f32 0.0, %v1013
    %v1015 = vpop.f32.mrf.mxu0
    %v1016 = vpop.f32.mrf.mxu0
    %v1017 = vadd.f32 0.0, %v1016
    %v1018 = vpop.f32.mrf.mxu0
    %1019 = vmatprep.mubr.bf16.mxu0 0
    %1020 = vmatmul.mubr.bf16.gmra.mxu0 %v926
    %v1021 = vpop.f32.mrf.mxu0
    %v1022 = vadd.f32 0.0, %v1021
    %v1023 = vpop.f32.mrf.mxu0
    %v1024 = vpop.f32.mrf.mxu0
    %v1025 = vadd.f32 0.0, %v1024
    %v1026 = vpop.f32.mrf.mxu0
    %1027 = vmatprep.mubr.bf16.mxu0 0
    %1028 = vmatmul.mubr.bf16.gmra.mxu0 %v929
    %v1029 = vpop.f32.mrf.mxu0
    %v1030 = vadd.f32 0.0, %v1029
    %v1031 = vpop.f32.mrf.mxu0
    %v1032 = vpop.f32.mrf.mxu0
    %v1033 = vadd.f32 0.0, %v1032
    %v1034 = vpop.f32.mrf.mxu0
    %1035 = vmatprep.mubr.bf16.mxu0 0
    %1036 = vmatmul.mubr.bf16.gmra.mxu0 %v932
    %v1037 = vpop.f32.mrf.mxu0
    %v1038 = vadd.f32 0.0, %v1037
    %v1039 = vpop.f32.mrf.mxu0
    %v1040 = vpop.f32.mrf.mxu0
    %v1041 = vadd.f32 0.0, %v1040
    %v1042 = vpop.f32.mrf.mxu0
    %1043 = vmatprep.mubr.bf16.mxu0 0
    %1044 = vmatmul.mubr.bf16.gmra.mxu0 %v935
    %v1045 = vpop.f32.mrf.mxu0
    %v1046 = vadd.f32 0.0, %v1045
    %v1047 = vpop.f32.mrf.mxu0
    %v1048 = vpop.f32.mrf.mxu0
    %v1049 = vadd.f32 0.0, %v1048
    %v1050 = vpop.f32.mrf.mxu0
    %1051 = vmatprep.mubr.bf16.mxu0 0
    %1052 = vmatmul.mubr.bf16.gmra.mxu0 %v938
    %v1053 = vpop.f32.mrf.mxu0
    %v1054 = vadd.f32 0.0, %v1053
    %v1055 = vpop.f32.mrf.mxu0
    %v1056 = vpop.f32.mrf.mxu0
    %v1057 = vadd.f32 0.0, %v1056
    %v1058 = vpop.f32.mrf.mxu0
    %1059 = vmatprep.mubr.bf16.mxu0 0
    %1060 = vmatmul.mubr.bf16.gmra.mxu0 %v941
    %v1061 = vpop.f32.mrf.mxu0
    %v1062 = vadd.f32 0.0, %v1061
    %v1063 = vpop.f32.mrf.mxu0
    %v1064 = vpop.f32.mrf.mxu0
    %v1065 = vadd.f32 0.0, %v1064
    %v1066 = vpop.f32.mrf.mxu0
    %1067 = vmatprep.mubr.bf16.mxu0 0
    %1068 = vmatmul.mubr.bf16.gmra.mxu0 %v944
    %v1069 = vpop.f32.mrf.mxu0
    %v1070 = vadd.f32 0.0, %v1069
    %v1071 = vpop.f32.mrf.mxu0
    %v1072 = vpop.f32.mrf.mxu0
    %v1073 = vadd.f32 0.0, %v1072
    %v1074 = vpop.f32.mrf.mxu0
    %1075 = vmatprep.mubr.bf16.mxu0 0
    %1076 = vmatmul.mubr.bf16.gmra.mxu0 %v947
    %v1077 = vpop.f32.mrf.mxu0
    %v1078 = vadd.f32 0.0, %v1077
    %v1079 = vpop.f32.mrf.mxu0
    %v1080 = vpop.f32.mrf.mxu0
    %v1081 = vadd.f32 0.0, %v1080
    %v1082 = vpop.f32.mrf.mxu0
    %1083 = vmatprep.mubr.bf16.mxu0 0
    %1084 = vmatmul.mubr.bf16.gmra.mxu0 %v950
    %v1085 = vpop.f32.mrf.mxu0
    %v1086 = vadd.f32 0.0, %v1085
    %v1087 = vpop.f32.mrf.mxu0
    %v1088 = vpop.f32.mrf.mxu0
    %v1089 = vadd.f32 0.0, %v1088
    %v1090 = vpop.f32.mrf.mxu0
    %1091 = vmatprep.mubr.bf16.mxu0 0
    %1092 = vmatmul.mubr.bf16.gmra.mxu0 %v953
    %v1093 = vpop.f32.mrf.mxu0
    %v1094 = vadd.f32 0.0, %v1093
    %v1095 = vpop.f32.mrf.mxu0
    %v1096 = vpop.f32.mrf.mxu0
    %v1097 = vadd.f32 0.0, %v1096
    %v1098 = vpop.f32.mrf.mxu0
    %1099 = vmatprep.mubr.bf16.mxu0 0
    %1100 = vmatmul.mubr.bf16.gmra.mxu0 %v956
    %v1101 = vpop.f32.mrf.mxu0
    %v1102 = vadd.f32 0.0, %v1101
    %v1103 = vpop.f32.mrf.mxu0
    %v1104 = vpop.f32.mrf.mxu0
    %v1105 = vadd.f32 0.0, %v1104
    %v1106 = vpop.f32.mrf.mxu0
    %1107 = vmatprep.mubr.bf16.mxu0 0
    %1108 = vmatmul.mubr.bf16.gmra.mxu0 %v959
    %v1109 = vpop.f32.mrf.mxu0
    %v1110 = vadd.f32 0.0, %v1109
    %v1111 = vpop.f32.mrf.mxu0
    %v1112 = vpop.f32.mrf.mxu0
    %v1113 = vadd.f32 0.0, %v1112
    %v1114 = vpop.f32.mrf.mxu0
    %1115 = vmatprep.mubr.bf16.mxu0 0
    %1116 = vmatmul.mubr.bf16.gmra.mxu0 %v962
    %v1117 = vpop.f32.mrf.mxu0
    %v1118 = vadd.f32 0.0, %v1117
    %v1119 = vpop.f32.mrf.mxu0
    %v1120 = vpop.f32.mrf.mxu0
    %v1121 = vadd.f32 0.0, %v1120
    %v1122 = vpop.f32.mrf.mxu0
    %1123 = vmatprep.mubr.bf16.mxu0 0
    %1124 = vmatmul.mubr.bf16.gmra.mxu0 %v965
    %v1125 = vpop.f32.mrf.mxu0
    %v1126 = vadd.f32 0.0, %v1125
    %v1127 = vpop.f32.mrf.mxu0
    %v1128 = vpop.f32.mrf.mxu0
    %v1129 = vadd.f32 0.0, %v1128
    %v1130 = vpop.f32.mrf.mxu0
    %1131 = vmatprep.mubr.bf16.mxu0 0
    %1132 = vmatmul.mubr.bf16.gmra.mxu0 %v968
    %v1133 = vpop.f32.mrf.mxu0
    %v1134 = vadd.f32 0.0, %v1133
    %v1135 = vpop.f32.mrf.mxu0
    %v1136 = vpop.f32.mrf.mxu0
    %v1137 = vadd.f32 0.0, %v1136
    %v1138 = vpop.f32.mrf.mxu0
    %1139 = vmatprep.mubr.bf16.mxu0 0
    %1140 = vmatmul.mubr.bf16.gmra.mxu0 %v971
    %v1141 = vpop.f32.mrf.mxu0
    %v1142 = vadd.f32 0.0, %v1141
    %v1143 = vpop.f32.mrf.mxu0
    %v1144 = vpop.f32.mrf.mxu0
    %v1145 = vadd.f32 0.0, %v1144
    %v1146 = vpop.f32.mrf.mxu0
    %1147 = vmatprep.mubr.bf16.mxu0 0
    %1148 = vmatmul.mubr.bf16.gmra.mxu0 %v974
    %v1149 = vpop.f32.mrf.mxu0
    %v1150 = vadd.f32 0.0, %v1149
    %v1151 = vpop.f32.mrf.mxu0
    %v1152 = vpop.f32.mrf.mxu0
    %v1153 = vadd.f32 0.0, %v1152
    %v1154 = vpop.f32.mrf.mxu0
    %1155 = vdwg.mxu0
    %v1156 = vadd.f32 %v846, %v1014
    %v1157 = vadd.f32 %v847, %v1017
    %v1158 = vadd.f32 %v848, %v1022
    %v1159 = vadd.f32 %v849, %v1025
    %v1160 = vadd.f32 %v850, %v1030
    %v1161 = vadd.f32 %v851, %v1033
    %v1162 = vadd.f32 %v852, %v1038
    %v1163 = vadd.f32 %v853, %v1041
    %v1164 = vadd.f32 %v854, %v1046
    %v1165 = vadd.f32 %v855, %v1049
    %v1166 = vadd.f32 %v856, %v1054
    %v1167 = vadd.f32 %v857, %v1057
    %v1168 = vadd.f32 %v858, %v1062
    %v1169 = vadd.f32 %v859, %v1065
    %v1170 = vadd.f32 %v860, %v1070
    %v1171 = vadd.f32 %v861, %v1073
    %v1172 = vadd.f32 %v862, %v1078
    %v1173 = vadd.f32 %v863, %v1081
    %v1174 = vadd.f32 %v864, %v1086
    %v1175 = vadd.f32 %v865, %v1089
    %v1176 = vadd.f32 %v866, %v1094
    %v1177 = vadd.f32 %v867, %v1097
    %v1178 = vadd.f32 %v868, %v1102
    %v1179 = vadd.f32 %v869, %v1105
    %v1180 = vadd.f32 %v870, %v1110
    %v1181 = vadd.f32 %v871, %v1113
    %v1182 = vadd.f32 %v872, %v1118
    %v1183 = vadd.f32 %v873, %v1121
    %v1184 = vadd.f32 %v874, %v1126
    %v1185 = vadd.f32 %v875, %v1129
    %v1186 = vadd.f32 %v876, %v1134
    %v1187 = vadd.f32 %v877, %v1137
    %v1188 = vadd.f32 %v878, %v1142
    %v1189 = vadd.f32 %v879, %v1145
    %v1190 = vadd.f32 %v880, %v1150
    %v1191 = vadd.f32 %v881, %v1153
    %s1192 = scalar_lea.vmem %s1, 6
    %v1193 = vld [vmem:[%s1192] sm:$0x3]
    %v1196 = vunpack.c.l.b16 %v103
    %v1197 = vunpack.c.l.b16 %v104
    %v1198 = vpack.c.b16 %v1196, %v479
    %v1199 = vpack.c.b16 %v1197, %v1197
    %v1200 = vrot.slane %v1198, 1
    %v1201 = vsel %vm884, %v918, %v1200
    %v1202 = vrot.slane %v1199, 1
    %v1203 = vsel %vm884, %v1200, %v1202
    %v1205 = vsel %vm204, %v1201, 0
    %v1208 = vsel %vm204, %v1203, 0
    %v1211 = vsel %vm259, %v1193, 0
    %1213 = vmatprep.subr.bf16.mxu0 0
    %1214 = vmatpush1.bf16.msra.mxu0 0
    %1215 = vmatprep.subr.bf16.mxu0 0
    %1216 = vmatpush1.bf16.msra.mxu0 0
    %1217 = vmatprep.subr.bf16.mxu0 0
    %1218 = vmatpush1.bf16.msra.mxu0 0
    %1219 = vmatprep.subr.bf16.mxu0 0
    %1220 = vmatpush1.bf16.msra.mxu0 0
    %1221 = vmatprep.subr.bf16.mxu0 0
    %1222 = vmatpush1.bf16.msra.mxu0 0
    %1223 = vmatprep.subr.bf16.mxu0 0
    %1224 = vmatpush1.bf16.msra.mxu0 0
    %1225 = vmatprep.subr.bf16.mxu0 0
    %1226 = vmatpush1.bf16.msra.mxu0 0
    %1227 = vmatprep.subr.bf16.mxu0 0
    %1228 = vmatpush1.bf16.msra.mxu0 %v1211
    %1229 = vmatprep.subr.bf16.mxu0 0
    %1230 = vmatpush2.bf16.msra.mxu0 0
    %1231 = vmatprep.subr.bf16.mxu0 0
    %1232 = vmatpush2.bf16.msra.mxu0 0
    %1233 = vmatprep.subr.bf16.mxu0 0
    %1234 = vmatpush2.bf16.msra.mxu0 0
    %1235 = vmatprep.subr.bf16.mxu0 0
    %1236 = vmatpush2.bf16.msra.mxu0 0
    %1237 = vmatprep.subr.bf16.mxu0 0
    %1238 = vmatpush2.bf16.msra.mxu0 0
    %1239 = vmatprep.subr.bf16.mxu0 0
    %1240 = vmatpush2.bf16.msra.mxu0 0
    %1241 = vmatprep.subr.bf16.mxu0 0
    %1242 = vmatpush2.bf16.msra.mxu0 0
    %1243 = vmatprep.subr.bf16.mxu0 0
    %1244 = vmatpush2.bf16.msra.mxu0 0
    %1245 = vmatprep.mubr.bf16.mxu0 0
    %1246 = vmatmul.mubr.bf16.gmra.mxu0 %v926
    %v1247 = vpop.f32.mrf.mxu0
    %v1248 = vadd.f32 0.0, %v1247
    %v1249 = vpop.f32.mrf.mxu0
    %v1250 = vpop.f32.mrf.mxu0
    %v1251 = vadd.f32 0.0, %v1250
    %v1252 = vpop.f32.mrf.mxu0
    %1253 = vmatprep.mubr.bf16.mxu0 0
    %1254 = vmatmul.mubr.bf16.gmra.mxu0 %v929
    %v1255 = vpop.f32.mrf.mxu0
    %v1256 = vadd.f32 0.0, %v1255
    %v1257 = vpop.f32.mrf.mxu0
    %v1258 = vpop.f32.mrf.mxu0
    %v1259 = vadd.f32 0.0, %v1258
    %v1260 = vpop.f32.mrf.mxu0
    %1261 = vmatprep.mubr.bf16.mxu0 0
    %1262 = vmatmul.mubr.bf16.gmra.mxu0 %v932
    %v1263 = vpop.f32.mrf.mxu0
    %v1264 = vadd.f32 0.0, %v1263
    %v1265 = vpop.f32.mrf.mxu0
    %v1266 = vpop.f32.mrf.mxu0
    %v1267 = vadd.f32 0.0, %v1266
    %v1268 = vpop.f32.mrf.mxu0
    %1269 = vmatprep.mubr.bf16.mxu0 0
    %1270 = vmatmul.mubr.bf16.gmra.mxu0 %v935
    %v1271 = vpop.f32.mrf.mxu0
    %v1272 = vadd.f32 0.0, %v1271
    %v1273 = vpop.f32.mrf.mxu0
    %v1274 = vpop.f32.mrf.mxu0
    %v1275 = vadd.f32 0.0, %v1274
    %v1276 = vpop.f32.mrf.mxu0
    %1277 = vmatprep.mubr.bf16.mxu0 0
    %1278 = vmatmul.mubr.bf16.gmra.mxu0 %v938
    %v1279 = vpop.f32.mrf.mxu0
    %v1280 = vadd.f32 0.0, %v1279
    %v1281 = vpop.f32.mrf.mxu0
    %v1282 = vpop.f32.mrf.mxu0
    %v1283 = vadd.f32 0.0, %v1282
    %v1284 = vpop.f32.mrf.mxu0
    %1285 = vmatprep.mubr.bf16.mxu0 0
    %1286 = vmatmul.mubr.bf16.gmra.mxu0 %v941
    %v1287 = vpop.f32.mrf.mxu0
    %v1288 = vadd.f32 0.0, %v1287
    %v1289 = vpop.f32.mrf.mxu0
    %v1290 = vpop.f32.mrf.mxu0
    %v1291 = vadd.f32 0.0, %v1290
    %v1292 = vpop.f32.mrf.mxu0
    %1293 = vmatprep.mubr.bf16.mxu0 0
    %1294 = vmatmul.mubr.bf16.gmra.mxu0 %v944
    %v1295 = vpop.f32.mrf.mxu0
    %v1296 = vadd.f32 0.0, %v1295
    %v1297 = vpop.f32.mrf.mxu0
    %v1298 = vpop.f32.mrf.mxu0
    %v1299 = vadd.f32 0.0, %v1298
    %v1300 = vpop.f32.mrf.mxu0
    %1301 = vmatprep.mubr.bf16.mxu0 0
    %1302 = vmatmul.mubr.bf16.gmra.mxu0 %v947
    %v1303 = vpop.f32.mrf.mxu0
    %v1304 = vadd.f32 0.0, %v1303
    %v1305 = vpop.f32.mrf.mxu0
    %v1306 = vpop.f32.mrf.mxu0
    %v1307 = vadd.f32 0.0, %v1306
    %v1308 = vpop.f32.mrf.mxu0
    %1309 = vmatprep.mubr.bf16.mxu0 0
    %1310 = vmatmul.mubr.bf16.gmra.mxu0 %v950
    %v1311 = vpop.f32.mrf.mxu0
    %v1312 = vadd.f32 0.0, %v1311
    %v1313 = vpop.f32.mrf.mxu0
    %v1314 = vpop.f32.mrf.mxu0
    %v1315 = vadd.f32 0.0, %v1314
    %v1316 = vpop.f32.mrf.mxu0
    %1317 = vmatprep.mubr.bf16.mxu0 0
    %1318 = vmatmul.mubr.bf16.gmra.mxu0 %v953
    %v1319 = vpop.f32.mrf.mxu0
    %v1320 = vadd.f32 0.0, %v1319
    %v1321 = vpop.f32.mrf.mxu0
    %v1322 = vpop.f32.mrf.mxu0
    %v1323 = vadd.f32 0.0, %v1322
    %v1324 = vpop.f32.mrf.mxu0
    %1325 = vmatprep.mubr.bf16.mxu0 0
    %1326 = vmatmul.mubr.bf16.gmra.mxu0 %v956
    %v1327 = vpop.f32.mrf.mxu0
    %v1328 = vadd.f32 0.0, %v1327
    %v1329 = vpop.f32.mrf.mxu0
    %v1330 = vpop.f32.mrf.mxu0
    %v1331 = vadd.f32 0.0, %v1330
    %v1332 = vpop.f32.mrf.mxu0
    %1333 = vmatprep.mubr.bf16.mxu0 0
    %1334 = vmatmul.mubr.bf16.gmra.mxu0 %v959
    %v1335 = vpop.f32.mrf.mxu0
    %v1336 = vadd.f32 0.0, %v1335
    %v1337 = vpop.f32.mrf.mxu0
    %v1338 = vpop.f32.mrf.mxu0
    %v1339 = vadd.f32 0.0, %v1338
    %v1340 = vpop.f32.mrf.mxu0
    %1341 = vmatprep.mubr.bf16.mxu0 0
    %1342 = vmatmul.mubr.bf16.gmra.mxu0 %v962
    %v1343 = vpop.f32.mrf.mxu0
    %v1344 = vadd.f32 0.0, %v1343
    %v1345 = vpop.f32.mrf.mxu0
    %v1346 = vpop.f32.mrf.mxu0
    %v1347 = vadd.f32 0.0, %v1346
    %v1348 = vpop.f32.mrf.mxu0
    %1349 = vmatprep.mubr.bf16.mxu0 0
    %1350 = vmatmul.mubr.bf16.gmra.mxu0 %v965
    %v1351 = vpop.f32.mrf.mxu0
    %v1352 = vadd.f32 0.0, %v1351
    %v1353 = vpop.f32.mrf.mxu0
    %v1354 = vpop.f32.mrf.mxu0
    %v1355 = vadd.f32 0.0, %v1354
    %v1356 = vpop.f32.mrf.mxu0
    %1357 = vmatprep.mubr.bf16.mxu0 0
    %1358 = vmatmul.mubr.bf16.gmra.mxu0 %v968
    %v1359 = vpop.f32.mrf.mxu0
    %v1360 = vadd.f32 0.0, %v1359
    %v1361 = vpop.f32.mrf.mxu0
    %v1362 = vpop.f32.mrf.mxu0
    %v1363 = vadd.f32 0.0, %v1362
    %v1364 = vpop.f32.mrf.mxu0
    %1365 = vmatprep.mubr.bf16.mxu0 0
    %1366 = vmatmul.mubr.bf16.gmra.mxu0 %v971
    %v1367 = vpop.f32.mrf.mxu0
    %v1368 = vadd.f32 0.0, %v1367
    %v1369 = vpop.f32.mrf.mxu0
    %v1370 = vpop.f32.mrf.mxu0
    %v1371 = vadd.f32 0.0, %v1370
    %v1372 = vpop.f32.mrf.mxu0
    %1373 = vmatprep.mubr.bf16.mxu0 0
    %1374 = vmatmul.mubr.bf16.gmra.mxu0 %v1205
    %v1375 = vpop.f32.mrf.mxu0
    %v1376 = vadd.f32 0.0, %v1375
    %v1377 = vpop.f32.mrf.mxu0
    %v1378 = vpop.f32.mrf.mxu0
    %v1379 = vadd.f32 0.0, %v1378
    %v1380 = vpop.f32.mrf.mxu0
    %1381 = vmatprep.mubr.bf16.mxu0 0
    %1382 = vmatmul.mubr.bf16.gmra.mxu0 %v1208
    %v1383 = vpop.f32.mrf.mxu0
    %v1384 = vadd.f32 0.0, %v1383
    %v1385 = vpop.f32.mrf.mxu0
    %v1386 = vpop.f32.mrf.mxu0
    %v1387 = vadd.f32 0.0, %v1386
    %v1388 = vpop.f32.mrf.mxu0
    %1389 = vdwg.mxu0
    %v1390 = vadd.f32 %v1156, %v1248
    %v1391 = vadd.f32 %v1157, %v1251
    %v1392 = vadd.f32 %v1158, %v1256
    %v1393 = vadd.f32 %v1159, %v1259
    %v1394 = vadd.f32 %v1160, %v1264
    %v1395 = vadd.f32 %v1161, %v1267
    %v1396 = vadd.f32 %v1162, %v1272
    %v1397 = vadd.f32 %v1163, %v1275
    %v1398 = vadd.f32 %v1164, %v1280
    %v1399 = vadd.f32 %v1165, %v1283
    %v1400 = vadd.f32 %v1166, %v1288
    %v1401 = vadd.f32 %v1167, %v1291
    %v1402 = vadd.f32 %v1168, %v1296
    %v1403 = vadd.f32 %v1169, %v1299
    %v1404 = vadd.f32 %v1170, %v1304
    %v1405 = vadd.f32 %v1171, %v1307
    %v1406 = vadd.f32 %v1172, %v1312
    %v1407 = vadd.f32 %v1173, %v1315
    %v1408 = vadd.f32 %v1174, %v1320
    %v1409 = vadd.f32 %v1175, %v1323
    %v1410 = vadd.f32 %v1176, %v1328
    %v1411 = vadd.f32 %v1177, %v1331
    %v1412 = vadd.f32 %v1178, %v1336
    %v1413 = vadd.f32 %v1179, %v1339
    %v1414 = vadd.f32 %v1180, %v1344
    %v1415 = vadd.f32 %v1181, %v1347
    %v1416 = vadd.f32 %v1182, %v1352
    %v1417 = vadd.f32 %v1183, %v1355
    %v1418 = vadd.f32 %v1184, %v1360
    %v1419 = vadd.f32 %v1185, %v1363
    %v1420 = vadd.f32 %v1186, %v1368
    %v1421 = vadd.f32 %v1187, %v1371
    %v1422 = vadd.f32 %v1188, %v1376
    %v1423 = vadd.f32 %v1189, %v1379
    %v1424 = vadd.f32 %v1190, %v1384
    %v1425 = vadd.f32 %v1191, %v1387
    %s1426 = scalar_lea.vmem %s1, 8
    %v1427 = vld [vmem:[%s1426] sm:$0x3]
    %vm1428 = vsmask.f32 6400
    %v1429 = vrot.slane %v492, 1
    %v1430 = vrot.slane %v488, 2
    %v1431 = vor.u32 %v1429, %v1430
    %v1432 = vrot.slane %v499, 1
    %v1433 = vrot.slane %v495, 2
    %v1434 = vor.u32 %v1432, %v1433
    %v1435 = vsel %vm1428, %v1431, %v1434
    %v1436 = vrot.slane %v506, 1
    %v1437 = vrot.slane %v502, 2
    %v1438 = vor.u32 %v1436, %v1437
    %v1439 = vsel %vm1428, %v1434, %v1438
    %v1440 = vrot.slane %v513, 1
    %v1441 = vrot.slane %v509, 2
    %v1442 = vor.u32 %v1440, %v1441
    %v1443 = vsel %vm1428, %v1438, %v1442
    %v1444 = vrot.slane %v520, 1
    %v1445 = vrot.slane %v516, 2
    %v1446 = vor.u32 %v1444, %v1445
    %v1447 = vsel %vm1428, %v1442, %v1446
    %v1448 = vrot.slane %v527, 1
    %v1449 = vrot.slane %v523, 2
    %v1450 = vor.u32 %v1448, %v1449
    %v1451 = vsel %vm1428, %v1446, %v1450
    %v1452 = vrot.slane %v534, 1
    %v1453 = vrot.slane %v530, 2
    %v1454 = vor.u32 %v1452, %v1453
    %v1455 = vsel %vm1428, %v1450, %v1454
    %v1456 = vrot.slane %v541, 1
    %v1457 = vrot.slane %v537, 2
    %v1458 = vor.u32 %v1456, %v1457
    %v1459 = vsel %vm1428, %v1454, %v1458
    %v1460 = vrot.slane %v548, 1
    %v1461 = vrot.slane %v544, 2
    %v1462 = vor.u32 %v1460, %v1461
    %v1463 = vsel %vm1428, %v1458, %v1462
    %v1464 = vrot.slane %v555, 1
    %v1465 = vrot.slane %v551, 2
    %v1466 = vor.u32 %v1464, %v1465
    %v1467 = vsel %vm1428, %v1462, %v1466
    %v1468 = vrot.slane %v562, 1
    %v1469 = vrot.slane %v558, 2
    %v1470 = vor.u32 %v1468, %v1469
    %v1471 = vsel %vm1428, %v1466, %v1470
    %v1472 = vrot.slane %v569, 1
    %v1473 = vrot.slane %v565, 2
    %v1474 = vor.u32 %v1472, %v1473
    %v1475 = vsel %vm1428, %v1470, %v1474
    %v1476 = vrot.slane %v576, 1
    %v1477 = vrot.slane %v572, 2
    %v1478 = vor.u32 %v1476, %v1477
    %v1479 = vsel %vm1428, %v1474, %v1478
    %v1480 = vrot.slane %v583, 1
    %v1481 = vrot.slane %v579, 2
    %v1482 = vor.u32 %v1480, %v1481
    %v1483 = vsel %vm1428, %v1478, %v1482
    %v1484 = vrot.slane %v590, 1
    %v1485 = vrot.slane %v586, 2
    %v1486 = vor.u32 %v1484, %v1485
    %v1487 = vsel %vm1428, %v1482, %v1486
    %v1488 = vrot.slane %v597, 1
    %v1489 = vrot.slane %v593, 2
    %v1490 = vor.u32 %v1488, %v1489
    %v1491 = vsel %vm1428, %v1486, %v1490
    %v1492 = vrot.slane %v604, 1
    %v1493 = vrot.slane %v600, 2
    %v1494 = vor.u32 %v1492, %v1493
    %v1495 = vsel %vm1428, %v1490, %v1494
    %v1497 = vshrl.u32 %v1198, 16
    %v1499 = vrot.slane %v1497, 1
    %v1500 = vshll.u32 %v1198, 16
    %v1502 = vrot.slane %v1500, 2
    %v1503 = vor.u32 %v1499, %v1502
    %v1504 = vsel %vm1428, %v1494, %v1503
    %v1506 = vshrl.u32 %v1199, 16
    %v1508 = vrot.slane %v1506, 1
    %v1509 = vshll.u32 %v1199, 16
    %v1511 = vrot.slane %v1509, 2
    %v1512 = vor.u32 %v1508, %v1511
    %v1513 = vsel %vm1428, %v1503, %v1512
    %v1515 = vsel %vm204, %v1435, 0
    %v1518 = vsel %vm204, %v1439, 0
    %v1521 = vsel %vm204, %v1443, 0
    %v1524 = vsel %vm204, %v1447, 0
    %v1527 = vsel %vm204, %v1451, 0
    %v1530 = vsel %vm204, %v1455, 0
    %v1533 = vsel %vm204, %v1459, 0
    %v1536 = vsel %vm204, %v1463, 0
    %v1539 = vsel %vm204, %v1467, 0
    %v1542 = vsel %vm204, %v1471, 0
    %v1545 = vsel %vm204, %v1475, 0
    %v1548 = vsel %vm204, %v1479, 0
    %v1551 = vsel %vm204, %v1483, 0
    %v1554 = vsel %vm204, %v1487, 0
    %v1557 = vsel %vm204, %v1491, 0
    %v1560 = vsel %vm204, %v1495, 0
    %v1563 = vsel %vm204, %v1504, 0
    %v1566 = vsel %vm204, %v1513, 0
    %v1569 = vsel %vm259, %v1427, 0
    %1571 = vmatprep.subr.bf16.mxu0 0
    %1572 = vmatpush1.bf16.msra.mxu0 0
    %1573 = vmatprep.subr.bf16.mxu0 0
    %1574 = vmatpush1.bf16.msra.mxu0 0
    %1575 = vmatprep.subr.bf16.mxu0 0
    %1576 = vmatpush1.bf16.msra.mxu0 0
    %1577 = vmatprep.subr.bf16.mxu0 0
    %1578 = vmatpush1.bf16.msra.mxu0 0
    %1579 = vmatprep.subr.bf16.mxu0 0
    %1580 = vmatpush1.bf16.msra.mxu0 0
    %1581 = vmatprep.subr.bf16.mxu0 0
    %1582 = vmatpush1.bf16.msra.mxu0 0
    %1583 = vmatprep.subr.bf16.mxu0 0
    %1584 = vmatpush1.bf16.msra.mxu0 0
    %1585 = vmatprep.subr.bf16.mxu0 0
    %1586 = vmatpush1.bf16.msra.mxu0 %v1569
    %1587 = vmatprep.subr.bf16.mxu0 0
    %1588 = vmatpush2.bf16.msra.mxu0 0
    %1589 = vmatprep.subr.bf16.mxu0 0
    %1590 = vmatpush2.bf16.msra.mxu0 0
    %1591 = vmatprep.subr.bf16.mxu0 0
    %1592 = vmatpush2.bf16.msra.mxu0 0
    %1593 = vmatprep.subr.bf16.mxu0 0
    %1594 = vmatpush2.bf16.msra.mxu0 0
    %1595 = vmatprep.subr.bf16.mxu0 0
    %1596 = vmatpush2.bf16.msra.mxu0 0
    %1597 = vmatprep.subr.bf16.mxu0 0
    %1598 = vmatpush2.bf16.msra.mxu0 0
    %1599 = vmatprep.subr.bf16.mxu0 0
    %1600 = vmatpush2.bf16.msra.mxu0 0
    %1601 = vmatprep.subr.bf16.mxu0 0
    %1602 = vmatpush2.bf16.msra.mxu0 0
    %1603 = vmatprep.mubr.bf16.mxu0 0
    %1604 = vmatmul.mubr.bf16.gmra.mxu0 %v1515
    %v1605 = vpop.f32.mrf.mxu0
    %v1606 = vadd.f32 0.0, %v1605
    %v1607 = vpop.f32.mrf.mxu0
    %v1608 = vpop.f32.mrf.mxu0
    %v1609 = vadd.f32 0.0, %v1608
    %v1610 = vpop.f32.mrf.mxu0
    %1611 = vmatprep.mubr.bf16.mxu0 0
    %1612 = vmatmul.mubr.bf16.gmra.mxu0 %v1518
    %v1613 = vpop.f32.mrf.mxu0
    %v1614 = vadd.f32 0.0, %v1613
    %v1615 = vpop.f32.mrf.mxu0
    %v1616 = vpop.f32.mrf.mxu0
    %v1617 = vadd.f32 0.0, %v1616
    %v1618 = vpop.f32.mrf.mxu0
    %1619 = vmatprep.mubr.bf16.mxu0 0
    %1620 = vmatmul.mubr.bf16.gmra.mxu0 %v1521
    %v1621 = vpop.f32.mrf.mxu0
    %v1622 = vadd.f32 0.0, %v1621
    %v1623 = vpop.f32.mrf.mxu0
    %v1624 = vpop.f32.mrf.mxu0
    %v1625 = vadd.f32 0.0, %v1624
    %v1626 = vpop.f32.mrf.mxu0
    %1627 = vmatprep.mubr.bf16.mxu0 0
    %1628 = vmatmul.mubr.bf16.gmra.mxu0 %v1524
    %v1629 = vpop.f32.mrf.mxu0
    %v1630 = vadd.f32 0.0, %v1629
    %v1631 = vpop.f32.mrf.mxu0
    %v1632 = vpop.f32.mrf.mxu0
    %v1633 = vadd.f32 0.0, %v1632
    %v1634 = vpop.f32.mrf.mxu0
    %1635 = vmatprep.mubr.bf16.mxu0 0
    %1636 = vmatmul.mubr.bf16.gmra.mxu0 %v1527
    %v1637 = vpop.f32.mrf.mxu0
    %v1638 = vadd.f32 0.0, %v1637
    %v1639 = vpop.f32.mrf.mxu0
    %v1640 = vpop.f32.mrf.mxu0
    %v1641 = vadd.f32 0.0, %v1640
    %v1642 = vpop.f32.mrf.mxu0
    %1643 = vmatprep.mubr.bf16.mxu0 0
    %1644 = vmatmul.mubr.bf16.gmra.mxu0 %v1530
    %v1645 = vpop.f32.mrf.mxu0
    %v1646 = vadd.f32 0.0, %v1645
    %v1647 = vpop.f32.mrf.mxu0
    %v1648 = vpop.f32.mrf.mxu0
    %v1649 = vadd.f32 0.0, %v1648
    %v1650 = vpop.f32.mrf.mxu0
    %1651 = vmatprep.mubr.bf16.mxu0 0
    %1652 = vmatmul.mubr.bf16.gmra.mxu0 %v1533
    %v1653 = vpop.f32.mrf.mxu0
    %v1654 = vadd.f32 0.0, %v1653
    %v1655 = vpop.f32.mrf.mxu0
    %v1656 = vpop.f32.mrf.mxu0
    %v1657 = vadd.f32 0.0, %v1656
    %v1658 = vpop.f32.mrf.mxu0
    %1659 = vmatprep.mubr.bf16.mxu0 0
    %1660 = vmatmul.mubr.bf16.gmra.mxu0 %v1536
    %v1661 = vpop.f32.mrf.mxu0
    %v1662 = vadd.f32 0.0, %v1661
    %v1663 = vpop.f32.mrf.mxu0
    %v1664 = vpop.f32.mrf.mxu0
    %v1665 = vadd.f32 0.0, %v1664
    %v1666 = vpop.f32.mrf.mxu0
    %1667 = vmatprep.mubr.bf16.mxu0 0
    %1668 = vmatmul.mubr.bf16.gmra.mxu0 %v1539
    %v1669 = vpop.f32.mrf.mxu0
    %v1670 = vadd.f32 0.0, %v1669
    %v1671 = vpop.f32.mrf.mxu0
    %v1672 = vpop.f32.mrf.mxu0
    %v1673 = vadd.f32 0.0, %v1672
    %v1674 = vpop.f32.mrf.mxu0
    %1675 = vmatprep.mubr.bf16.mxu0 0
    %1676 = vmatmul.mubr.bf16.gmra.mxu0 %v1542
    %v1677 = vpop.f32.mrf.mxu0
    %v1678 = vadd.f32 0.0, %v1677
    %v1679 = vpop.f32.mrf.mxu0
    %v1680 = vpop.f32.mrf.mxu0
    %v1681 = vadd.f32 0.0, %v1680
    %v1682 = vpop.f32.mrf.mxu0
    %1683 = vmatprep.mubr.bf16.mxu0 0
    %1684 = vmatmul.mubr.bf16.gmra.mxu0 %v1545
    %v1685 = vpop.f32.mrf.mxu0
    %v1686 = vadd.f32 0.0, %v1685
    %v1687 = vpop.f32.mrf.mxu0
    %v1688 = vpop.f32.mrf.mxu0
    %v1689 = vadd.f32 0.0, %v1688
    %v1690 = vpop.f32.mrf.mxu0
    %1691 = vmatprep.mubr.bf16.mxu0 0
    %1692 = vmatmul.mubr.bf16.gmra.mxu0 %v1548
    %v1693 = vpop.f32.mrf.mxu0
    %v1694 = vadd.f32 0.0, %v1693
    %v1695 = vpop.f32.mrf.mxu0
    %v1696 = vpop.f32.mrf.mxu0
    %v1697 = vadd.f32 0.0, %v1696
    %v1698 = vpop.f32.mrf.mxu0
    %1699 = vmatprep.mubr.bf16.mxu0 0
    %1700 = vmatmul.mubr.bf16.gmra.mxu0 %v1551
    %v1701 = vpop.f32.mrf.mxu0
    %v1702 = vadd.f32 0.0, %v1701
    %v1703 = vpop.f32.mrf.mxu0
    %v1704 = vpop.f32.mrf.mxu0
    %v1705 = vadd.f32 0.0, %v1704
    %v1706 = vpop.f32.mrf.mxu0
    %1707 = vmatprep.mubr.bf16.mxu0 0
    %1708 = vmatmul.mubr.bf16.gmra.mxu0 %v1554
    %v1709 = vpop.f32.mrf.mxu0
    %v1710 = vadd.f32 0.0, %v1709
    %v1711 = vpop.f32.mrf.mxu0
    %v1712 = vpop.f32.mrf.mxu0
    %v1713 = vadd.f32 0.0, %v1712
    %v1714 = vpop.f32.mrf.mxu0
    %1715 = vmatprep.mubr.bf16.mxu0 0
    %1716 = vmatmul.mubr.bf16.gmra.mxu0 %v1557
    %v1717 = vpop.f32.mrf.mxu0
    %v1718 = vadd.f32 0.0, %v1717
    %v1719 = vpop.f32.mrf.mxu0
    %v1720 = vpop.f32.mrf.mxu0
    %v1721 = vadd.f32 0.0, %v1720
    %v1722 = vpop.f32.mrf.mxu0
    %1723 = vmatprep.mubr.bf16.mxu0 0
    %1724 = vmatmul.mubr.bf16.gmra.mxu0 %v1560
    %v1725 = vpop.f32.mrf.mxu0
    %v1726 = vadd.f32 0.0, %v1725
    %v1727 = vpop.f32.mrf.mxu0
    %v1728 = vpop.f32.mrf.mxu0
    %v1729 = vadd.f32 0.0, %v1728
    %v1730 = vpop.f32.mrf.mxu0
    %1731 = vmatprep.mubr.bf16.mxu0 0
    %1732 = vmatmul.mubr.bf16.gmra.mxu0 %v1563
    %v1733 = vpop.f32.mrf.mxu0
    %v1734 = vadd.f32 0.0, %v1733
    %v1735 = vpop.f32.mrf.mxu0
    %v1736 = vpop.f32.mrf.mxu0
    %v1737 = vadd.f32 0.0, %v1736
    %v1738 = vpop.f32.mrf.mxu0
    %1739 = vmatprep.mubr.bf16.mxu0 0
    %1740 = vmatmul.mubr.bf16.gmra.mxu0 %v1566
    %v1741 = vpop.f32.mrf.mxu0
    %v1742 = vadd.f32 0.0, %v1741
    %v1743 = vpop.f32.mrf.mxu0
    %v1744 = vpop.f32.mrf.mxu0
    %v1745 = vadd.f32 0.0, %v1744
    %v1746 = vpop.f32.mrf.mxu0
    %1747 = vdwg.mxu0
    %v1748 = vadd.f32 %v1390, %v1606
    %v1749 = vadd.f32 %v1391, %v1609
    %v1750 = vadd.f32 %v1392, %v1614
    %v1751 = vadd.f32 %v1393, %v1617
    %v1752 = vadd.f32 %v1394, %v1622
    %v1753 = vadd.f32 %v1395, %v1625
    %v1754 = vadd.f32 %v1396, %v1630
    %v1755 = vadd.f32 %v1397, %v1633
    %v1756 = vadd.f32 %v1398, %v1638
    %v1757 = vadd.f32 %v1399, %v1641
    %v1758 = vadd.f32 %v1400, %v1646
    %v1759 = vadd.f32 %v1401, %v1649
    %v1760 = vadd.f32 %v1402, %v1654
    %v1761 = vadd.f32 %v1403, %v1657
    %v1762 = vadd.f32 %v1404, %v1662
    %v1763 = vadd.f32 %v1405, %v1665
    %v1764 = vadd.f32 %v1406, %v1670
    %v1765 = vadd.f32 %v1407, %v1673
    %v1766 = vadd.f32 %v1408, %v1678
    %v1767 = vadd.f32 %v1409, %v1681
    %v1768 = vadd.f32 %v1410, %v1686
    %v1769 = vadd.f32 %v1411, %v1689
    %v1770 = vadd.f32 %v1412, %v1694
    %v1771 = vadd.f32 %v1413, %v1697
    %v1772 = vadd.f32 %v1414, %v1702
    %v1773 = vadd.f32 %v1415, %v1705
    %v1774 = vadd.f32 %v1416, %v1710
    %v1775 = vadd.f32 %v1417, %v1713
    %v1776 = vadd.f32 %v1418, %v1718
    %v1777 = vadd.f32 %v1419, %v1721
    %v1778 = vadd.f32 %v1420, %v1726
    %v1779 = vadd.f32 %v1421, %v1729
    %v1780 = vadd.f32 %v1422, %v1734
    %v1781 = vadd.f32 %v1423, %v1737
    %v1782 = vadd.f32 %v1424, %v1742
    %v1783 = vadd.f32 %v1425, %v1745
    %s1784 = scalar_lea.vmem %s1, 10
    %v1785 = vld [vmem:[%s1784] sm:$0x3]
    %vm1786 = vcmask 1045504
    %v1787 = vrot.slane %v187, 2
    %v1788 = vrot.slane %v188, 2
    %v1789 = vsel %vm1786, %v1787, %v1788
    %v1790 = vrot.slane %v189, 2
    %v1791 = vsel %vm1786, %v1788, %v1790
    %v1792 = vrot.slane %v190, 2
    %v1793 = vsel %vm1786, %v1790, %v1792
    %v1794 = vrot.slane %v191, 2
    %v1795 = vsel %vm1786, %v1792, %v1794
    %v1796 = vrot.slane %v192, 2
    %v1797 = vsel %vm1786, %v1794, %v1796
    %v1798 = vrot.slane %v193, 2
    %v1799 = vsel %vm1786, %v1796, %v1798
    %v1800 = vrot.slane %v194, 2
    %v1801 = vsel %vm1786, %v1798, %v1800
    %v1802 = vrot.slane %v195, 2
    %v1803 = vsel %vm1786, %v1800, %v1802
    %v1804 = vrot.slane %v196, 2
    %v1805 = vsel %vm1786, %v1802, %v1804
    %v1806 = vrot.slane %v197, 2
    %v1807 = vsel %vm1786, %v1804, %v1806
    %v1808 = vrot.slane %v198, 2
    %v1809 = vsel %vm1786, %v1806, %v1808
    %v1810 = vrot.slane %v199, 2
    %v1811 = vsel %vm1786, %v1808, %v1810
    %v1812 = vrot.slane %v200, 2
    %v1813 = vsel %vm1786, %v1810, %v1812
    %v1814 = vrot.slane %v201, 2
    %v1815 = vsel %vm1786, %v1812, %v1814
    %v1816 = vrot.slane %v202, 2
    %v1817 = vsel %vm1786, %v1814, %v1816
    %v1818 = vrot.slane %v203, 2
    %v1819 = vsel %vm1786, %v1816, %v1818
    %v1820 = vrot.slane %v1198, 2
    %v1821 = vsel %vm1786, %v1818, %v1820
    %v1822 = vrot.slane %v1199, 2
    %v1823 = vsel %vm1786, %v1820, %v1822
    %v1825 = vsel %vm204, %v1789, 0
    %v1828 = vsel %vm204, %v1791, 0
    %v1831 = vsel %vm204, %v1793, 0
    %v1834 = vsel %vm204, %v1795, 0
    %v1837 = vsel %vm204, %v1797, 0
    %v1840 = vsel %vm204, %v1799, 0
    %v1843 = vsel %vm204, %v1801, 0
    %v1846 = vsel %vm204, %v1803, 0
    %v1849 = vsel %vm204, %v1805, 0
    %v1852 = vsel %vm204, %v1807, 0
    %v1855 = vsel %vm204, %v1809, 0
    %v1858 = vsel %vm204, %v1811, 0
    %v1861 = vsel %vm204, %v1813, 0
    %v1864 = vsel %vm204, %v1815, 0
    %v1867 = vsel %vm204, %v1817, 0
    %v1870 = vsel %vm204, %v1819, 0
    %v1873 = vsel %vm204, %v1821, 0
    %v1876 = vsel %vm204, %v1823, 0
    %v1879 = vsel %vm259, %v1785, 0
    %1881 = vmatprep.subr.bf16.mxu0 0
    %1882 = vmatpush1.bf16.msra.mxu0 0
    %1883 = vmatprep.subr.bf16.mxu0 0
    %1884 = vmatpush1.bf16.msra.mxu0 0
    %1885 = vmatprep.subr.bf16.mxu0 0
    %1886 = vmatpush1.bf16.msra.mxu0 0
    %1887 = vmatprep.subr.bf16.mxu0 0
    %1888 = vmatpush1.bf16.msra.mxu0 0
    %1889 = vmatprep.subr.bf16.mxu0 0
    %1890 = vmatpush1.bf16.msra.mxu0 0
    %1891 = vmatprep.subr.bf16.mxu0 0
    %1892 = vmatpush1.bf16.msra.mxu0 0
    %1893 = vmatprep.subr.bf16.mxu0 0
    %1894 = vmatpush1.bf16.msra.mxu0 0
    %1895 = vmatprep.subr.bf16.mxu0 0
    %1896 = vmatpush1.bf16.msra.mxu0 %v1879
    %1897 = vmatprep.subr.bf16.mxu0 0
    %1898 = vmatpush2.bf16.msra.mxu0 0
    %1899 = vmatprep.subr.bf16.mxu0 0
    %1900 = vmatpush2.bf16.msra.mxu0 0
    %1901 = vmatprep.subr.bf16.mxu0 0
    %1902 = vmatpush2.bf16.msra.mxu0 0
    %1903 = vmatprep.subr.bf16.mxu0 0
    %1904 = vmatpush2.bf16.msra.mxu0 0
    %1905 = vmatprep.subr.bf16.mxu0 0
    %1906 = vmatpush2.bf16.msra.mxu0 0
    %1907 = vmatprep.subr.bf16.mxu0 0
    %1908 = vmatpush2.bf16.msra.mxu0 0
    %1909 = vmatprep.subr.bf16.mxu0 0
    %1910 = vmatpush2.bf16.msra.mxu0 0
    %1911 = vmatprep.subr.bf16.mxu0 0
    %1912 = vmatpush2.bf16.msra.mxu0 0
    %1913 = vmatprep.mubr.bf16.mxu0 0
    %1914 = vmatmul.mubr.bf16.gmra.mxu0 %v1825
    %v1915 = vpop.f32.mrf.mxu0
    %v1916 = vadd.f32 0.0, %v1915
    %v1917 = vpop.f32.mrf.mxu0
    %v1918 = vpop.f32.mrf.mxu0
    %v1919 = vadd.f32 0.0, %v1918
    %v1920 = vpop.f32.mrf.mxu0
    %1921 = vmatprep.mubr.bf16.mxu0 0
    %1922 = vmatmul.mubr.bf16.gmra.mxu0 %v1828
    %v1923 = vpop.f32.mrf.mxu0
    %v1924 = vadd.f32 0.0, %v1923
    %v1925 = vpop.f32.mrf.mxu0
    %v1926 = vpop.f32.mrf.mxu0
    %v1927 = vadd.f32 0.0, %v1926
    %v1928 = vpop.f32.mrf.mxu0
    %1929 = vmatprep.mubr.bf16.mxu0 0
    %1930 = vmatmul.mubr.bf16.gmra.mxu0 %v1831
    %v1931 = vpop.f32.mrf.mxu0
    %v1932 = vadd.f32 0.0, %v1931
    %v1933 = vpop.f32.mrf.mxu0
    %v1934 = vpop.f32.mrf.mxu0
    %v1935 = vadd.f32 0.0, %v1934
    %v1936 = vpop.f32.mrf.mxu0
    %1937 = vmatprep.mubr.bf16.mxu0 0
    %1938 = vmatmul.mubr.bf16.gmra.mxu0 %v1834
    %v1939 = vpop.f32.mrf.mxu0
    %v1940 = vadd.f32 0.0, %v1939
    %v1941 = vpop.f32.mrf.mxu0
    %v1942 = vpop.f32.mrf.mxu0
    %v1943 = vadd.f32 0.0, %v1942
    %v1944 = vpop.f32.mrf.mxu0
    %1945 = vmatprep.mubr.bf16.mxu0 0
    %1946 = vmatmul.mubr.bf16.gmra.mxu0 %v1837
    %v1947 = vpop.f32.mrf.mxu0
    %v1948 = vadd.f32 0.0, %v1947
    %v1949 = vpop.f32.mrf.mxu0
    %v1950 = vpop.f32.mrf.mxu0
    %v1951 = vadd.f32 0.0, %v1950
    %v1952 = vpop.f32.mrf.mxu0
    %1953 = vmatprep.mubr.bf16.mxu0 0
    %1954 = vmatmul.mubr.bf16.gmra.mxu0 %v1840
    %v1955 = vpop.f32.mrf.mxu0
    %v1956 = vadd.f32 0.0, %v1955
    %v1957 = vpop.f32.mrf.mxu0
    %v1958 = vpop.f32.mrf.mxu0
    %v1959 = vadd.f32 0.0, %v1958
    %v1960 = vpop.f32.mrf.mxu0
    %1961 = vmatprep.mubr.bf16.mxu0 0
    %1962 = vmatmul.mubr.bf16.gmra.mxu0 %v1843
    %v1963 = vpop.f32.mrf.mxu0
    %v1964 = vadd.f32 0.0, %v1963
    %v1965 = vpop.f32.mrf.mxu0
    %v1966 = vpop.f32.mrf.mxu0
    %v1967 = vadd.f32 0.0, %v1966
    %v1968 = vpop.f32.mrf.mxu0
    %1969 = vmatprep.mubr.bf16.mxu0 0
    %1970 = vmatmul.mubr.bf16.gmra.mxu0 %v1846
    %v1971 = vpop.f32.mrf.mxu0
    %v1972 = vadd.f32 0.0, %v1971
    %v1973 = vpop.f32.mrf.mxu0
    %v1974 = vpop.f32.mrf.mxu0
    %v1975 = vadd.f32 0.0, %v1974
    %v1976 = vpop.f32.mrf.mxu0
    %1977 = vmatprep.mubr.bf16.mxu0 0
    %1978 = vmatmul.mubr.bf16.gmra.mxu0 %v1849
    %v1979 = vpop.f32.mrf.mxu0
    %v1980 = vadd.f32 0.0, %v1979
    %v1981 = vpop.f32.mrf.mxu0
    %v1982 = vpop.f32.mrf.mxu0
    %v1983 = vadd.f32 0.0, %v1982
    %v1984 = vpop.f32.mrf.mxu0
    %1985 = vmatprep.mubr.bf16.mxu0 0
    %1986 = vmatmul.mubr.bf16.gmra.mxu0 %v1852
    %v1987 = vpop.f32.mrf.mxu0
    %v1988 = vadd.f32 0.0, %v1987
    %v1989 = vpop.f32.mrf.mxu0
    %v1990 = vpop.f32.mrf.mxu0
    %v1991 = vadd.f32 0.0, %v1990
    %v1992 = vpop.f32.mrf.mxu0
    %1993 = vmatprep.mubr.bf16.mxu0 0
    %1994 = vmatmul.mubr.bf16.gmra.mxu0 %v1855
    %v1995 = vpop.f32.mrf.mxu0
    %v1996 = vadd.f32 0.0, %v1995
    %v1997 = vpop.f32.mrf.mxu0
    %v1998 = vpop.f32.mrf.mxu0
    %v1999 = vadd.f32 0.0, %v1998
    %v2000 = vpop.f32.mrf.mxu0
    %2001 = vmatprep.mubr.bf16.mxu0 0
    %2002 = vmatmul.mubr.bf16.gmra.mxu0 %v1858
    %v2003 = vpop.f32.mrf.mxu0
    %v2004 = vadd.f32 0.0, %v2003
    %v2005 = vpop.f32.mrf.mxu0
    %v2006 = vpop.f32.mrf.mxu0
    %v2007 = vadd.f32 0.0, %v2006
    %v2008 = vpop.f32.mrf.mxu0
    %2009 = vmatprep.mubr.bf16.mxu0 0
    %2010 = vmatmul.mubr.bf16.gmra.mxu0 %v1861
    %v2011 = vpop.f32.mrf.mxu0
    %v2012 = vadd.f32 0.0, %v2011
    %v2013 = vpop.f32.mrf.mxu0
    %v2014 = vpop.f32.mrf.mxu0
    %v2015 = vadd.f32 0.0, %v2014
    %v2016 = vpop.f32.mrf.mxu0
    %2017 = vmatprep.mubr.bf16.mxu0 0
    %2018 = vmatmul.mubr.bf16.gmra.mxu0 %v1864
    %v2019 = vpop.f32.mrf.mxu0
    %v2020 = vadd.f32 0.0, %v2019
    %v2021 = vpop.f32.mrf.mxu0
    %v2022 = vpop.f32.mrf.mxu0
    %v2023 = vadd.f32 0.0, %v2022
    %v2024 = vpop.f32.mrf.mxu0
    %2025 = vmatprep.mubr.bf16.mxu0 0
    %2026 = vmatmul.mubr.bf16.gmra.mxu0 %v1867
    %v2027 = vpop.f32.mrf.mxu0
    %v2028 = vadd.f32 0.0, %v2027
    %v2029 = vpop.f32.mrf.mxu0
    %v2030 = vpop.f32.mrf.mxu0
    %v2031 = vadd.f32 0.0, %v2030
    %v2032 = vpop.f32.mrf.mxu0
    %2033 = vmatprep.mubr.bf16.mxu0 0
    %2034 = vmatmul.mubr.bf16.gmra.mxu0 %v1870
    %v2035 = vpop.f32.mrf.mxu0
    %v2036 = vadd.f32 0.0, %v2035
    %v2037 = vpop.f32.mrf.mxu0
    %v2038 = vpop.f32.mrf.mxu0
    %v2039 = vadd.f32 0.0, %v2038
    %v2040 = vpop.f32.mrf.mxu0
    %2041 = vmatprep.mubr.bf16.mxu0 0
    %2042 = vmatmul.mubr.bf16.gmra.mxu0 %v1873
    %v2043 = vpop.f32.mrf.mxu0
    %v2044 = vadd.f32 0.0, %v2043
    %v2045 = vpop.f32.mrf.mxu0
    %v2046 = vpop.f32.mrf.mxu0
    %v2047 = vadd.f32 0.0, %v2046
    %v2048 = vpop.f32.mrf.mxu0
    %2049 = vmatprep.mubr.bf16.mxu0 0
    %2050 = vmatmul.mubr.bf16.gmra.mxu0 %v1876
    %v2051 = vpop.f32.mrf.mxu0
    %v2052 = vadd.f32 0.0, %v2051
    %v2053 = vpop.f32.mrf.mxu0
    %v2054 = vpop.f32.mrf.mxu0
    %v2055 = vadd.f32 0.0, %v2054
    %v2056 = vpop.f32.mrf.mxu0
    %2057 = vdwg.mxu0
    %v2058 = vadd.f32 %v1748, %v1916
    %v2059 = vadd.f32 %v1749, %v1919
    %v2060 = vadd.f32 %v1750, %v1924
    %v2061 = vadd.f32 %v1751, %v1927
    %v2062 = vadd.f32 %v1752, %v1932
    %v2063 = vadd.f32 %v1753, %v1935
    %v2064 = vadd.f32 %v1754, %v1940
    %v2065 = vadd.f32 %v1755, %v1943
    %v2066 = vadd.f32 %v1756, %v1948
    %v2067 = vadd.f32 %v1757, %v1951
    %v2068 = vadd.f32 %v1758, %v1956
    %v2069 = vadd.f32 %v1759, %v1959
    %v2070 = vadd.f32 %v1760, %v1964
    %v2071 = vadd.f32 %v1761, %v1967
    %v2072 = vadd.f32 %v1762, %v1972
    %v2073 = vadd.f32 %v1763, %v1975
    %v2074 = vadd.f32 %v1764, %v1980
    %v2075 = vadd.f32 %v1765, %v1983
    %v2076 = vadd.f32 %v1766, %v1988
    %v2077 = vadd.f32 %v1767, %v1991
    %v2078 = vadd.f32 %v1768, %v1996
    %v2079 = vadd.f32 %v1769, %v1999
    %v2080 = vadd.f32 %v1770, %v2004
    %v2081 = vadd.f32 %v1771, %v2007
    %v2082 = vadd.f32 %v1772, %v2012
    %v2083 = vadd.f32 %v1773, %v2015
    %v2084 = vadd.f32 %v1774, %v2020
    %v2085 = vadd.f32 %v1775, %v2023
    %v2086 = vadd.f32 %v1776, %v2028
    %v2087 = vadd.f32 %v1777, %v2031
    %v2088 = vadd.f32 %v1778, %v2036
    %v2089 = vadd.f32 %v1779, %v2039
    %v2090 = vadd.f32 %v1780, %v2044
    %v2091 = vadd.f32 %v1781, %v2047
    %v2092 = vadd.f32 %v1782, %v2052
    %v2093 = vadd.f32 %v1783, %v2055
    %s2094 = scalar_lea.vmem %s1, 12
    %v2095 = vld [vmem:[%s2094] sm:$0x3]
    %v2098 = vunpack.c.l.b16 %v105
    %v2099 = vunpack.c.l.b16 %v106
    %v2100 = vpack.c.b16 %v2098, %v1197
    %v2101 = vpack.c.b16 %v2099, %v2099
    %v2102 = vrot.slane %v2100, 2
    %v2103 = vsel %vm1786, %v1820, %v2102
    %v2104 = vrot.slane %v2101, 2
    %v2105 = vsel %vm1786, %v2102, %v2104
    %v2107 = vsel %vm204, %v2103, 0
    %v2110 = vsel %vm204, %v2105, 0
    %v2113 = vsel %vm259, %v2095, 0
    %2115 = vmatprep.subr.bf16.mxu0 0
    %2116 = vmatpush1.bf16.msra.mxu0 0
    %2117 = vmatprep.subr.bf16.mxu0 0
    %2118 = vmatpush1.bf16.msra.mxu0 0
    %2119 = vmatprep.subr.bf16.mxu0 0
    %2120 = vmatpush1.bf16.msra.mxu0 0
    %2121 = vmatprep.subr.bf16.mxu0 0
    %2122 = vmatpush1.bf16.msra.mxu0 0
    %2123 = vmatprep.subr.bf16.mxu0 0
    %2124 = vmatpush1.bf16.msra.mxu0 0
    %2125 = vmatprep.subr.bf16.mxu0 0
    %2126 = vmatpush1.bf16.msra.mxu0 0
    %2127 = vmatprep.subr.bf16.mxu0 0
    %2128 = vmatpush1.bf16.msra.mxu0 0
    %2129 = vmatprep.subr.bf16.mxu0 0
    %2130 = vmatpush1.bf16.msra.mxu0 %v2113
    %2131 = vmatprep.subr.bf16.mxu0 0
    %2132 = vmatpush2.bf16.msra.mxu0 0
    %2133 = vmatprep.subr.bf16.mxu0 0
    %2134 = vmatpush2.bf16.msra.mxu0 0
    %2135 = vmatprep.subr.bf16.mxu0 0
    %2136 = vmatpush2.bf16.msra.mxu0 0
    %2137 = vmatprep.subr.bf16.mxu0 0
    %2138 = vmatpush2.bf16.msra.mxu0 0
    %2139 = vmatprep.subr.bf16.mxu0 0
    %2140 = vmatpush2.bf16.msra.mxu0 0
    %2141 = vmatprep.subr.bf16.mxu0 0
    %2142 = vmatpush2.bf16.msra.mxu0 0
    %2143 = vmatprep.subr.bf16.mxu0 0
    %2144 = vmatpush2.bf16.msra.mxu0 0
    %2145 = vmatprep.subr.bf16.mxu0 0
    %2146 = vmatpush2.bf16.msra.mxu0 0
    %2147 = vmatprep.mubr.bf16.mxu0 0
    %2148 = vmatmul.mubr.bf16.gmra.mxu0 %v1828
    %v2149 = vpop.f32.mrf.mxu0
    %v2150 = vadd.f32 0.0, %v2149
    %v2151 = vpop.f32.mrf.mxu0
    %v2152 = vpop.f32.mrf.mxu0
    %v2153 = vadd.f32 0.0, %v2152
    %v2154 = vpop.f32.mrf.mxu0
    %2155 = vmatprep.mubr.bf16.mxu0 0
    %2156 = vmatmul.mubr.bf16.gmra.mxu0 %v1831
    %v2157 = vpop.f32.mrf.mxu0
    %v2158 = vadd.f32 0.0, %v2157
    %v2159 = vpop.f32.mrf.mxu0
    %v2160 = vpop.f32.mrf.mxu0
    %v2161 = vadd.f32 0.0, %v2160
    %v2162 = vpop.f32.mrf.mxu0
    %2163 = vmatprep.mubr.bf16.mxu0 0
    %2164 = vmatmul.mubr.bf16.gmra.mxu0 %v1834
    %v2165 = vpop.f32.mrf.mxu0
    %v2166 = vadd.f32 0.0, %v2165
    %v2167 = vpop.f32.mrf.mxu0
    %v2168 = vpop.f32.mrf.mxu0
    %v2169 = vadd.f32 0.0, %v2168
    %v2170 = vpop.f32.mrf.mxu0
    %2171 = vmatprep.mubr.bf16.mxu0 0
    %2172 = vmatmul.mubr.bf16.gmra.mxu0 %v1837
    %v2173 = vpop.f32.mrf.mxu0
    %v2174 = vadd.f32 0.0, %v2173
    %v2175 = vpop.f32.mrf.mxu0
    %v2176 = vpop.f32.mrf.mxu0
    %v2177 = vadd.f32 0.0, %v2176
    %v2178 = vpop.f32.mrf.mxu0
    %2179 = vmatprep.mubr.bf16.mxu0 0
    %2180 = vmatmul.mubr.bf16.gmra.mxu0 %v1840
    %v2181 = vpop.f32.mrf.mxu0
    %v2182 = vadd.f32 0.0, %v2181
    %v2183 = vpop.f32.mrf.mxu0
    %v2184 = vpop.f32.mrf.mxu0
    %v2185 = vadd.f32 0.0, %v2184
    %v2186 = vpop.f32.mrf.mxu0
    %2187 = vmatprep.mubr.bf16.mxu0 0
    %2188 = vmatmul.mubr.bf16.gmra.mxu0 %v1843
    %v2189 = vpop.f32.mrf.mxu0
    %v2190 = vadd.f32 0.0, %v2189
    %v2191 = vpop.f32.mrf.mxu0
    %v2192 = vpop.f32.mrf.mxu0
    %v2193 = vadd.f32 0.0, %v2192
    %v2194 = vpop.f32.mrf.mxu0
    %2195 = vmatprep.mubr.bf16.mxu0 0
    %2196 = vmatmul.mubr.bf16.gmra.mxu0 %v1846
    %v2197 = vpop.f32.mrf.mxu0
    %v2198 = vadd.f32 0.0, %v2197
    %v2199 = vpop.f32.mrf.mxu0
    %v2200 = vpop.f32.mrf.mxu0
    %v2201 = vadd.f32 0.0, %v2200
    %v2202 = vpop.f32.mrf.mxu0
    %2203 = vmatprep.mubr.bf16.mxu0 0
    %2204 = vmatmul.mubr.bf16.gmra.mxu0 %v1849
    %v2205 = vpop.f32.mrf.mxu0
    %v2206 = vadd.f32 0.0, %v2205
    %v2207 = vpop.f32.mrf.mxu0
    %v2208 = vpop.f32.mrf.mxu0
    %v2209 = vadd.f32 0.0, %v2208
    %v2210 = vpop.f32.mrf.mxu0
    %2211 = vmatprep.mubr.bf16.mxu0 0
    %2212 = vmatmul.mubr.bf16.gmra.mxu0 %v1852
    %v2213 = vpop.f32.mrf.mxu0
    %v2214 = vadd.f32 0.0, %v2213
    %v2215 = vpop.f32.mrf.mxu0
    %v2216 = vpop.f32.mrf.mxu0
    %v2217 = vadd.f32 0.0, %v2216
    %v2218 = vpop.f32.mrf.mxu0
    %2219 = vmatprep.mubr.bf16.mxu0 0
    %2220 = vmatmul.mubr.bf16.gmra.mxu0 %v1855
    %v2221 = vpop.f32.mrf.mxu0
    %v2222 = vadd.f32 0.0, %v2221
    %v2223 = vpop.f32.mrf.mxu0
    %v2224 = vpop.f32.mrf.mxu0
    %v2225 = vadd.f32 0.0, %v2224
    %v2226 = vpop.f32.mrf.mxu0
    %2227 = vmatprep.mubr.bf16.mxu0 0
    %2228 = vmatmul.mubr.bf16.gmra.mxu0 %v1858
    %v2229 = vpop.f32.mrf.mxu0
    %v2230 = vadd.f32 0.0, %v2229
    %v2231 = vpop.f32.mrf.mxu0
    %v2232 = vpop.f32.mrf.mxu0
    %v2233 = vadd.f32 0.0, %v2232
    %v2234 = vpop.f32.mrf.mxu0
    %2235 = vmatprep.mubr.bf16.mxu0 0
    %2236 = vmatmul.mubr.bf16.gmra.mxu0 %v1861
    %v2237 = vpop.f32.mrf.mxu0
    %v2238 = vadd.f32 0.0, %v2237
    %v2239 = vpop.f32.mrf.mxu0
    %v2240 = vpop.f32.mrf.mxu0
    %v2241 = vadd.f32 0.0, %v2240
    %v2242 = vpop.f32.mrf.mxu0
    %2243 = vmatprep.mubr.bf16.mxu0 0
    %2244 = vmatmul.mubr.bf16.gmra.mxu0 %v1864
    %v2245 = vpop.f32.mrf.mxu0
    %v2246 = vadd.f32 0.0, %v2245
    %v2247 = vpop.f32.mrf.mxu0
    %v2248 = vpop.f32.mrf.mxu0
    %v2249 = vadd.f32 0.0, %v2248
    %v2250 = vpop.f32.mrf.mxu0
    %2251 = vmatprep.mubr.bf16.mxu0 0
    %2252 = vmatmul.mubr.bf16.gmra.mxu0 %v1867
    %v2253 = vpop.f32.mrf.mxu0
    %v2254 = vadd.f32 0.0, %v2253
    %v2255 = vpop.f32.mrf.mxu0
    %v2256 = vpop.f32.mrf.mxu0
    %v2257 = vadd.f32 0.0, %v2256
    %v2258 = vpop.f32.mrf.mxu0
    %2259 = vmatprep.mubr.bf16.mxu0 0
    %2260 = vmatmul.mubr.bf16.gmra.mxu0 %v1870
    %v2261 = vpop.f32.mrf.mxu0
    %v2262 = vadd.f32 0.0, %v2261
    %v2263 = vpop.f32.mrf.mxu0
    %v2264 = vpop.f32.mrf.mxu0
    %v2265 = vadd.f32 0.0, %v2264
    %v2266 = vpop.f32.mrf.mxu0
    %2267 = vmatprep.mubr.bf16.mxu0 0
    %2268 = vmatmul.mubr.bf16.gmra.mxu0 %v1873
    %v2269 = vpop.f32.mrf.mxu0
    %v2270 = vadd.f32 0.0, %v2269
    %v2271 = vpop.f32.mrf.mxu0
    %v2272 = vpop.f32.mrf.mxu0
    %v2273 = vadd.f32 0.0, %v2272
    %v2274 = vpop.f32.mrf.mxu0
    %2275 = vmatprep.mubr.bf16.mxu0 0
    %2276 = vmatmul.mubr.bf16.gmra.mxu0 %v2107
    %v2277 = vpop.f32.mrf.mxu0
    %v2278 = vadd.f32 0.0, %v2277
    %v2279 = vpop.f32.mrf.mxu0
    %v2280 = vpop.f32.mrf.mxu0
    %v2281 = vadd.f32 0.0, %v2280
    %v2282 = vpop.f32.mrf.mxu0
    %2283 = vmatprep.mubr.bf16.mxu0 0
    %2284 = vmatmul.mubr.bf16.gmra.mxu0 %v2110
    %v2285 = vpop.f32.mrf.mxu0
    %v2286 = vadd.f32 0.0, %v2285
    %v2287 = vpop.f32.mrf.mxu0
    %v2288 = vpop.f32.mrf.mxu0
    %v2289 = vadd.f32 0.0, %v2288
    %v2290 = vpop.f32.mrf.mxu0
    %2291 = vdwg.mxu0
    %v2292 = vadd.f32 %v2058, %v2150
    %v2293 = vadd.f32 %v2059, %v2153
    %v2294 = vadd.f32 %v2060, %v2158
    %v2295 = vadd.f32 %v2061, %v2161
    %v2296 = vadd.f32 %v2062, %v2166
    %v2297 = vadd.f32 %v2063, %v2169
    %v2298 = vadd.f32 %v2064, %v2174
    %v2299 = vadd.f32 %v2065, %v2177
    %v2300 = vadd.f32 %v2066, %v2182
    %v2301 = vadd.f32 %v2067, %v2185
    %v2302 = vadd.f32 %v2068, %v2190
    %v2303 = vadd.f32 %v2069, %v2193
    %v2304 = vadd.f32 %v2070, %v2198
    %v2305 = vadd.f32 %v2071, %v2201
    %v2306 = vadd.f32 %v2072, %v2206
    %v2307 = vadd.f32 %v2073, %v2209
    %v2308 = vadd.f32 %v2074, %v2214
    %v2309 = vadd.f32 %v2075, %v2217
    %v2310 = vadd.f32 %v2076, %v2222
    %v2311 = vadd.f32 %v2077, %v2225
    %v2312 = vadd.f32 %v2078, %v2230
    %v2313 = vadd.f32 %v2079, %v2233
    %v2314 = vadd.f32 %v2080, %v2238
    %v2315 = vadd.f32 %v2081, %v2241
    %v2316 = vadd.f32 %v2082, %v2246
    %v2317 = vadd.f32 %v2083, %v2249
    %v2318 = vadd.f32 %v2084, %v2254
    %v2319 = vadd.f32 %v2085, %v2257
    %v2320 = vadd.f32 %v2086, %v2262
    %v2321 = vadd.f32 %v2087, %v2265
    %v2322 = vadd.f32 %v2088, %v2270
    %v2323 = vadd.f32 %v2089, %v2273
    %v2324 = vadd.f32 %v2090, %v2278
    %v2325 = vadd.f32 %v2091, %v2281
    %v2326 = vadd.f32 %v2092, %v2286
    %v2327 = vadd.f32 %v2093, %v2289
    %s2328 = scalar_lea.vmem %s1, 14
    %v2329 = vld [vmem:[%s2328] sm:$0x3]
    %vm2330 = vsmask.f32 5376
    %v2331 = vrot.slane %v499, 2
    %v2332 = vrot.slane %v495, 3
    %v2333 = vor.u32 %v2331, %v2332
    %v2334 = vrot.slane %v506, 2
    %v2335 = vrot.slane %v502, 3
    %v2336 = vor.u32 %v2334, %v2335
    %v2337 = vsel %vm2330, %v2333, %v2336
    %v2338 = vrot.slane %v513, 2
    %v2339 = vrot.slane %v509, 3
    %v2340 = vor.u32 %v2338, %v2339
    %v2341 = vsel %vm2330, %v2336, %v2340
    %v2342 = vrot.slane %v520, 2
    %v2343 = vrot.slane %v516, 3
    %v2344 = vor.u32 %v2342, %v2343
    %v2345 = vsel %vm2330, %v2340, %v2344
    %v2346 = vrot.slane %v527, 2
    %v2347 = vrot.slane %v523, 3
    %v2348 = vor.u32 %v2346, %v2347
    %v2349 = vsel %vm2330, %v2344, %v2348
    %v2350 = vrot.slane %v534, 2
    %v2351 = vrot.slane %v530, 3
    %v2352 = vor.u32 %v2350, %v2351
    %v2353 = vsel %vm2330, %v2348, %v2352
    %v2354 = vrot.slane %v541, 2
    %v2355 = vrot.slane %v537, 3
    %v2356 = vor.u32 %v2354, %v2355
    %v2357 = vsel %vm2330, %v2352, %v2356
    %v2358 = vrot.slane %v548, 2
    %v2359 = vrot.slane %v544, 3
    %v2360 = vor.u32 %v2358, %v2359
    %v2361 = vsel %vm2330, %v2356, %v2360
    %v2362 = vrot.slane %v555, 2
    %v2363 = vrot.slane %v551, 3
    %v2364 = vor.u32 %v2362, %v2363
    %v2365 = vsel %vm2330, %v2360, %v2364
    %v2366 = vrot.slane %v562, 2
    %v2367 = vrot.slane %v558, 3
    %v2368 = vor.u32 %v2366, %v2367
    %v2369 = vsel %vm2330, %v2364, %v2368
    %v2370 = vrot.slane %v569, 2
    %v2371 = vrot.slane %v565, 3
    %v2372 = vor.u32 %v2370, %v2371
    %v2373 = vsel %vm2330, %v2368, %v2372
    %v2374 = vrot.slane %v576, 2
    %v2375 = vrot.slane %v572, 3
    %v2376 = vor.u32 %v2374, %v2375
    %v2377 = vsel %vm2330, %v2372, %v2376
    %v2378 = vrot.slane %v583, 2
    %v2379 = vrot.slane %v579, 3
    %v2380 = vor.u32 %v2378, %v2379
    %v2381 = vsel %vm2330, %v2376, %v2380
    %v2382 = vrot.slane %v590, 2
    %v2383 = vrot.slane %v586, 3
    %v2384 = vor.u32 %v2382, %v2383
    %v2385 = vsel %vm2330, %v2380, %v2384
    %v2386 = vrot.slane %v597, 2
    %v2387 = vrot.slane %v593, 3
    %v2388 = vor.u32 %v2386, %v2387
    %v2389 = vsel %vm2330, %v2384, %v2388
    %v2390 = vrot.slane %v604, 2
    %v2391 = vrot.slane %v600, 3
    %v2392 = vor.u32 %v2390, %v2391
    %v2393 = vsel %vm2330, %v2388, %v2392
    %v2394 = vrot.slane %v1497, 2
    %v2395 = vrot.slane %v1500, 3
    %v2396 = vor.u32 %v2394, %v2395
    %v2397 = vsel %vm2330, %v2392, %v2396
    %v2399 = vshrl.u32 %v2100, 16
    %v2401 = vrot.slane %v2399, 2
    %v2402 = vshll.u32 %v2100, 16
    %v2404 = vrot.slane %v2402, 3
    %v2405 = vor.u32 %v2401, %v2404
    %v2406 = vsel %vm2330, %v2396, %v2405
    %v2408 = vshrl.u32 %v2101, 16
    %v2410 = vrot.slane %v2408, 2
    %v2411 = vshll.u32 %v2101, 16
    %v2413 = vrot.slane %v2411, 3
    %v2414 = vor.u32 %v2410, %v2413
    %v2415 = vsel %vm2330, %v2405, %v2414
    %v2417 = vsel %vm204, %v2337, 0
    %v2420 = vsel %vm204, %v2341, 0
    %v2423 = vsel %vm204, %v2345, 0
    %v2426 = vsel %vm204, %v2349, 0
    %v2429 = vsel %vm204, %v2353, 0
    %v2432 = vsel %vm204, %v2357, 0
    %v2435 = vsel %vm204, %v2361, 0
    %v2438 = vsel %vm204, %v2365, 0
    %v2441 = vsel %vm204, %v2369, 0
    %v2444 = vsel %vm204, %v2373, 0
    %v2447 = vsel %vm204, %v2377, 0
    %v2450 = vsel %vm204, %v2381, 0
    %v2453 = vsel %vm204, %v2385, 0
    %v2456 = vsel %vm204, %v2389, 0
    %v2459 = vsel %vm204, %v2393, 0
    %v2462 = vsel %vm204, %v2397, 0
    %v2465 = vsel %vm204, %v2406, 0
    %v2468 = vsel %vm204, %v2415, 0
    %v2471 = vsel %vm259, %v2329, 0
    %2473 = vmatprep.subr.bf16.mxu0 0
    %2474 = vmatpush1.bf16.msra.mxu0 0
    %2475 = vmatprep.subr.bf16.mxu0 0
    %2476 = vmatpush1.bf16.msra.mxu0 0
    %2477 = vmatprep.subr.bf16.mxu0 0
    %2478 = vmatpush1.bf16.msra.mxu0 0
    %2479 = vmatprep.subr.bf16.mxu0 0
    %2480 = vmatpush1.bf16.msra.mxu0 0
    %2481 = vmatprep.subr.bf16.mxu0 0
    %2482 = vmatpush1.bf16.msra.mxu0 0
    %2483 = vmatprep.subr.bf16.mxu0 0
    %2484 = vmatpush1.bf16.msra.mxu0 0
    %2485 = vmatprep.subr.bf16.mxu0 0
    %2486 = vmatpush1.bf16.msra.mxu0 0
    %2487 = vmatprep.subr.bf16.mxu0 0
    %2488 = vmatpush1.bf16.msra.mxu0 %v2471
    %2489 = vmatprep.subr.bf16.mxu0 0
    %2490 = vmatpush2.bf16.msra.mxu0 0
    %2491 = vmatprep.subr.bf16.mxu0 0
    %2492 = vmatpush2.bf16.msra.mxu0 0
    %2493 = vmatprep.subr.bf16.mxu0 0
    %2494 = vmatpush2.bf16.msra.mxu0 0
    %2495 = vmatprep.subr.bf16.mxu0 0
    %2496 = vmatpush2.bf16.msra.mxu0 0
    %2497 = vmatprep.subr.bf16.mxu0 0
    %2498 = vmatpush2.bf16.msra.mxu0 0
    %2499 = vmatprep.subr.bf16.mxu0 0
    %2500 = vmatpush2.bf16.msra.mxu0 0
    %2501 = vmatprep.subr.bf16.mxu0 0
    %2502 = vmatpush2.bf16.msra.mxu0 0
    %2503 = vmatprep.subr.bf16.mxu0 0
    %2504 = vmatpush2.bf16.msra.mxu0 0
    %2505 = vmatprep.mubr.bf16.mxu0 0
    %2506 = vmatmul.mubr.bf16.gmra.mxu0 %v2417
    %v2507 = vpop.f32.mrf.mxu0
    %v2508 = vadd.f32 0.0, %v2507
    %v2509 = vpop.f32.mrf.mxu0
    %v2510 = vpop.f32.mrf.mxu0
    %v2511 = vadd.f32 0.0, %v2510
    %v2512 = vpop.f32.mrf.mxu0
    %2513 = vmatprep.mubr.bf16.mxu0 0
    %2514 = vmatmul.mubr.bf16.gmra.mxu0 %v2420
    %v2515 = vpop.f32.mrf.mxu0
    %v2516 = vadd.f32 0.0, %v2515
    %v2517 = vpop.f32.mrf.mxu0
    %v2518 = vpop.f32.mrf.mxu0
    %v2519 = vadd.f32 0.0, %v2518
    %v2520 = vpop.f32.mrf.mxu0
    %2521 = vmatprep.mubr.bf16.mxu0 0
    %2522 = vmatmul.mubr.bf16.gmra.mxu0 %v2423
    %v2523 = vpop.f32.mrf.mxu0
    %v2524 = vadd.f32 0.0, %v2523
    %v2525 = vpop.f32.mrf.mxu0
    %v2526 = vpop.f32.mrf.mxu0
    %v2527 = vadd.f32 0.0, %v2526
    %v2528 = vpop.f32.mrf.mxu0
    %2529 = vmatprep.mubr.bf16.mxu0 0
    %2530 = vmatmul.mubr.bf16.gmra.mxu0 %v2426
    %v2531 = vpop.f32.mrf.mxu0
    %v2532 = vadd.f32 0.0, %v2531
    %v2533 = vpop.f32.mrf.mxu0
    %v2534 = vpop.f32.mrf.mxu0
    %v2535 = vadd.f32 0.0, %v2534
    %v2536 = vpop.f32.mrf.mxu0
    %2537 = vmatprep.mubr.bf16.mxu0 0
    %2538 = vmatmul.mubr.bf16.gmra.mxu0 %v2429
    %v2539 = vpop.f32.mrf.mxu0
    %v2540 = vadd.f32 0.0, %v2539
    %v2541 = vpop.f32.mrf.mxu0
    %v2542 = vpop.f32.mrf.mxu0
    %v2543 = vadd.f32 0.0, %v2542
    %v2544 = vpop.f32.mrf.mxu0
    %2545 = vmatprep.mubr.bf16.mxu0 0
    %2546 = vmatmul.mubr.bf16.gmra.mxu0 %v2432
    %v2547 = vpop.f32.mrf.mxu0
    %v2548 = vadd.f32 0.0, %v2547
    %v2549 = vpop.f32.mrf.mxu0
    %v2550 = vpop.f32.mrf.mxu0
    %v2551 = vadd.f32 0.0, %v2550
    %v2552 = vpop.f32.mrf.mxu0
    %2553 = vmatprep.mubr.bf16.mxu0 0
    %2554 = vmatmul.mubr.bf16.gmra.mxu0 %v2435
    %v2555 = vpop.f32.mrf.mxu0
    %v2556 = vadd.f32 0.0, %v2555
    %v2557 = vpop.f32.mrf.mxu0
    %v2558 = vpop.f32.mrf.mxu0
    %v2559 = vadd.f32 0.0, %v2558
    %v2560 = vpop.f32.mrf.mxu0
    %2561 = vmatprep.mubr.bf16.mxu0 0
    %2562 = vmatmul.mubr.bf16.gmra.mxu0 %v2438
    %v2563 = vpop.f32.mrf.mxu0
    %v2564 = vadd.f32 0.0, %v2563
    %v2565 = vpop.f32.mrf.mxu0
    %v2566 = vpop.f32.mrf.mxu0
    %v2567 = vadd.f32 0.0, %v2566
    %v2568 = vpop.f32.mrf.mxu0
    %2569 = vmatprep.mubr.bf16.mxu0 0
    %2570 = vmatmul.mubr.bf16.gmra.mxu0 %v2441
    %v2571 = vpop.f32.mrf.mxu0
    %v2572 = vadd.f32 0.0, %v2571
    %v2573 = vpop.f32.mrf.mxu0
    %v2574 = vpop.f32.mrf.mxu0
    %v2575 = vadd.f32 0.0, %v2574
    %v2576 = vpop.f32.mrf.mxu0
    %2577 = vmatprep.mubr.bf16.mxu0 0
    %2578 = vmatmul.mubr.bf16.gmra.mxu0 %v2444
    %v2579 = vpop.f32.mrf.mxu0
    %v2580 = vadd.f32 0.0, %v2579
    %v2581 = vpop.f32.mrf.mxu0
    %v2582 = vpop.f32.mrf.mxu0
    %v2583 = vadd.f32 0.0, %v2582
    %v2584 = vpop.f32.mrf.mxu0
    %2585 = vmatprep.mubr.bf16.mxu0 0
    %2586 = vmatmul.mubr.bf16.gmra.mxu0 %v2447
    %v2587 = vpop.f32.mrf.mxu0
    %v2588 = vadd.f32 0.0, %v2587
    %v2589 = vpop.f32.mrf.mxu0
    %v2590 = vpop.f32.mrf.mxu0
    %v2591 = vadd.f32 0.0, %v2590
    %v2592 = vpop.f32.mrf.mxu0
    %2593 = vmatprep.mubr.bf16.mxu0 0
    %2594 = vmatmul.mubr.bf16.gmra.mxu0 %v2450
    %v2595 = vpop.f32.mrf.mxu0
    %v2596 = vadd.f32 0.0, %v2595
    %v2597 = vpop.f32.mrf.mxu0
    %v2598 = vpop.f32.mrf.mxu0
    %v2599 = vadd.f32 0.0, %v2598
    %v2600 = vpop.f32.mrf.mxu0
    %2601 = vmatprep.mubr.bf16.mxu0 0
    %2602 = vmatmul.mubr.bf16.gmra.mxu0 %v2453
    %v2603 = vpop.f32.mrf.mxu0
    %v2604 = vadd.f32 0.0, %v2603
    %v2605 = vpop.f32.mrf.mxu0
    %v2606 = vpop.f32.mrf.mxu0
    %v2607 = vadd.f32 0.0, %v2606
    %v2608 = vpop.f32.mrf.mxu0
    %2609 = vmatprep.mubr.bf16.mxu0 0
    %2610 = vmatmul.mubr.bf16.gmra.mxu0 %v2456
    %v2611 = vpop.f32.mrf.mxu0
    %v2612 = vadd.f32 0.0, %v2611
    %v2613 = vpop.f32.mrf.mxu0
    %v2614 = vpop.f32.mrf.mxu0
    %v2615 = vadd.f32 0.0, %v2614
    %v2616 = vpop.f32.mrf.mxu0
    %2617 = vmatprep.mubr.bf16.mxu0 0
    %2618 = vmatmul.mubr.bf16.gmra.mxu0 %v2459
    %v2619 = vpop.f32.mrf.mxu0
    %v2620 = vadd.f32 0.0, %v2619
    %v2621 = vpop.f32.mrf.mxu0
    %v2622 = vpop.f32.mrf.mxu0
    %v2623 = vadd.f32 0.0, %v2622
    %v2624 = vpop.f32.mrf.mxu0
    %2625 = vmatprep.mubr.bf16.mxu0 0
    %2626 = vmatmul.mubr.bf16.gmra.mxu0 %v2462
    %v2627 = vpop.f32.mrf.mxu0
    %v2628 = vadd.f32 0.0, %v2627
    %v2629 = vpop.f32.mrf.mxu0
    %v2630 = vpop.f32.mrf.mxu0
    %v2631 = vadd.f32 0.0, %v2630
    %v2632 = vpop.f32.mrf.mxu0
    %2633 = vmatprep.mubr.bf16.mxu0 0
    %2634 = vmatmul.mubr.bf16.gmra.mxu0 %v2465
    %v2635 = vpop.f32.mrf.mxu0
    %v2636 = vadd.f32 0.0, %v2635
    %v2637 = vpop.f32.mrf.mxu0
    %v2638 = vpop.f32.mrf.mxu0
    %v2639 = vadd.f32 0.0, %v2638
    %v2640 = vpop.f32.mrf.mxu0
    %2641 = vmatprep.mubr.bf16.mxu0 0
    %2642 = vmatmul.mubr.bf16.gmra.mxu0 %v2468
    %v2643 = vpop.f32.mrf.mxu0
    %v2644 = vadd.f32 0.0, %v2643
    %v2645 = vpop.f32.mrf.mxu0
    %v2646 = vpop.f32.mrf.mxu0
    %v2647 = vadd.f32 0.0, %v2646
    %v2648 = vpop.f32.mrf.mxu0
    %2649 = vdwg.mxu0
    %v2650 = vadd.f32 %v2292, %v2508
    %v2651 = vadd.f32 %v2293, %v2511
    %v2652 = vadd.f32 %v2294, %v2516
    %v2653 = vadd.f32 %v2295, %v2519
    %v2654 = vadd.f32 %v2296, %v2524
    %v2655 = vadd.f32 %v2297, %v2527
    %v2656 = vadd.f32 %v2298, %v2532
    %v2657 = vadd.f32 %v2299, %v2535
    %v2658 = vadd.f32 %v2300, %v2540
    %v2659 = vadd.f32 %v2301, %v2543
    %v2660 = vadd.f32 %v2302, %v2548
    %v2661 = vadd.f32 %v2303, %v2551
    %v2662 = vadd.f32 %v2304, %v2556
    %v2663 = vadd.f32 %v2305, %v2559
    %v2664 = vadd.f32 %v2306, %v2564
    %v2665 = vadd.f32 %v2307, %v2567
    %v2666 = vadd.f32 %v2308, %v2572
    %v2667 = vadd.f32 %v2309, %v2575
    %v2668 = vadd.f32 %v2310, %v2580
    %v2669 = vadd.f32 %v2311, %v2583
    %v2670 = vadd.f32 %v2312, %v2588
    %v2671 = vadd.f32 %v2313, %v2591
    %v2672 = vadd.f32 %v2314, %v2596
    %v2673 = vadd.f32 %v2315, %v2599
    %v2674 = vadd.f32 %v2316, %v2604
    %v2675 = vadd.f32 %v2317, %v2607
    %v2676 = vadd.f32 %v2318, %v2612
    %v2677 = vadd.f32 %v2319, %v2615
    %v2678 = vadd.f32 %v2320, %v2620
    %v2679 = vadd.f32 %v2321, %v2623
    %v2680 = vadd.f32 %v2322, %v2628
    %v2681 = vadd.f32 %v2323, %v2631
    %v2682 = vadd.f32 %v2324, %v2636
    %v2683 = vadd.f32 %v2325, %v2639
    %v2684 = vadd.f32 %v2326, %v2644
    %v2685 = vadd.f32 %v2327, %v2647
    %s2686 = scalar_lea.vmem %s1, 16
    %v2687 = vld [vmem:[%s2686] sm:$0x3]
    %vm2688 = vcmask 1044480
    %v2689 = vrot.slane %v188, 3
    %v2690 = vrot.slane %v189, 3
    %v2691 = vsel %vm2688, %v2689, %v2690
    %v2692 = vrot.slane %v190, 3
    %v2693 = vsel %vm2688, %v2690, %v2692
    %v2694 = vrot.slane %v191, 3
    %v2695 = vsel %vm2688, %v2692, %v2694
    %v2696 = vrot.slane %v192, 3
    %v2697 = vsel %vm2688, %v2694, %v2696
    %v2698 = vrot.slane %v193, 3
    %v2699 = vsel %vm2688, %v2696, %v2698
    %v2700 = vrot.slane %v194, 3
    %v2701 = vsel %vm2688, %v2698, %v2700
    %v2702 = vrot.slane %v195, 3
    %v2703 = vsel %vm2688, %v2700, %v2702
    %v2704 = vrot.slane %v196, 3
    %v2705 = vsel %vm2688, %v2702, %v2704
    %v2706 = vrot.slane %v197, 3
    %v2707 = vsel %vm2688, %v2704, %v2706
    %v2708 = vrot.slane %v198, 3
    %v2709 = vsel %vm2688, %v2706, %v2708
    %v2710 = vrot.slane %v199, 3
    %v2711 = vsel %vm2688, %v2708, %v2710
    %v2712 = vrot.slane %v200, 3
    %v2713 = vsel %vm2688, %v2710, %v2712
    %v2714 = vrot.slane %v201, 3
    %v2715 = vsel %vm2688, %v2712, %v2714
    %v2716 = vrot.slane %v202, 3
    %v2717 = vsel %vm2688, %v2714, %v2716
    %v2718 = vrot.slane %v203, 3
    %v2719 = vsel %vm2688, %v2716, %v2718
    %v2720 = vrot.slane %v1198, 3
    %v2721 = vsel %vm2688, %v2718, %v2720
    %v2722 = vrot.slane %v2100, 3
    %v2723 = vsel %vm2688, %v2720, %v2722
    %v2724 = vrot.slane %v2101, 3
    %v2725 = vsel %vm2688, %v2722, %v2724
    %v2727 = vsel %vm204, %v2691, 0
    %v2730 = vsel %vm204, %v2693, 0
    %v2733 = vsel %vm204, %v2695, 0
    %v2736 = vsel %vm204, %v2697, 0
    %v2739 = vsel %vm204, %v2699, 0
    %v2742 = vsel %vm204, %v2701, 0
    %v2745 = vsel %vm204, %v2703, 0
    %v2748 = vsel %vm204, %v2705, 0
    %v2751 = vsel %vm204, %v2707, 0
    %v2754 = vsel %vm204, %v2709, 0
    %v2757 = vsel %vm204, %v2711, 0
    %v2760 = vsel %vm204, %v2713, 0
    %v2763 = vsel %vm204, %v2715, 0
    %v2766 = vsel %vm204, %v2717, 0
    %v2769 = vsel %vm204, %v2719, 0
    %v2772 = vsel %vm204, %v2721, 0
    %v2775 = vsel %vm204, %v2723, 0
    %v2778 = vsel %vm204, %v2725, 0
    %v2781 = vsel %vm259, %v2687, 0
    %2783 = vmatprep.subr.bf16.mxu0 0
    %2784 = vmatpush1.bf16.msra.mxu0 0
    %2785 = vmatprep.subr.bf16.mxu0 0
    %2786 = vmatpush1.bf16.msra.mxu0 0
    %2787 = vmatprep.subr.bf16.mxu0 0
    %2788 = vmatpush1.bf16.msra.mxu0 0
    %2789 = vmatprep.subr.bf16.mxu0 0
    %2790 = vmatpush1.bf16.msra.mxu0 0
    %2791 = vmatprep.subr.bf16.mxu0 0
    %2792 = vmatpush1.bf16.msra.mxu0 0
    %2793 = vmatprep.subr.bf16.mxu0 0
    %2794 = vmatpush1.bf16.msra.mxu0 0
    %2795 = vmatprep.subr.bf16.mxu0 0
    %2796 = vmatpush1.bf16.msra.mxu0 0
    %2797 = vmatprep.subr.bf16.mxu0 0
    %2798 = vmatpush1.bf16.msra.mxu0 %v2781
    %2799 = vmatprep.subr.bf16.mxu0 0
    %2800 = vmatpush2.bf16.msra.mxu0 0
    %2801 = vmatprep.subr.bf16.mxu0 0
    %2802 = vmatpush2.bf16.msra.mxu0 0
    %2803 = vmatprep.subr.bf16.mxu0 0
    %2804 = vmatpush2.bf16.msra.mxu0 0
    %2805 = vmatprep.subr.bf16.mxu0 0
    %2806 = vmatpush2.bf16.msra.mxu0 0
    %2807 = vmatprep.subr.bf16.mxu0 0
    %2808 = vmatpush2.bf16.msra.mxu0 0
    %2809 = vmatprep.subr.bf16.mxu0 0
    %2810 = vmatpush2.bf16.msra.mxu0 0
    %2811 = vmatprep.subr.bf16.mxu0 0
    %2812 = vmatpush2.bf16.msra.mxu0 0
    %2813 = vmatprep.subr.bf16.mxu0 0
    %2814 = vmatpush2.bf16.msra.mxu0 0
    %2815 = vmatprep.mubr.bf16.mxu0 0
    %2816 = vmatmul.mubr.bf16.gmra.mxu0 %v2727
    %v2817 = vpop.f32.mrf.mxu0
    %v2818 = vadd.f32 0.0, %v2817
    %v2819 = vpop.f32.mrf.mxu0
    %v2820 = vpop.f32.mrf.mxu0
    %v2821 = vadd.f32 0.0, %v2820
    %v2822 = vpop.f32.mrf.mxu0
    %2823 = vmatprep.mubr.bf16.mxu0 0
    %2824 = vmatmul.mubr.bf16.gmra.mxu0 %v2730
    %v2825 = vpop.f32.mrf.mxu0
    %v2826 = vadd.f32 0.0, %v2825
    %v2827 = vpop.f32.mrf.mxu0
    %v2828 = vpop.f32.mrf.mxu0
    %v2829 = vadd.f32 0.0, %v2828
    %v2830 = vpop.f32.mrf.mxu0
    %2831 = vmatprep.mubr.bf16.mxu0 0
    %2832 = vmatmul.mubr.bf16.gmra.mxu0 %v2733
    %v2833 = vpop.f32.mrf.mxu0
    %v2834 = vadd.f32 0.0, %v2833
    %v2835 = vpop.f32.mrf.mxu0
    %v2836 = vpop.f32.mrf.mxu0
    %v2837 = vadd.f32 0.0, %v2836
    %v2838 = vpop.f32.mrf.mxu0
    %2839 = vmatprep.mubr.bf16.mxu0 0
    %2840 = vmatmul.mubr.bf16.gmra.mxu0 %v2736
    %v2841 = vpop.f32.mrf.mxu0
    %v2842 = vadd.f32 0.0, %v2841
    %v2843 = vpop.f32.mrf.mxu0
    %v2844 = vpop.f32.mrf.mxu0
    %v2845 = vadd.f32 0.0, %v2844
    %v2846 = vpop.f32.mrf.mxu0
    %2847 = vmatprep.mubr.bf16.mxu0 0
    %2848 = vmatmul.mubr.bf16.gmra.mxu0 %v2739
    %v2849 = vpop.f32.mrf.mxu0
    %v2850 = vadd.f32 0.0, %v2849
    %v2851 = vpop.f32.mrf.mxu0
    %v2852 = vpop.f32.mrf.mxu0
    %v2853 = vadd.f32 0.0, %v2852
    %v2854 = vpop.f32.mrf.mxu0
    %2855 = vmatprep.mubr.bf16.mxu0 0
    %2856 = vmatmul.mubr.bf16.gmra.mxu0 %v2742
    %v2857 = vpop.f32.mrf.mxu0
    %v2858 = vadd.f32 0.0, %v2857
    %v2859 = vpop.f32.mrf.mxu0
    %v2860 = vpop.f32.mrf.mxu0
    %v2861 = vadd.f32 0.0, %v2860
    %v2862 = vpop.f32.mrf.mxu0
    %2863 = vmatprep.mubr.bf16.mxu0 0
    %2864 = vmatmul.mubr.bf16.gmra.mxu0 %v2745
    %v2865 = vpop.f32.mrf.mxu0
    %v2866 = vadd.f32 0.0, %v2865
    %v2867 = vpop.f32.mrf.mxu0
    %v2868 = vpop.f32.mrf.mxu0
    %v2869 = vadd.f32 0.0, %v2868
    %v2870 = vpop.f32.mrf.mxu0
    %2871 = vmatprep.mubr.bf16.mxu0 0
    %2872 = vmatmul.mubr.bf16.gmra.mxu0 %v2748
    %v2873 = vpop.f32.mrf.mxu0
    %v2874 = vadd.f32 0.0, %v2873
    %v2875 = vpop.f32.mrf.mxu0
    %v2876 = vpop.f32.mrf.mxu0
    %v2877 = vadd.f32 0.0, %v2876
    %v2878 = vpop.f32.mrf.mxu0
    %2879 = vmatprep.mubr.bf16.mxu0 0
    %2880 = vmatmul.mubr.bf16.gmra.mxu0 %v2751
    %v2881 = vpop.f32.mrf.mxu0
    %v2882 = vadd.f32 0.0, %v2881
    %v2883 = vpop.f32.mrf.mxu0
    %v2884 = vpop.f32.mrf.mxu0
    %v2885 = vadd.f32 0.0, %v2884
    %v2886 = vpop.f32.mrf.mxu0
    %2887 = vmatprep.mubr.bf16.mxu0 0
    %2888 = vmatmul.mubr.bf16.gmra.mxu0 %v2754
    %v2889 = vpop.f32.mrf.mxu0
    %v2890 = vadd.f32 0.0, %v2889
    %v2891 = vpop.f32.mrf.mxu0
    %v2892 = vpop.f32.mrf.mxu0
    %v2893 = vadd.f32 0.0, %v2892
    %v2894 = vpop.f32.mrf.mxu0
    %2895 = vmatprep.mubr.bf16.mxu0 0
    %2896 = vmatmul.mubr.bf16.gmra.mxu0 %v2757
    %v2897 = vpop.f32.mrf.mxu0
    %v2898 = vadd.f32 0.0, %v2897
    %v2899 = vpop.f32.mrf.mxu0
    %v2900 = vpop.f32.mrf.mxu0
    %v2901 = vadd.f32 0.0, %v2900
    %v2902 = vpop.f32.mrf.mxu0
    %2903 = vmatprep.mubr.bf16.mxu0 0
    %2904 = vmatmul.mubr.bf16.gmra.mxu0 %v2760
    %v2905 = vpop.f32.mrf.mxu0
    %v2906 = vadd.f32 0.0, %v2905
    %v2907 = vpop.f32.mrf.mxu0
    %v2908 = vpop.f32.mrf.mxu0
    %v2909 = vadd.f32 0.0, %v2908
    %v2910 = vpop.f32.mrf.mxu0
    %2911 = vmatprep.mubr.bf16.mxu0 0
    %2912 = vmatmul.mubr.bf16.gmra.mxu0 %v2763
    %v2913 = vpop.f32.mrf.mxu0
    %v2914 = vadd.f32 0.0, %v2913
    %v2915 = vpop.f32.mrf.mxu0
    %v2916 = vpop.f32.mrf.mxu0
    %v2917 = vadd.f32 0.0, %v2916
    %v2918 = vpop.f32.mrf.mxu0
    %2919 = vmatprep.mubr.bf16.mxu0 0
    %2920 = vmatmul.mubr.bf16.gmra.mxu0 %v2766
    %v2921 = vpop.f32.mrf.mxu0
    %v2922 = vadd.f32 0.0, %v2921
    %v2923 = vpop.f32.mrf.mxu0
    %v2924 = vpop.f32.mrf.mxu0
    %v2925 = vadd.f32 0.0, %v2924
    %v2926 = vpop.f32.mrf.mxu0
    %2927 = vmatprep.mubr.bf16.mxu0 0
    %2928 = vmatmul.mubr.bf16.gmra.mxu0 %v2769
    %v2929 = vpop.f32.mrf.mxu0
    %v2930 = vadd.f32 0.0, %v2929
    %v2931 = vpop.f32.mrf.mxu0
    %v2932 = vpop.f32.mrf.mxu0
    %v2933 = vadd.f32 0.0, %v2932
    %v2934 = vpop.f32.mrf.mxu0
    %2935 = vmatprep.mubr.bf16.mxu0 0
    %2936 = vmatmul.mubr.bf16.gmra.mxu0 %v2772
    %v2937 = vpop.f32.mrf.mxu0
    %v2938 = vadd.f32 0.0, %v2937
    %v2939 = vpop.f32.mrf.mxu0
    %v2940 = vpop.f32.mrf.mxu0
    %v2941 = vadd.f32 0.0, %v2940
    %v2942 = vpop.f32.mrf.mxu0
    %2943 = vmatprep.mubr.bf16.mxu0 0
    %2944 = vmatmul.mubr.bf16.gmra.mxu0 %v2775
    %v2945 = vpop.f32.mrf.mxu0
    %v2946 = vadd.f32 0.0, %v2945
    %v2947 = vpop.f32.mrf.mxu0
    %v2948 = vpop.f32.mrf.mxu0
    %v2949 = vadd.f32 0.0, %v2948
    %v2950 = vpop.f32.mrf.mxu0
    %2951 = vmatprep.mubr.bf16.mxu0 0
    %2952 = vmatmul.mubr.bf16.gmra.mxu0 %v2778
    %v2953 = vpop.f32.mrf.mxu0
    %v2954 = vadd.f32 0.0, %v2953
    %v2955 = vpop.f32.mrf.mxu0
    %v2956 = vpop.f32.mrf.mxu0
    %v2957 = vadd.f32 0.0, %v2956
    %v2958 = vpop.f32.mrf.mxu0
    %2959 = vdwg.mxu0
    %v2960 = vadd.f32 %v2650, %v2818
    %v2961 = vadd.f32 %v2651, %v2821
    %v2962 = vadd.f32 %v2652, %v2826
    %v2963 = vadd.f32 %v2653, %v2829
    %v2964 = vadd.f32 %v2654, %v2834
    %v2965 = vadd.f32 %v2655, %v2837
    %v2966 = vadd.f32 %v2656, %v2842
    %v2967 = vadd.f32 %v2657, %v2845
    %v2968 = vadd.f32 %v2658, %v2850
    %v2969 = vadd.f32 %v2659, %v2853
    %v2970 = vadd.f32 %v2660, %v2858
    %v2971 = vadd.f32 %v2661, %v2861
    %v2972 = vadd.f32 %v2662, %v2866
    %v2973 = vadd.f32 %v2663, %v2869
    %v2974 = vadd.f32 %v2664, %v2874
    %v2975 = vadd.f32 %v2665, %v2877
    %v2976 = vadd.f32 %v2666, %v2882
    %v2977 = vadd.f32 %v2667, %v2885
    %v2978 = vadd.f32 %v2668, %v2890
    %v2979 = vadd.f32 %v2669, %v2893
    %v2980 = vadd.f32 %v2670, %v2898
    %v2981 = vadd.f32 %v2671, %v2901
    %v2982 = vadd.f32 %v2672, %v2906
    %v2983 = vadd.f32 %v2673, %v2909
    %v2984 = vadd.f32 %v2674, %v2914
    %v2985 = vadd.f32 %v2675, %v2917
    %v2986 = vadd.f32 %v2676, %v2922
    %v2987 = vadd.f32 %v2677, %v2925
    %v2988 = vadd.f32 %v2678, %v2930
    %v2989 = vadd.f32 %v2679, %v2933
    %v2990 = vadd.f32 %v2680, %v2938
    %v2991 = vadd.f32 %v2681, %v2941
    %v2992 = vadd.f32 %v2682, %v2946
    %v2993 = vadd.f32 %v2683, %v2949
    %v2994 = vadd.f32 %v2684, %v2954
    %v2995 = vadd.f32 %v2685, %v2957
    %2996 = vst [vmem:[#allocation2] sm:$0xff] %v2960
    %2997 = vst [vmem:[#allocation2 + $0x8] sm:$0xff] %v2961
    %2998 = vst [vmem:[#allocation2 + $0x10] sm:$0xff] %v2962
    %2999 = vst [vmem:[#allocation2 + $0x18] sm:$0xff] %v2963
    %3000 = vst [vmem:[#allocation2 + $0x20] sm:$0xff] %v2964
    %3001 = vst [vmem:[#allocation2 + $0x28] sm:$0xff] %v2965
    %3002 = vst [vmem:[#allocation2 + $0x30] sm:$0xff] %v2966
    %3003 = vst [vmem:[#allocation2 + $0x38] sm:$0xff] %v2967
    %3004 = vst [vmem:[#allocation2 + $0x40] sm:$0xff] %v2968
    %3005 = vst [vmem:[#allocation2 + $0x48] sm:$0xff] %v2969
    %3006 = vst [vmem:[#allocation2 + $0x50] sm:$0xff] %v2970
    %3007 = vst [vmem:[#allocation2 + $0x58] sm:$0xff] %v2971
    %3008 = vst [vmem:[#allocation2 + $0x60] sm:$0xff] %v2972
    %3009 = vst [vmem:[#allocation2 + $0x68] sm:$0xff] %v2973
    %3010 = vst [vmem:[#allocation2 + $0x70] sm:$0xff] %v2974
    %3011 = vst [vmem:[#allocation2 + $0x78] sm:$0xff] %v2975
    %3012 = vst [vmem:[#allocation2 + $0x80] sm:$0xff] %v2976
    %3013 = vst [vmem:[#allocation2 + $0x88] sm:$0xff] %v2977
    %3014 = vst [vmem:[#allocation2 + $0x90] sm:$0xff] %v2978
    %3015 = vst [vmem:[#allocation2 + $0x98] sm:$0xff] %v2979
    %3016 = vst [vmem:[#allocation2 + $0xa0] sm:$0xff] %v2980
    %3017 = vst [vmem:[#allocation2 + $0xa8] sm:$0xff] %v2981
    %3018 = vst [vmem:[#allocation2 + $0xb0] sm:$0xff] %v2982
    %3019 = vst [vmem:[#allocation2 + $0xb8] sm:$0xff] %v2983
    %3020 = vst [vmem:[#allocation2 + $0xc0] sm:$0xff] %v2984
    %3021 = vst [vmem:[#allocation2 + $0xc8] sm:$0xff] %v2985
    %3022 = vst [vmem:[#allocation2 + $0xd0] sm:$0xff] %v2986
    %3023 = vst [vmem:[#allocation2 + $0xd8] sm:$0xff] %v2987
    %3024 = vst [vmem:[#allocation2 + $0xe0] sm:$0xff] %v2988
    %3025 = vst [vmem:[#allocation2 + $0xe8] sm:$0xff] %v2989
    %3026 = vst [vmem:[#allocation2 + $0xf0] sm:$0xff] %v2990
    %3027 = vst [vmem:[#allocation2 + $0xf8] sm:$0xff] %v2991
    %3028 = vst [vmem:[#allocation2 + $0x100] sm:$0xff] %v2992
    %3029 = vst [vmem:[#allocation2 + $0x108] sm:$0xff] %v2993
    %3030 = vst [vmem:[#allocation2 + $0x110] sm:$0xff] %v2994
    %3031 = vst [vmem:[#allocation2 + $0x118] sm:$0xff] %v2995
    %3033 = vset.pattern.permute.xlu0 0
    %3034 = vperm.xlu0 %3033, %v30
    %v3035 = vpop.permute.xlu0 %3034
    %3038 = vset.pattern.permute.xlu0 0
    %3039 = vperm.xlu0 %3038, %v31
    %v3040 = vpop.permute.xlu0 %3039
    %3043 = vset.pattern.permute.xlu0 0
    %3044 = vperm.xlu0 %3043, %v32
    %v3045 = vpop.permute.xlu0 %3044
    %3048 = vset.pattern.permute.xlu0 0
    %3049 = vperm.xlu0 %3048, %v33
    %v3050 = vpop.permute.xlu0 %3049
    %3053 = vset.pattern.permute.xlu0 0
    %3054 = vperm.xlu0 %3053, %v34
    %v3055 = vpop.permute.xlu0 %3054
    %3058 = vset.pattern.permute.xlu0 0
    %3059 = vperm.xlu0 %3058, %v35
    %v3060 = vpop.permute.xlu0 %3059
    %3063 = vset.pattern.permute.xlu0 0
    %3064 = vperm.xlu0 %3063, %v36
    %v3065 = vpop.permute.xlu0 %3064
    %3068 = vset.pattern.permute.xlu0 0
    %3069 = vperm.xlu0 %3068, %v37
    %v3070 = vpop.permute.xlu0 %3069
    %3073 = vset.pattern.permute.xlu0 0
    %3074 = vperm.xlu0 %3073, %v38
    %v3075 = vpop.permute.xlu0 %3074
    %3078 = vset.pattern.permute.xlu0 0
    %3079 = vperm.xlu0 %3078, %v39
    %v3080 = vpop.permute.xlu0 %3079
    %3083 = vset.pattern.permute.xlu0 0
    %3084 = vperm.xlu0 %3083, %v40
    %v3085 = vpop.permute.xlu0 %3084
    %3088 = vset.pattern.permute.xlu0 0
    %3089 = vperm.xlu0 %3088, %v41
    %v3090 = vpop.permute.xlu0 %3089
    %3093 = vset.pattern.permute.xlu0 0
    %3094 = vperm.xlu0 %3093, %v42
    %v3095 = vpop.permute.xlu0 %3094
    %3098 = vset.pattern.permute.xlu0 0
    %3099 = vperm.xlu0 %3098, %v43
    %v3100 = vpop.permute.xlu0 %3099
    %3103 = vset.pattern.permute.xlu0 0
    %3104 = vperm.xlu0 %3103, %v44
    %v3105 = vpop.permute.xlu0 %3104
    %3108 = vset.pattern.permute.xlu0 0
    %3109 = vperm.xlu0 %3108, %v45
    %v3110 = vpop.permute.xlu0 %3109
    %3113 = vset.pattern.permute.xlu0 0
    %3114 = vperm.xlu0 %3113, %v46
    %v3115 = vpop.permute.xlu0 %3114
    %3118 = vset.pattern.permute.xlu0 0
    %3119 = vperm.xlu0 %3118, %v47
    %v3120 = vpop.permute.xlu0 %3119
    %3123 = vset.pattern.permute.xlu0 0
    %3124 = vperm.xlu0 %3123, %v48
    %v3125 = vpop.permute.xlu0 %3124
    %3128 = vset.pattern.permute.xlu0 0
    %3129 = vperm.xlu0 %3128, %v49
    %v3130 = vpop.permute.xlu0 %3129
    %3133 = vset.pattern.permute.xlu0 0
    %3134 = vperm.xlu0 %3133, %v50
    %v3135 = vpop.permute.xlu0 %3134
    %3138 = vset.pattern.permute.xlu0 0
    %3139 = vperm.xlu0 %3138, %v51
    %v3140 = vpop.permute.xlu0 %3139
    %3143 = vset.pattern.permute.xlu0 0
    %3144 = vperm.xlu0 %3143, %v52
    %v3145 = vpop.permute.xlu0 %3144
    %3148 = vset.pattern.permute.xlu0 0
    %3149 = vperm.xlu0 %3148, %v53
    %v3150 = vpop.permute.xlu0 %3149
    %3153 = vset.pattern.permute.xlu0 0
    %3154 = vperm.xlu0 %3153, %v54
    %v3155 = vpop.permute.xlu0 %3154
    %3158 = vset.pattern.permute.xlu0 0
    %3159 = vperm.xlu0 %3158, %v55
    %v3160 = vpop.permute.xlu0 %3159
    %3163 = vset.pattern.permute.xlu0 0
    %3164 = vperm.xlu0 %3163, %v56
    %v3165 = vpop.permute.xlu0 %3164
    %3168 = vset.pattern.permute.xlu0 0
    %3169 = vperm.xlu0 %3168, %v57
    %v3170 = vpop.permute.xlu0 %3169
    %3173 = vset.pattern.permute.xlu0 0
    %3174 = vperm.xlu0 %3173, %v58
    %v3175 = vpop.permute.xlu0 %3174
    %3178 = vset.pattern.permute.xlu0 0
    %3179 = vperm.xlu0 %3178, %v59
    %v3180 = vpop.permute.xlu0 %3179
    %3183 = vset.pattern.permute.xlu0 0
    %3184 = vperm.xlu0 %3183, %v60
    %v3185 = vpop.permute.xlu0 %3184
    %3188 = vset.pattern.permute.xlu0 0
    %3189 = vperm.xlu0 %3188, %v61
    %v3190 = vpop.permute.xlu0 %3189
    %3193 = vset.pattern.permute.xlu0 0
    %3194 = vperm.xlu0 %3193, %v62
    %v3195 = vpop.permute.xlu0 %3194
    %3198 = vset.pattern.permute.xlu0 0
    %3199 = vperm.xlu0 %3198, %v63
    %v3200 = vpop.permute.xlu0 %3199
    %3203 = vset.pattern.permute.xlu0 0
    %3204 = vperm.xlu0 %3203, %v64
    %v3205 = vpop.permute.xlu0 %3204
    %3208 = vset.pattern.permute.xlu0 0
    %3209 = vperm.xlu0 %3208, %v65
    %v3210 = vpop.permute.xlu0 %3209
    %v3212 = vmul.f32 %v2960, %v3035
    %v3213 = vmul.f32 %v2961, %v3040
    %v3214 = vmul.f32 %v2962, %v3045
    %v3215 = vmul.f32 %v2963, %v3050
    %v3216 = vmul.f32 %v2964, %v3055
    %v3217 = vmul.f32 %v2965, %v3060
    %v3218 = vmul.f32 %v2966, %v3065
    %v3219 = vmul.f32 %v2967, %v3070
    %v3220 = vmul.f32 %v2968, %v3075
    %v3221 = vmul.f32 %v2969, %v3080
    %v3222 = vmul.f32 %v2970, %v3085
    %v3223 = vmul.f32 %v2971, %v3090
    %v3224 = vmul.f32 %v2972, %v3095
    %v3225 = vmul.f32 %v2973, %v3100
    %v3226 = vmul.f32 %v2974, %v3105
    %v3227 = vmul.f32 %v2975, %v3110
    %v3228 = vmul.f32 %v2976, %v3115
    %v3229 = vmul.f32 %v2977, %v3120
    %v3230 = vmul.f32 %v2978, %v3125
    %v3231 = vmul.f32 %v2979, %v3130
    %v3232 = vmul.f32 %v2980, %v3135
    %v3233 = vmul.f32 %v2981, %v3140
    %v3234 = vmul.f32 %v2982, %v3145
    %v3235 = vmul.f32 %v2983, %v3150
    %v3236 = vmul.f32 %v2984, %v3155
    %v3237 = vmul.f32 %v2985, %v3160
    %v3238 = vmul.f32 %v2986, %v3165
    %v3239 = vmul.f32 %v2987, %v3170
    %v3240 = vmul.f32 %v2988, %v3175
    %v3241 = vmul.f32 %v2989, %v3180
    %v3242 = vmul.f32 %v2990, %v3185
    %v3243 = vmul.f32 %v2991, %v3190
    %v3244 = vmul.f32 %v2992, %v3195
    %v3245 = vmul.f32 %v2993, %v3200
    %v3246 = vmul.f32 %v2994, %v3205
    %v3247 = vmul.f32 %v2995, %v3210
    %v3248 = vadd.f32 %v3212, %v3213
    %v3249 = vadd.f32 %v3248, %v3214
    %v3250 = vadd.f32 %v3249, %v3215
    %v3251 = vadd.f32 %v3250, %v3216
    %v3252 = vadd.f32 %v3251, %v3217
    %v3253 = vadd.f32 %v3252, %v3218
    %v3254 = vadd.f32 %v3253, %v3219
    %v3255 = vadd.f32 %v3254, %v3220
    %v3256 = vadd.f32 %v3255, %v3221
    %v3257 = vadd.f32 %v3256, %v3222
    %v3258 = vadd.f32 %v3257, %v3223
    %v3259 = vadd.f32 %v3258, %v3224
    %v3260 = vadd.f32 %v3259, %v3225
    %v3261 = vadd.f32 %v3260, %v3226
    %v3262 = vadd.f32 %v3261, %v3227
    %v3263 = vadd.f32 %v3262, %v3228
    %v3264 = vadd.f32 %v3263, %v3229
    %v3265 = vadd.f32 %v3264, %v3230
    %v3266 = vadd.f32 %v3265, %v3231
    %v3267 = vadd.f32 %v3266, %v3232
    %v3268 = vadd.f32 %v3267, %v3233
    %v3269 = vadd.f32 %v3268, %v3234
    %v3270 = vadd.f32 %v3269, %v3235
    %v3271 = vadd.f32 %v3270, %v3236
    %v3272 = vadd.f32 %v3271, %v3237
    %v3273 = vadd.f32 %v3272, %v3238
    %v3274 = vadd.f32 %v3273, %v3239
    %v3275 = vadd.f32 %v3274, %v3240
    %v3276 = vadd.f32 %v3275, %v3241
    %v3277 = vadd.f32 %v3276, %v3242
    %v3278 = vadd.f32 %v3277, %v3243
    %v3279 = vadd.f32 %v3278, %v3244
    %v3280 = vadd.f32 %v3279, %v3245
    %v3281 = vadd.f32 %v3280, %v3246
    %v3282 = vadd.f32 %v3281, %v3247
    %v3283 = vrot.slane %v3282, 4
    %v3284 = vadd.f32 %v3282, %v3283
    %v3285 = vrot.slane %v3284, 2
    %v3286 = vadd.f32 %v3284, %v3285
    %v3287 = vrot.slane %v3286, 1
    %v3288 = vadd.f32 %v3286, %v3287
    %v3289 = vadd.f32 %v3288, 0.0
    %v3290 = vmul.f32 %v2960, %v3212
    %v3291 = vmul.f32 %v2961, %v3213
    %v3292 = vmul.f32 %v2962, %v3214
    %v3293 = vmul.f32 %v2963, %v3215
    %v3294 = vmul.f32 %v2964, %v3216
    %v3295 = vmul.f32 %v2965, %v3217
    %v3296 = vmul.f32 %v2966, %v3218
    %v3297 = vmul.f32 %v2967, %v3219
    %v3298 = vmul.f32 %v2968, %v3220
    %v3299 = vmul.f32 %v2969, %v3221
    %v3300 = vmul.f32 %v2970, %v3222
    %v3301 = vmul.f32 %v2971, %v3223
    %v3302 = vmul.f32 %v2972, %v3224
    %v3303 = vmul.f32 %v2973, %v3225
    %v3304 = vmul.f32 %v2974, %v3226
    %v3305 = vmul.f32 %v2975, %v3227
    %v3306 = vmul.f32 %v2976, %v3228
    %v3307 = vmul.f32 %v2977, %v3229
    %v3308 = vmul.f32 %v2978, %v3230
    %v3309 = vmul.f32 %v2979, %v3231
    %v3310 = vmul.f32 %v2980, %v3232
    %v3311 = vmul.f32 %v2981, %v3233
    %v3312 = vmul.f32 %v2982, %v3234
    %v3313 = vmul.f32 %v2983, %v3235
    %v3314 = vmul.f32 %v2984, %v3236
    %v3315 = vmul.f32 %v2985, %v3237
    %v3316 = vmul.f32 %v2986, %v3238
    %v3317 = vmul.f32 %v2987, %v3239
    %v3318 = vmul.f32 %v2988, %v3240
    %v3319 = vmul.f32 %v2989, %v3241
    %v3320 = vmul.f32 %v2990, %v3242
    %v3321 = vmul.f32 %v2991, %v3243
    %v3322 = vmul.f32 %v2992, %v3244
    %v3323 = vmul.f32 %v2993, %v3245
    %v3324 = vmul.f32 %v2994, %v3246
    %v3325 = vmul.f32 %v2995, %v3247
    %v3326 = vadd.f32 %v3290, %v3291
    %v3327 = vadd.f32 %v3326, %v3292
    %v3328 = vadd.f32 %v3327, %v3293
    %v3329 = vadd.f32 %v3328, %v3294
    %v3330 = vadd.f32 %v3329, %v3295
    %v3331 = vadd.f32 %v3330, %v3296
    %v3332 = vadd.f32 %v3331, %v3297
    %v3333 = vadd.f32 %v3332, %v3298
    %v3334 = vadd.f32 %v3333, %v3299
    %v3335 = vadd.f32 %v3334, %v3300
    %v3336 = vadd.f32 %v3335, %v3301
    %v3337 = vadd.f32 %v3336, %v3302
    %v3338 = vadd.f32 %v3337, %v3303
    %v3339 = vadd.f32 %v3338, %v3304
    %v3340 = vadd.f32 %v3339, %v3305
    %v3341 = vadd.f32 %v3340, %v3306
    %v3342 = vadd.f32 %v3341, %v3307
    %v3343 = vadd.f32 %v3342, %v3308
    %v3344 = vadd.f32 %v3343, %v3309
    %v3345 = vadd.f32 %v3344, %v3310
    %v3346 = vadd.f32 %v3345, %v3311
    %v3347 = vadd.f32 %v3346, %v3312
    %v3348 = vadd.f32 %v3347, %v3313
    %v3349 = vadd.f32 %v3348, %v3314
    %v3350 = vadd.f32 %v3349, %v3315
    %v3351 = vadd.f32 %v3350, %v3316
    %v3352 = vadd.f32 %v3351, %v3317
    %v3353 = vadd.f32 %v3352, %v3318
    %v3354 = vadd.f32 %v3353, %v3319
    %v3355 = vadd.f32 %v3354, %v3320
    %v3356 = vadd.f32 %v3355, %v3321
    %v3357 = vadd.f32 %v3356, %v3322
    %v3358 = vadd.f32 %v3357, %v3323
    %v3359 = vadd.f32 %v3358, %v3324
    %v3360 = vadd.f32 %v3359, %v3325
    %v3361 = vrot.slane %v3360, 4
    %v3362 = vadd.f32 %v3360, %v3361
    %v3363 = vrot.slane %v3362, 2
    %v3364 = vadd.f32 %v3362, %v3363
    %v3365 = vrot.slane %v3364, 1
    %v3366 = vadd.f32 %v3364, %v3365
    %v3367 = vadd.f32 %v3366, 0.0
    %s3368 = scalar_lea.vmem %s0, 172
    %v3369 = vld [vmem:[%s3368] sm:$0xf]
    %v3370 = vld [vmem:[%s3368 + $0x4] sm:$0xf]
    %v3371 = vld [vmem:[%s3368 + $0x8] sm:$0xf]
    %v3372 = vld [vmem:[%s3368 + $0xc] sm:$0xf]
    %v3373 = vld [vmem:[%s3368 + $0x10] sm:$0xf]
    %v3374 = vld [vmem:[%s3368 + $0x14] sm:$0xf]
    %v3375 = vld [vmem:[%s3368 + $0x18] sm:$0xf]
    %v3376 = vld [vmem:[%s3368 + $0x1c] sm:$0xf]
    %v3377 = vld [vmem:[%s3368 + $0x20] sm:$0xf]
    %v3378 = vld [vmem:[%s3368 + $0x24] sm:$0xf]
    %v3379 = vld [vmem:[%s3368 + $0x28] sm:$0xf]
    %v3380 = vld [vmem:[%s3368 + $0x2c] sm:$0xf]
    %v3381 = vld [vmem:[%s3368 + $0x30] sm:$0xf]
    %v3382 = vld [vmem:[%s3368 + $0x34] sm:$0xf]
    %v3383 = vld [vmem:[%s3368 + $0x38] sm:$0xf]
    %v3384 = vld [vmem:[%s3368 + $0x3c] sm:$0xf]
    %v3385 = vld [vmem:[%s3368 + $0x40] sm:$0xf]
    %v3386 = vld [vmem:[%s3368 + $0x44] sm:$0xf]
    %v3387 = vld [vmem:[%s3368 + $0x48] sm:$0xf]
    %v3388 = vld [vmem:[%s3368 + $0x4c] sm:$0xf]
    %v3389 = vld [vmem:[%s3368 + $0x50] sm:$0xf]
    %v3390 = vld [vmem:[%s3368 + $0x54] sm:$0xf]
    %v3391 = vld [vmem:[%s3368 + $0x58] sm:$0xf]
    %v3392 = vld [vmem:[%s3368 + $0x5c] sm:$0xf]
    %v3393 = vld [vmem:[%s3368 + $0x60] sm:$0xf]
    %v3394 = vld [vmem:[%s3368 + $0x64] sm:$0xf]
    %v3395 = vld [vmem:[%s3368 + $0x68] sm:$0xf]
    %v3396 = vld [vmem:[%s3368 + $0x6c] sm:$0xf]
    %v3397 = vld [vmem:[%s3368 + $0x70] sm:$0xf]
    %v3398 = vld [vmem:[%s3368 + $0x74] sm:$0xf]
    %v3399 = vld [vmem:[%s3368 + $0x78] sm:$0xf]
    %v3400 = vld [vmem:[%s3368 + $0x7c] sm:$0xf]
    %v3401 = vld [vmem:[%s3368 + $0x80] sm:$0xf]
    %v3402 = vld [vmem:[%s3368 + $0x84] sm:$0xf]
    %v3403 = vld [vmem:[%s3368 + $0x88] sm:$0xf]
    %v3404 = vld [vmem:[%s3368 + $0x8c] sm:$0xf]
    %v3405 = vld [vmem:[%s3368 + $0x90] sm:$0xf]
    %v3406 = vld [vmem:[%s3368 + $0x94] sm:$0xf]
    %v3407 = vld [vmem:[%s3368 + $0x98] sm:$0xf]
    %v3408 = vld [vmem:[%s3368 + $0x9c] sm:$0xf]
    %v3409 = vld [vmem:[%s3368 + $0xa0] sm:$0xf]
    %v3410 = vld [vmem:[%s1] sm:$0x3]
    %v3447 = vunpack.c.l.b16 %v3369
    %v3448 = vunpack.c.l.b16 %v3370
    %v3449 = vunpack.c.l.b16 %v3371
    %v3450 = vunpack.c.l.b16 %v3372
    %v3451 = vunpack.c.l.b16 %v3373
    %v3452 = vunpack.c.l.b16 %v3374
    %v3453 = vunpack.c.l.b16 %v3375
    %v3454 = vunpack.c.l.b16 %v3376
    %v3455 = vunpack.c.l.b16 %v3377
    %v3456 = vunpack.c.l.b16 %v3378
    %v3457 = vunpack.c.l.b16 %v3379
    %v3458 = vunpack.c.l.b16 %v3380
    %v3459 = vunpack.c.l.b16 %v3381
    %v3460 = vunpack.c.l.b16 %v3382
    %v3461 = vunpack.c.l.b16 %v3383
    %v3462 = vunpack.c.l.b16 %v3384
    %v3463 = vunpack.c.l.b16 %v3385
    %v3464 = vunpack.c.l.b16 %v3386
    %v3465 = vunpack.c.l.b16 %v3387
    %v3466 = vunpack.c.l.b16 %v3388
    %v3467 = vunpack.c.l.b16 %v3389
    %v3468 = vunpack.c.l.b16 %v3390
    %v3469 = vunpack.c.l.b16 %v3391
    %v3470 = vunpack.c.l.b16 %v3392
    %v3471 = vunpack.c.l.b16 %v3393
    %v3472 = vunpack.c.l.b16 %v3394
    %v3473 = vunpack.c.l.b16 %v3395
    %v3474 = vunpack.c.l.b16 %v3396
    %v3475 = vunpack.c.l.b16 %v3397
    %v3476 = vunpack.c.l.b16 %v3398
    %v3477 = vunpack.c.l.b16 %v3399
    %v3478 = vunpack.c.l.b16 %v3400
    %v3479 = vunpack.c.l.b16 %v3401
    %v3480 = vunpack.c.l.b16 %v3402
    %v3481 = vunpack.c.l.b16 %v3403
    %v3482 = vunpack.c.l.b16 %v3404
    %v3483 = vpack.c.b16 %v3448, %v3447
    %v3484 = vpack.c.b16 %v3450, %v3449
    %v3485 = vpack.c.b16 %v3452, %v3451
    %v3486 = vpack.c.b16 %v3454, %v3453
    %v3487 = vpack.c.b16 %v3456, %v3455
    %v3488 = vpack.c.b16 %v3458, %v3457
    %v3489 = vpack.c.b16 %v3460, %v3459
    %v3490 = vpack.c.b16 %v3462, %v3461
    %v3491 = vpack.c.b16 %v3464, %v3463
    %v3492 = vpack.c.b16 %v3466, %v3465
    %v3493 = vpack.c.b16 %v3468, %v3467
    %v3494 = vpack.c.b16 %v3470, %v3469
    %v3495 = vpack.c.b16 %v3472, %v3471
    %v3496 = vpack.c.b16 %v3474, %v3473
    %v3497 = vpack.c.b16 %v3476, %v3475
    %v3498 = vpack.c.b16 %v3478, %v3477
    %v3499 = vpack.c.b16 %v3480, %v3479
    %v3500 = vpack.c.b16 %v3482, %v3481
    %v3502 = vsel %vm204, %v3483, 0
    %v3505 = vsel %vm204, %v3484, 0
    %v3508 = vsel %vm204, %v3485, 0
    %v3511 = vsel %vm204, %v3486, 0
    %v3514 = vsel %vm204, %v3487, 0
    %v3517 = vsel %vm204, %v3488, 0
    %v3520 = vsel %vm204, %v3489, 0
    %v3523 = vsel %vm204, %v3490, 0
    %v3526 = vsel %vm204, %v3491, 0
    %v3529 = vsel %vm204, %v3492, 0
    %v3532 = vsel %vm204, %v3493, 0
    %v3535 = vsel %vm204, %v3494, 0
    %v3538 = vsel %vm204, %v3495, 0
    %v3541 = vsel %vm204, %v3496, 0
    %v3544 = vsel %vm204, %v3497, 0
    %v3547 = vsel %vm204, %v3498, 0
    %v3550 = vsel %vm204, %v3499, 0
    %v3553 = vsel %vm204, %v3500, 0
    %v3556 = vsel %vm259, %v3410, 0
    %3558 = vmatprep.subr.bf16.mxu0 0
    %3559 = vmatpush1.bf16.msra.mxu0 0
    %3560 = vmatprep.subr.bf16.mxu0 0
    %3561 = vmatpush1.bf16.msra.mxu0 0
    %3562 = vmatprep.subr.bf16.mxu0 0
    %3563 = vmatpush1.bf16.msra.mxu0 0
    %3564 = vmatprep.subr.bf16.mxu0 0
    %3565 = vmatpush1.bf16.msra.mxu0 0
    %3566 = vmatprep.subr.bf16.mxu0 0
    %3567 = vmatpush1.bf16.msra.mxu0 0
    %3568 = vmatprep.subr.bf16.mxu0 0
    %3569 = vmatpush1.bf16.msra.mxu0 0
    %3570 = vmatprep.subr.bf16.mxu0 0
    %3571 = vmatpush1.bf16.msra.mxu0 0
    %3572 = vmatprep.subr.bf16.mxu0 0
    %3573 = vmatpush1.bf16.msra.mxu0 %v3556
    %3574 = vmatprep.subr.bf16.mxu0 0
    %3575 = vmatpush2.bf16.msra.mxu0 0
    %3576 = vmatprep.subr.bf16.mxu0 0
    %3577 = vmatpush2.bf16.msra.mxu0 0
    %3578 = vmatprep.subr.bf16.mxu0 0
    %3579 = vmatpush2.bf16.msra.mxu0 0
    %3580 = vmatprep.subr.bf16.mxu0 0
    %3581 = vmatpush2.bf16.msra.mxu0 0
    %3582 = vmatprep.subr.bf16.mxu0 0
    %3583 = vmatpush2.bf16.msra.mxu0 0
    %3584 = vmatprep.subr.bf16.mxu0 0
    %3585 = vmatpush2.bf16.msra.mxu0 0
    %3586 = vmatprep.subr.bf16.mxu0 0
    %3587 = vmatpush2.bf16.msra.mxu0 0
    %3588 = vmatprep.subr.bf16.mxu0 0
    %3589 = vmatpush2.bf16.msra.mxu0 0
    %3590 = vmatprep.mubr.bf16.mxu0 0
    %3591 = vmatmul.mubr.bf16.gmra.mxu0 %v3502
    %v3592 = vpop.f32.mrf.mxu0
    %v3593 = vadd.f32 0.0, %v3592
    %v3594 = vpop.f32.mrf.mxu0
    %v3595 = vpop.f32.mrf.mxu0
    %v3596 = vadd.f32 0.0, %v3595
    %v3597 = vpop.f32.mrf.mxu0
    %3598 = vmatprep.mubr.bf16.mxu0 0
    %3599 = vmatmul.mubr.bf16.gmra.mxu0 %v3505
    %v3600 = vpop.f32.mrf.mxu0
    %v3601 = vadd.f32 0.0, %v3600
    %v3602 = vpop.f32.mrf.mxu0
    %v3603 = vpop.f32.mrf.mxu0
    %v3604 = vadd.f32 0.0, %v3603
    %v3605 = vpop.f32.mrf.mxu0
    %3606 = vmatprep.mubr.bf16.mxu0 0
    %3607 = vmatmul.mubr.bf16.gmra.mxu0 %v3508
    %v3608 = vpop.f32.mrf.mxu0
    %v3609 = vadd.f32 0.0, %v3608
    %v3610 = vpop.f32.mrf.mxu0
    %v3611 = vpop.f32.mrf.mxu0
    %v3612 = vadd.f32 0.0, %v3611
    %v3613 = vpop.f32.mrf.mxu0
    %3614 = vmatprep.mubr.bf16.mxu0 0
    %3615 = vmatmul.mubr.bf16.gmra.mxu0 %v3511
    %v3616 = vpop.f32.mrf.mxu0
    %v3617 = vadd.f32 0.0, %v3616
    %v3618 = vpop.f32.mrf.mxu0
    %v3619 = vpop.f32.mrf.mxu0
    %v3620 = vadd.f32 0.0, %v3619
    %v3621 = vpop.f32.mrf.mxu0
    %3622 = vmatprep.mubr.bf16.mxu0 0
    %3623 = vmatmul.mubr.bf16.gmra.mxu0 %v3514
    %v3624 = vpop.f32.mrf.mxu0
    %v3625 = vadd.f32 0.0, %v3624
    %v3626 = vpop.f32.mrf.mxu0
    %v3627 = vpop.f32.mrf.mxu0
    %v3628 = vadd.f32 0.0, %v3627
    %v3629 = vpop.f32.mrf.mxu0
    %3630 = vmatprep.mubr.bf16.mxu0 0
    %3631 = vmatmul.mubr.bf16.gmra.mxu0 %v3517
    %v3632 = vpop.f32.mrf.mxu0
    %v3633 = vadd.f32 0.0, %v3632
    %v3634 = vpop.f32.mrf.mxu0
    %v3635 = vpop.f32.mrf.mxu0
    %v3636 = vadd.f32 0.0, %v3635
    %v3637 = vpop.f32.mrf.mxu0
    %3638 = vmatprep.mubr.bf16.mxu0 0
    %3639 = vmatmul.mubr.bf16.gmra.mxu0 %v3520
    %v3640 = vpop.f32.mrf.mxu0
    %v3641 = vadd.f32 0.0, %v3640
    %v3642 = vpop.f32.mrf.mxu0
    %v3643 = vpop.f32.mrf.mxu0
    %v3644 = vadd.f32 0.0, %v3643
    %v3645 = vpop.f32.mrf.mxu0
    %3646 = vmatprep.mubr.bf16.mxu0 0
    %3647 = vmatmul.mubr.bf16.gmra.mxu0 %v3523
    %v3648 = vpop.f32.mrf.mxu0
    %v3649 = vadd.f32 0.0, %v3648
    %v3650 = vpop.f32.mrf.mxu0
    %v3651 = vpop.f32.mrf.mxu0
    %v3652 = vadd.f32 0.0, %v3651
    %v3653 = vpop.f32.mrf.mxu0
    %3654 = vmatprep.mubr.bf16.mxu0 0
    %3655 = vmatmul.mubr.bf16.gmra.mxu0 %v3526
    %v3656 = vpop.f32.mrf.mxu0
    %v3657 = vadd.f32 0.0, %v3656
    %v3658 = vpop.f32.mrf.mxu0
    %v3659 = vpop.f32.mrf.mxu0
    %v3660 = vadd.f32 0.0, %v3659
    %v3661 = vpop.f32.mrf.mxu0
    %3662 = vmatprep.mubr.bf16.mxu0 0
    %3663 = vmatmul.mubr.bf16.gmra.mxu0 %v3529
    %v3664 = vpop.f32.mrf.mxu0
    %v3665 = vadd.f32 0.0, %v3664
    %v3666 = vpop.f32.mrf.mxu0
    %v3667 = vpop.f32.mrf.mxu0
    %v3668 = vadd.f32 0.0, %v3667
    %v3669 = vpop.f32.mrf.mxu0
    %3670 = vmatprep.mubr.bf16.mxu0 0
    %3671 = vmatmul.mubr.bf16.gmra.mxu0 %v3532
    %v3672 = vpop.f32.mrf.mxu0
    %v3673 = vadd.f32 0.0, %v3672
    %v3674 = vpop.f32.mrf.mxu0
    %v3675 = vpop.f32.mrf.mxu0
    %v3676 = vadd.f32 0.0, %v3675
    %v3677 = vpop.f32.mrf.mxu0
    %3678 = vmatprep.mubr.bf16.mxu0 0
    %3679 = vmatmul.mubr.bf16.gmra.mxu0 %v3535
    %v3680 = vpop.f32.mrf.mxu0
    %v3681 = vadd.f32 0.0, %v3680
    %v3682 = vpop.f32.mrf.mxu0
    %v3683 = vpop.f32.mrf.mxu0
    %v3684 = vadd.f32 0.0, %v3683
    %v3685 = vpop.f32.mrf.mxu0
    %3686 = vmatprep.mubr.bf16.mxu0 0
    %3687 = vmatmul.mubr.bf16.gmra.mxu0 %v3538
    %v3688 = vpop.f32.mrf.mxu0
    %v3689 = vadd.f32 0.0, %v3688
    %v3690 = vpop.f32.mrf.mxu0
    %v3691 = vpop.f32.mrf.mxu0
    %v3692 = vadd.f32 0.0, %v3691
    %v3693 = vpop.f32.mrf.mxu0
    %3694 = vmatprep.mubr.bf16.mxu0 0
    %3695 = vmatmul.mubr.bf16.gmra.mxu0 %v3541
    %v3696 = vpop.f32.mrf.mxu0
    %v3697 = vadd.f32 0.0, %v3696
    %v3698 = vpop.f32.mrf.mxu0
    %v3699 = vpop.f32.mrf.mxu0
    %v3700 = vadd.f32 0.0, %v3699
    %v3701 = vpop.f32.mrf.mxu0
    %3702 = vmatprep.mubr.bf16.mxu0 0
    %3703 = vmatmul.mubr.bf16.gmra.mxu0 %v3544
    %v3704 = vpop.f32.mrf.mxu0
    %v3705 = vadd.f32 0.0, %v3704
    %v3706 = vpop.f32.mrf.mxu0
    %v3707 = vpop.f32.mrf.mxu0
    %v3708 = vadd.f32 0.0, %v3707
    %v3709 = vpop.f32.mrf.mxu0
    %3710 = vmatprep.mubr.bf16.mxu0 0
    %3711 = vmatmul.mubr.bf16.gmra.mxu0 %v3547
    %v3712 = vpop.f32.mrf.mxu0
    %v3713 = vadd.f32 0.0, %v3712
    %v3714 = vpop.f32.mrf.mxu0
    %v3715 = vpop.f32.mrf.mxu0
    %v3716 = vadd.f32 0.0, %v3715
    %v3717 = vpop.f32.mrf.mxu0
    %3718 = vmatprep.mubr.bf16.mxu0 0
    %3719 = vmatmul.mubr.bf16.gmra.mxu0 %v3550
    %v3720 = vpop.f32.mrf.mxu0
    %v3721 = vadd.f32 0.0, %v3720
    %v3722 = vpop.f32.mrf.mxu0
    %v3723 = vpop.f32.mrf.mxu0
    %v3724 = vadd.f32 0.0, %v3723
    %v3725 = vpop.f32.mrf.mxu0
    %3726 = vmatprep.mubr.bf16.mxu0 0
    %3727 = vmatmul.mubr.bf16.gmra.mxu0 %v3553
    %v3728 = vpop.f32.mrf.mxu0
    %v3729 = vadd.f32 0.0, %v3728
    %v3730 = vpop.f32.mrf.mxu0
    %v3731 = vpop.f32.mrf.mxu0
    %v3732 = vadd.f32 0.0, %v3731
    %v3733 = vpop.f32.mrf.mxu0
    %3734 = vdwg.mxu0
    %v3735 = vadd.f32 %v111, %v3593
    %v3736 = vadd.f32 %v111, %v3596
    %v3737 = vadd.f32 %v111, %v3601
    %v3738 = vadd.f32 %v111, %v3604
    %v3739 = vadd.f32 %v111, %v3609
    %v3740 = vadd.f32 %v111, %v3612
    %v3741 = vadd.f32 %v111, %v3617
    %v3742 = vadd.f32 %v111, %v3620
    %v3743 = vadd.f32 %v111, %v3625
    %v3744 = vadd.f32 %v111, %v3628
    %v3745 = vadd.f32 %v111, %v3633
    %v3746 = vadd.f32 %v111, %v3636
    %v3747 = vadd.f32 %v111, %v3641
    %v3748 = vadd.f32 %v111, %v3644
    %v3749 = vadd.f32 %v111, %v3649
    %v3750 = vadd.f32 %v111, %v3652
    %v3751 = vadd.f32 %v111, %v3657
    %v3752 = vadd.f32 %v111, %v3660
    %v3753 = vadd.f32 %v111, %v3665
    %v3754 = vadd.f32 %v111, %v3668
    %v3755 = vadd.f32 %v111, %v3673
    %v3756 = vadd.f32 %v111, %v3676
    %v3757 = vadd.f32 %v111, %v3681
    %v3758 = vadd.f32 %v111, %v3684
    %v3759 = vadd.f32 %v111, %v3689
    %v3760 = vadd.f32 %v111, %v3692
    %v3761 = vadd.f32 %v111, %v3697
    %v3762 = vadd.f32 %v111, %v3700
    %v3763 = vadd.f32 %v111, %v3705
    %v3764 = vadd.f32 %v111, %v3708
    %v3765 = vadd.f32 %v111, %v3713
    %v3766 = vadd.f32 %v111, %v3716
    %v3767 = vadd.f32 %v111, %v3721
    %v3768 = vadd.f32 %v111, %v3724
    %v3769 = vadd.f32 %v111, %v3729
    %v3770 = vadd.f32 %v111, %v3732
    %v3771 = vld [vmem:[%s476] sm:$0x3]
    %v3773 = vunpack.c.l.b16 %v3405
    %v3774 = vpack.c.b16 %v3773, %v3773
    %v3775 = vshrl.u32 %v3483, 16
    %v3777 = vshll.u32 %v3483, 16
    %v3779 = vrot.slane %v3777, 1
    %v3780 = vor.u32 %v3775, %v3779
    %v3781 = vshll.u32 %v3484, 16
    %v3783 = vrot.slane %v3781, 1
    %v3784 = vsel %vm481, %v3780, %v3783
    %v3785 = vshrl.u32 %v3484, 16
    %v3787 = vor.u32 %v3785, %v3783
    %v3788 = vshll.u32 %v3485, 16
    %v3790 = vrot.slane %v3788, 1
    %v3791 = vsel %vm481, %v3787, %v3790
    %v3792 = vshrl.u32 %v3485, 16
    %v3794 = vor.u32 %v3792, %v3790
    %v3795 = vshll.u32 %v3486, 16
    %v3797 = vrot.slane %v3795, 1
    %v3798 = vsel %vm481, %v3794, %v3797
    %v3799 = vshrl.u32 %v3486, 16
    %v3801 = vor.u32 %v3799, %v3797
    %v3802 = vshll.u32 %v3487, 16
    %v3804 = vrot.slane %v3802, 1
    %v3805 = vsel %vm481, %v3801, %v3804
    %v3806 = vshrl.u32 %v3487, 16
    %v3808 = vor.u32 %v3806, %v3804
    %v3809 = vshll.u32 %v3488, 16
    %v3811 = vrot.slane %v3809, 1
    %v3812 = vsel %vm481, %v3808, %v3811
    %v3813 = vshrl.u32 %v3488, 16
    %v3815 = vor.u32 %v3813, %v3811
    %v3816 = vshll.u32 %v3489, 16
    %v3818 = vrot.slane %v3816, 1
    %v3819 = vsel %vm481, %v3815, %v3818
    %v3820 = vshrl.u32 %v3489, 16
    %v3822 = vor.u32 %v3820, %v3818
    %v3823 = vshll.u32 %v3490, 16
    %v3825 = vrot.slane %v3823, 1
    %v3826 = vsel %vm481, %v3822, %v3825
    %v3827 = vshrl.u32 %v3490, 16
    %v3829 = vor.u32 %v3827, %v3825
    %v3830 = vshll.u32 %v3491, 16
    %v3832 = vrot.slane %v3830, 1
    %v3833 = vsel %vm481, %v3829, %v3832
    %v3834 = vshrl.u32 %v3491, 16
    %v3836 = vor.u32 %v3834, %v3832
    %v3837 = vshll.u32 %v3492, 16
    %v3839 = vrot.slane %v3837, 1
    %v3840 = vsel %vm481, %v3836, %v3839
    %v3841 = vshrl.u32 %v3492, 16
    %v3843 = vor.u32 %v3841, %v3839
    %v3844 = vshll.u32 %v3493, 16
    %v3846 = vrot.slane %v3844, 1
    %v3847 = vsel %vm481, %v3843, %v3846
    %v3848 = vshrl.u32 %v3493, 16
    %v3850 = vor.u32 %v3848, %v3846
    %v3851 = vshll.u32 %v3494, 16
    %v3853 = vrot.slane %v3851, 1
    %v3854 = vsel %vm481, %v3850, %v3853
    %v3855 = vshrl.u32 %v3494, 16
    %v3857 = vor.u32 %v3855, %v3853
    %v3858 = vshll.u32 %v3495, 16
    %v3860 = vrot.slane %v3858, 1
    %v3861 = vsel %vm481, %v3857, %v3860
    %v3862 = vshrl.u32 %v3495, 16
    %v3864 = vor.u32 %v3862, %v3860
    %v3865 = vshll.u32 %v3496, 16
    %v3867 = vrot.slane %v3865, 1
    %v3868 = vsel %vm481, %v3864, %v3867
    %v3869 = vshrl.u32 %v3496, 16
    %v3871 = vor.u32 %v3869, %v3867
    %v3872 = vshll.u32 %v3497, 16
    %v3874 = vrot.slane %v3872, 1
    %v3875 = vsel %vm481, %v3871, %v3874
    %v3876 = vshrl.u32 %v3497, 16
    %v3878 = vor.u32 %v3876, %v3874
    %v3879 = vshll.u32 %v3498, 16
    %v3881 = vrot.slane %v3879, 1
    %v3882 = vsel %vm481, %v3878, %v3881
    %v3883 = vshrl.u32 %v3498, 16
    %v3885 = vor.u32 %v3883, %v3881
    %v3886 = vshll.u32 %v3499, 16
    %v3888 = vrot.slane %v3886, 1
    %v3889 = vsel %vm481, %v3885, %v3888
    %v3890 = vshrl.u32 %v3499, 16
    %v3892 = vor.u32 %v3890, %v3888
    %v3893 = vshll.u32 %v3500, 16
    %v3895 = vrot.slane %v3893, 1
    %v3896 = vsel %vm481, %v3892, %v3895
    %v3897 = vshrl.u32 %v3500, 16
    %v3899 = vor.u32 %v3897, %v3895
    %v3901 = vshll.u32 %v3774, 16
    %v3903 = vrot.slane %v3901, 1
    %v3904 = vsel %vm481, %v3899, %v3903
    %v3906 = vsel %vm204, %v3784, 0
    %v3909 = vsel %vm204, %v3791, 0
    %v3912 = vsel %vm204, %v3798, 0
    %v3915 = vsel %vm204, %v3805, 0
    %v3918 = vsel %vm204, %v3812, 0
    %v3921 = vsel %vm204, %v3819, 0
    %v3924 = vsel %vm204, %v3826, 0
    %v3927 = vsel %vm204, %v3833, 0
    %v3930 = vsel %vm204, %v3840, 0
    %v3933 = vsel %vm204, %v3847, 0
    %v3936 = vsel %vm204, %v3854, 0
    %v3939 = vsel %vm204, %v3861, 0
    %v3942 = vsel %vm204, %v3868, 0
    %v3945 = vsel %vm204, %v3875, 0
    %v3948 = vsel %vm204, %v3882, 0
    %v3951 = vsel %vm204, %v3889, 0
    %v3954 = vsel %vm204, %v3896, 0
    %v3957 = vsel %vm204, %v3904, 0
    %v3960 = vsel %vm259, %v3771, 0
    %3962 = vmatprep.subr.bf16.mxu0 0
    %3963 = vmatpush1.bf16.msra.mxu0 0
    %3964 = vmatprep.subr.bf16.mxu0 0
    %3965 = vmatpush1.bf16.msra.mxu0 0
    %3966 = vmatprep.subr.bf16.mxu0 0
    %3967 = vmatpush1.bf16.msra.mxu0 0
    %3968 = vmatprep.subr.bf16.mxu0 0
    %3969 = vmatpush1.bf16.msra.mxu0 0
    %3970 = vmatprep.subr.bf16.mxu0 0
    %3971 = vmatpush1.bf16.msra.mxu0 0
    %3972 = vmatprep.subr.bf16.mxu0 0
    %3973 = vmatpush1.bf16.msra.mxu0 0
    %3974 = vmatprep.subr.bf16.mxu0 0
    %3975 = vmatpush1.bf16.msra.mxu0 0
    %3976 = vmatprep.subr.bf16.mxu0 0
    %3977 = vmatpush1.bf16.msra.mxu0 %v3960
    %3978 = vmatprep.subr.bf16.mxu0 0
    %3979 = vmatpush2.bf16.msra.mxu0 0
    %3980 = vmatprep.subr.bf16.mxu0 0
    %3981 = vmatpush2.bf16.msra.mxu0 0
    %3982 = vmatprep.subr.bf16.mxu0 0
    %3983 = vmatpush2.bf16.msra.mxu0 0
    %3984 = vmatprep.subr.bf16.mxu0 0
    %3985 = vmatpush2.bf16.msra.mxu0 0
    %3986 = vmatprep.subr.bf16.mxu0 0
    %3987 = vmatpush2.bf16.msra.mxu0 0
    %3988 = vmatprep.subr.bf16.mxu0 0
    %3989 = vmatpush2.bf16.msra.mxu0 0
    %3990 = vmatprep.subr.bf16.mxu0 0
    %3991 = vmatpush2.bf16.msra.mxu0 0
    %3992 = vmatprep.subr.bf16.mxu0 0
    %3993 = vmatpush2.bf16.msra.mxu0 0
    %3994 = vmatprep.mubr.bf16.mxu0 0
    %3995 = vmatmul.mubr.bf16.gmra.mxu0 %v3906
    %v3996 = vpop.f32.mrf.mxu0
    %v3997 = vadd.f32 0.0, %v3996
    %v3998 = vpop.f32.mrf.mxu0
    %v3999 = vpop.f32.mrf.mxu0
    %v4000 = vadd.f32 0.0, %v3999
    %v4001 = vpop.f32.mrf.mxu0
    %4002 = vmatprep.mubr.bf16.mxu0 0
    %4003 = vmatmul.mubr.bf16.gmra.mxu0 %v3909
    %v4004 = vpop.f32.mrf.mxu0
    %v4005 = vadd.f32 0.0, %v4004
    %v4006 = vpop.f32.mrf.mxu0
    %v4007 = vpop.f32.mrf.mxu0
    %v4008 = vadd.f32 0.0, %v4007
    %v4009 = vpop.f32.mrf.mxu0
    %4010 = vmatprep.mubr.bf16.mxu0 0
    %4011 = vmatmul.mubr.bf16.gmra.mxu0 %v3912
    %v4012 = vpop.f32.mrf.mxu0
    %v4013 = vadd.f32 0.0, %v4012
    %v4014 = vpop.f32.mrf.mxu0
    %v4015 = vpop.f32.mrf.mxu0
    %v4016 = vadd.f32 0.0, %v4015
    %v4017 = vpop.f32.mrf.mxu0
    %4018 = vmatprep.mubr.bf16.mxu0 0
    %4019 = vmatmul.mubr.bf16.gmra.mxu0 %v3915
    %v4020 = vpop.f32.mrf.mxu0
    %v4021 = vadd.f32 0.0, %v4020
    %v4022 = vpop.f32.mrf.mxu0
    %v4023 = vpop.f32.mrf.mxu0
    %v4024 = vadd.f32 0.0, %v4023
    %v4025 = vpop.f32.mrf.mxu0
    %4026 = vmatprep.mubr.bf16.mxu0 0
    %4027 = vmatmul.mubr.bf16.gmra.mxu0 %v3918
    %v4028 = vpop.f32.mrf.mxu0
    %v4029 = vadd.f32 0.0, %v4028
    %v4030 = vpop.f32.mrf.mxu0
    %v4031 = vpop.f32.mrf.mxu0
    %v4032 = vadd.f32 0.0, %v4031
    %v4033 = vpop.f32.mrf.mxu0
    %4034 = vmatprep.mubr.bf16.mxu0 0
    %4035 = vmatmul.mubr.bf16.gmra.mxu0 %v3921
    %v4036 = vpop.f32.mrf.mxu0
    %v4037 = vadd.f32 0.0, %v4036
    %v4038 = vpop.f32.mrf.mxu0
    %v4039 = vpop.f32.mrf.mxu0
    %v4040 = vadd.f32 0.0, %v4039
    %v4041 = vpop.f32.mrf.mxu0
    %4042 = vmatprep.mubr.bf16.mxu0 0
    %4043 = vmatmul.mubr.bf16.gmra.mxu0 %v3924
    %v4044 = vpop.f32.mrf.mxu0
    %v4045 = vadd.f32 0.0, %v4044
    %v4046 = vpop.f32.mrf.mxu0
    %v4047 = vpop.f32.mrf.mxu0
    %v4048 = vadd.f32 0.0, %v4047
    %v4049 = vpop.f32.mrf.mxu0
    %4050 = vmatprep.mubr.bf16.mxu0 0
    %4051 = vmatmul.mubr.bf16.gmra.mxu0 %v3927
    %v4052 = vpop.f32.mrf.mxu0
    %v4053 = vadd.f32 0.0, %v4052
    %v4054 = vpop.f32.mrf.mxu0
    %v4055 = vpop.f32.mrf.mxu0
    %v4056 = vadd.f32 0.0, %v4055
    %v4057 = vpop.f32.mrf.mxu0
    %4058 = vmatprep.mubr.bf16.mxu0 0
    %4059 = vmatmul.mubr.bf16.gmra.mxu0 %v3930
    %v4060 = vpop.f32.mrf.mxu0
    %v4061 = vadd.f32 0.0, %v4060
    %v4062 = vpop.f32.mrf.mxu0
    %v4063 = vpop.f32.mrf.mxu0
    %v4064 = vadd.f32 0.0, %v4063
    %v4065 = vpop.f32.mrf.mxu0
    %4066 = vmatprep.mubr.bf16.mxu0 0
    %4067 = vmatmul.mubr.bf16.gmra.mxu0 %v3933
    %v4068 = vpop.f32.mrf.mxu0
    %v4069 = vadd.f32 0.0, %v4068
    %v4070 = vpop.f32.mrf.mxu0
    %v4071 = vpop.f32.mrf.mxu0
    %v4072 = vadd.f32 0.0, %v4071
    %v4073 = vpop.f32.mrf.mxu0
    %4074 = vmatprep.mubr.bf16.mxu0 0
    %4075 = vmatmul.mubr.bf16.gmra.mxu0 %v3936
    %v4076 = vpop.f32.mrf.mxu0
    %v4077 = vadd.f32 0.0, %v4076
    %v4078 = vpop.f32.mrf.mxu0
    %v4079 = vpop.f32.mrf.mxu0
    %v4080 = vadd.f32 0.0, %v4079
    %v4081 = vpop.f32.mrf.mxu0
    %4082 = vmatprep.mubr.bf16.mxu0 0
    %4083 = vmatmul.mubr.bf16.gmra.mxu0 %v3939
    %v4084 = vpop.f32.mrf.mxu0
    %v4085 = vadd.f32 0.0, %v4084
    %v4086 = vpop.f32.mrf.mxu0
    %v4087 = vpop.f32.mrf.mxu0
    %v4088 = vadd.f32 0.0, %v4087
    %v4089 = vpop.f32.mrf.mxu0
    %4090 = vmatprep.mubr.bf16.mxu0 0
    %4091 = vmatmul.mubr.bf16.gmra.mxu0 %v3942
    %v4092 = vpop.f32.mrf.mxu0
    %v4093 = vadd.f32 0.0, %v4092
    %v4094 = vpop.f32.mrf.mxu0
    %v4095 = vpop.f32.mrf.mxu0
    %v4096 = vadd.f32 0.0, %v4095
    %v4097 = vpop.f32.mrf.mxu0
    %4098 = vmatprep.mubr.bf16.mxu0 0
    %4099 = vmatmul.mubr.bf16.gmra.mxu0 %v3945
    %v4100 = vpop.f32.mrf.mxu0
    %v4101 = vadd.f32 0.0, %v4100
    %v4102 = vpop.f32.mrf.mxu0
    %v4103 = vpop.f32.mrf.mxu0
    %v4104 = vadd.f32 0.0, %v4103
    %v4105 = vpop.f32.mrf.mxu0
    %4106 = vmatprep.mubr.bf16.mxu0 0
    %4107 = vmatmul.mubr.bf16.gmra.mxu0 %v3948
    %v4108 = vpop.f32.mrf.mxu0
    %v4109 = vadd.f32 0.0, %v4108
    %v4110 = vpop.f32.mrf.mxu0
    %v4111 = vpop.f32.mrf.mxu0
    %v4112 = vadd.f32 0.0, %v4111
    %v4113 = vpop.f32.mrf.mxu0
    %4114 = vmatprep.mubr.bf16.mxu0 0
    %4115 = vmatmul.mubr.bf16.gmra.mxu0 %v3951
    %v4116 = vpop.f32.mrf.mxu0
    %v4117 = vadd.f32 0.0, %v4116
    %v4118 = vpop.f32.mrf.mxu0
    %v4119 = vpop.f32.mrf.mxu0
    %v4120 = vadd.f32 0.0, %v4119
    %v4121 = vpop.f32.mrf.mxu0
    %4122 = vmatprep.mubr.bf16.mxu0 0
    %4123 = vmatmul.mubr.bf16.gmra.mxu0 %v3954
    %v4124 = vpop.f32.mrf.mxu0
    %v4125 = vadd.f32 0.0, %v4124
    %v4126 = vpop.f32.mrf.mxu0
    %v4127 = vpop.f32.mrf.mxu0
    %v4128 = vadd.f32 0.0, %v4127
    %v4129 = vpop.f32.mrf.mxu0
    %4130 = vmatprep.mubr.bf16.mxu0 0
    %4131 = vmatmul.mubr.bf16.gmra.mxu0 %v3957
    %v4132 = vpop.f32.mrf.mxu0
    %v4133 = vadd.f32 0.0, %v4132
    %v4134 = vpop.f32.mrf.mxu0
    %v4135 = vpop.f32.mrf.mxu0
    %v4136 = vadd.f32 0.0, %v4135
    %v4137 = vpop.f32.mrf.mxu0
    %4138 = vdwg.mxu0
    %v4139 = vadd.f32 %v3735, %v3997
    %v4140 = vadd.f32 %v3736, %v4000
    %v4141 = vadd.f32 %v3737, %v4005
    %v4142 = vadd.f32 %v3738, %v4008
    %v4143 = vadd.f32 %v3739, %v4013
    %v4144 = vadd.f32 %v3740, %v4016
    %v4145 = vadd.f32 %v3741, %v4021
    %v4146 = vadd.f32 %v3742, %v4024
    %v4147 = vadd.f32 %v3743, %v4029
    %v4148 = vadd.f32 %v3744, %v4032
    %v4149 = vadd.f32 %v3745, %v4037
    %v4150 = vadd.f32 %v3746, %v4040
    %v4151 = vadd.f32 %v3747, %v4045
    %v4152 = vadd.f32 %v3748, %v4048
    %v4153 = vadd.f32 %v3749, %v4053
    %v4154 = vadd.f32 %v3750, %v4056
    %v4155 = vadd.f32 %v3751, %v4061
    %v4156 = vadd.f32 %v3752, %v4064
    %v4157 = vadd.f32 %v3753, %v4069
    %v4158 = vadd.f32 %v3754, %v4072
    %v4159 = vadd.f32 %v3755, %v4077
    %v4160 = vadd.f32 %v3756, %v4080
    %v4161 = vadd.f32 %v3757, %v4085
    %v4162 = vadd.f32 %v3758, %v4088
    %v4163 = vadd.f32 %v3759, %v4093
    %v4164 = vadd.f32 %v3760, %v4096
    %v4165 = vadd.f32 %v3761, %v4101
    %v4166 = vadd.f32 %v3762, %v4104
    %v4167 = vadd.f32 %v3763, %v4109
    %v4168 = vadd.f32 %v3764, %v4112
    %v4169 = vadd.f32 %v3765, %v4117
    %v4170 = vadd.f32 %v3766, %v4120
    %v4171 = vadd.f32 %v3767, %v4125
    %v4172 = vadd.f32 %v3768, %v4128
    %v4173 = vadd.f32 %v3769, %v4133
    %v4174 = vadd.f32 %v3770, %v4136
    %v4175 = vld [vmem:[%s882] sm:$0x3]
    %v4176 = vrot.slane %v3483, 1
    %v4177 = vrot.slane %v3484, 1
    %v4178 = vsel %vm884, %v4176, %v4177
    %v4179 = vrot.slane %v3485, 1
    %v4180 = vsel %vm884, %v4177, %v4179
    %v4181 = vrot.slane %v3486, 1
    %v4182 = vsel %vm884, %v4179, %v4181
    %v4183 = vrot.slane %v3487, 1
    %v4184 = vsel %vm884, %v4181, %v4183
    %v4185 = vrot.slane %v3488, 1
    %v4186 = vsel %vm884, %v4183, %v4185
    %v4187 = vrot.slane %v3489, 1
    %v4188 = vsel %vm884, %v4185, %v4187
    %v4189 = vrot.slane %v3490, 1
    %v4190 = vsel %vm884, %v4187, %v4189
    %v4191 = vrot.slane %v3491, 1
    %v4192 = vsel %vm884, %v4189, %v4191
    %v4193 = vrot.slane %v3492, 1
    %v4194 = vsel %vm884, %v4191, %v4193
    %v4195 = vrot.slane %v3493, 1
    %v4196 = vsel %vm884, %v4193, %v4195
    %v4197 = vrot.slane %v3494, 1
    %v4198 = vsel %vm884, %v4195, %v4197
    %v4199 = vrot.slane %v3495, 1
    %v4200 = vsel %vm884, %v4197, %v4199
    %v4201 = vrot.slane %v3496, 1
    %v4202 = vsel %vm884, %v4199, %v4201
    %v4203 = vrot.slane %v3497, 1
    %v4204 = vsel %vm884, %v4201, %v4203
    %v4205 = vrot.slane %v3498, 1
    %v4206 = vsel %vm884, %v4203, %v4205
    %v4207 = vrot.slane %v3499, 1
    %v4208 = vsel %vm884, %v4205, %v4207
    %v4209 = vrot.slane %v3500, 1
    %v4210 = vsel %vm884, %v4207, %v4209
    %v4211 = vrot.slane %v3774, 1
    %v4212 = vsel %vm884, %v4209, %v4211
    %v4214 = vsel %vm204, %v4178, 0
    %v4217 = vsel %vm204, %v4180, 0
    %v4220 = vsel %vm204, %v4182, 0
    %v4223 = vsel %vm204, %v4184, 0
    %v4226 = vsel %vm204, %v4186, 0
    %v4229 = vsel %vm204, %v4188, 0
    %v4232 = vsel %vm204, %v4190, 0
    %v4235 = vsel %vm204, %v4192, 0
    %v4238 = vsel %vm204, %v4194, 0
    %v4241 = vsel %vm204, %v4196, 0
    %v4244 = vsel %vm204, %v4198, 0
    %v4247 = vsel %vm204, %v4200, 0
    %v4250 = vsel %vm204, %v4202, 0
    %v4253 = vsel %vm204, %v4204, 0
    %v4256 = vsel %vm204, %v4206, 0
    %v4259 = vsel %vm204, %v4208, 0
    %v4262 = vsel %vm204, %v4210, 0
    %v4265 = vsel %vm204, %v4212, 0
    %v4268 = vsel %vm259, %v4175, 0
    %4270 = vmatprep.subr.bf16.mxu0 0
    %4271 = vmatpush1.bf16.msra.mxu0 0
    %4272 = vmatprep.subr.bf16.mxu0 0
    %4273 = vmatpush1.bf16.msra.mxu0 0
    %4274 = vmatprep.subr.bf16.mxu0 0
    %4275 = vmatpush1.bf16.msra.mxu0 0
    %4276 = vmatprep.subr.bf16.mxu0 0
    %4277 = vmatpush1.bf16.msra.mxu0 0
    %4278 = vmatprep.subr.bf16.mxu0 0
    %4279 = vmatpush1.bf16.msra.mxu0 0
    %4280 = vmatprep.subr.bf16.mxu0 0
    %4281 = vmatpush1.bf16.msra.mxu0 0
    %4282 = vmatprep.subr.bf16.mxu0 0
    %4283 = vmatpush1.bf16.msra.mxu0 0
    %4284 = vmatprep.subr.bf16.mxu0 0
    %4285 = vmatpush1.bf16.msra.mxu0 %v4268
    %4286 = vmatprep.subr.bf16.mxu0 0
    %4287 = vmatpush2.bf16.msra.mxu0 0
    %4288 = vmatprep.subr.bf16.mxu0 0
    %4289 = vmatpush2.bf16.msra.mxu0 0
    %4290 = vmatprep.subr.bf16.mxu0 0
    %4291 = vmatpush2.bf16.msra.mxu0 0
    %4292 = vmatprep.subr.bf16.mxu0 0
    %4293 = vmatpush2.bf16.msra.mxu0 0
    %4294 = vmatprep.subr.bf16.mxu0 0
    %4295 = vmatpush2.bf16.msra.mxu0 0
    %4296 = vmatprep.subr.bf16.mxu0 0
    %4297 = vmatpush2.bf16.msra.mxu0 0
    %4298 = vmatprep.subr.bf16.mxu0 0
    %4299 = vmatpush2.bf16.msra.mxu0 0
    %4300 = vmatprep.subr.bf16.mxu0 0
    %4301 = vmatpush2.bf16.msra.mxu0 0
    %4302 = vmatprep.mubr.bf16.mxu0 0
    %4303 = vmatmul.mubr.bf16.gmra.mxu0 %v4214
    %v4304 = vpop.f32.mrf.mxu0
    %v4305 = vadd.f32 0.0, %v4304
    %v4306 = vpop.f32.mrf.mxu0
    %v4307 = vpop.f32.mrf.mxu0
    %v4308 = vadd.f32 0.0, %v4307
    %v4309 = vpop.f32.mrf.mxu0
    %4310 = vmatprep.mubr.bf16.mxu0 0
    %4311 = vmatmul.mubr.bf16.gmra.mxu0 %v4217
    %v4312 = vpop.f32.mrf.mxu0
    %v4313 = vadd.f32 0.0, %v4312
    %v4314 = vpop.f32.mrf.mxu0
    %v4315 = vpop.f32.mrf.mxu0
    %v4316 = vadd.f32 0.0, %v4315
    %v4317 = vpop.f32.mrf.mxu0
    %4318 = vmatprep.mubr.bf16.mxu0 0
    %4319 = vmatmul.mubr.bf16.gmra.mxu0 %v4220
    %v4320 = vpop.f32.mrf.mxu0
    %v4321 = vadd.f32 0.0, %v4320
    %v4322 = vpop.f32.mrf.mxu0
    %v4323 = vpop.f32.mrf.mxu0
    %v4324 = vadd.f32 0.0, %v4323
    %v4325 = vpop.f32.mrf.mxu0
    %4326 = vmatprep.mubr.bf16.mxu0 0
    %4327 = vmatmul.mubr.bf16.gmra.mxu0 %v4223
    %v4328 = vpop.f32.mrf.mxu0
    %v4329 = vadd.f32 0.0, %v4328
    %v4330 = vpop.f32.mrf.mxu0
    %v4331 = vpop.f32.mrf.mxu0
    %v4332 = vadd.f32 0.0, %v4331
    %v4333 = vpop.f32.mrf.mxu0
    %4334 = vmatprep.mubr.bf16.mxu0 0
    %4335 = vmatmul.mubr.bf16.gmra.mxu0 %v4226
    %v4336 = vpop.f32.mrf.mxu0
    %v4337 = vadd.f32 0.0, %v4336
    %v4338 = vpop.f32.mrf.mxu0
    %v4339 = vpop.f32.mrf.mxu0
    %v4340 = vadd.f32 0.0, %v4339
    %v4341 = vpop.f32.mrf.mxu0
    %4342 = vmatprep.mubr.bf16.mxu0 0
    %4343 = vmatmul.mubr.bf16.gmra.mxu0 %v4229
    %v4344 = vpop.f32.mrf.mxu0
    %v4345 = vadd.f32 0.0, %v4344
    %v4346 = vpop.f32.mrf.mxu0
    %v4347 = vpop.f32.mrf.mxu0
    %v4348 = vadd.f32 0.0, %v4347
    %v4349 = vpop.f32.mrf.mxu0
    %4350 = vmatprep.mubr.bf16.mxu0 0
    %4351 = vmatmul.mubr.bf16.gmra.mxu0 %v4232
    %v4352 = vpop.f32.mrf.mxu0
    %v4353 = vadd.f32 0.0, %v4352
    %v4354 = vpop.f32.mrf.mxu0
    %v4355 = vpop.f32.mrf.mxu0
    %v4356 = vadd.f32 0.0, %v4355
    %v4357 = vpop.f32.mrf.mxu0
    %4358 = vmatprep.mubr.bf16.mxu0 0
    %4359 = vmatmul.mubr.bf16.gmra.mxu0 %v4235
    %v4360 = vpop.f32.mrf.mxu0
    %v4361 = vadd.f32 0.0, %v4360
    %v4362 = vpop.f32.mrf.mxu0
    %v4363 = vpop.f32.mrf.mxu0
    %v4364 = vadd.f32 0.0, %v4363
    %v4365 = vpop.f32.mrf.mxu0
    %4366 = vmatprep.mubr.bf16.mxu0 0
    %4367 = vmatmul.mubr.bf16.gmra.mxu0 %v4238
    %v4368 = vpop.f32.mrf.mxu0
    %v4369 = vadd.f32 0.0, %v4368
    %v4370 = vpop.f32.mrf.mxu0
    %v4371 = vpop.f32.mrf.mxu0
    %v4372 = vadd.f32 0.0, %v4371
    %v4373 = vpop.f32.mrf.mxu0
    %4374 = vmatprep.mubr.bf16.mxu0 0
    %4375 = vmatmul.mubr.bf16.gmra.mxu0 %v4241
    %v4376 = vpop.f32.mrf.mxu0
    %v4377 = vadd.f32 0.0, %v4376
    %v4378 = vpop.f32.mrf.mxu0
    %v4379 = vpop.f32.mrf.mxu0
    %v4380 = vadd.f32 0.0, %v4379
    %v4381 = vpop.f32.mrf.mxu0
    %4382 = vmatprep.mubr.bf16.mxu0 0
    %4383 = vmatmul.mubr.bf16.gmra.mxu0 %v4244
    %v4384 = vpop.f32.mrf.mxu0
    %v4385 = vadd.f32 0.0, %v4384
    %v4386 = vpop.f32.mrf.mxu0
    %v4387 = vpop.f32.mrf.mxu0
    %v4388 = vadd.f32 0.0, %v4387
    %v4389 = vpop.f32.mrf.mxu0
    %4390 = vmatprep.mubr.bf16.mxu0 0
    %4391 = vmatmul.mubr.bf16.gmra.mxu0 %v4247
    %v4392 = vpop.f32.mrf.mxu0
    %v4393 = vadd.f32 0.0, %v4392
    %v4394 = vpop.f32.mrf.mxu0
    %v4395 = vpop.f32.mrf.mxu0
    %v4396 = vadd.f32 0.0, %v4395
    %v4397 = vpop.f32.mrf.mxu0
    %4398 = vmatprep.mubr.bf16.mxu0 0
    %4399 = vmatmul.mubr.bf16.gmra.mxu0 %v4250
    %v4400 = vpop.f32.mrf.mxu0
    %v4401 = vadd.f32 0.0, %v4400
    %v4402 = vpop.f32.mrf.mxu0
    %v4403 = vpop.f32.mrf.mxu0
    %v4404 = vadd.f32 0.0, %v4403
    %v4405 = vpop.f32.mrf.mxu0
    %4406 = vmatprep.mubr.bf16.mxu0 0
    %4407 = vmatmul.mubr.bf16.gmra.mxu0 %v4253
    %v4408 = vpop.f32.mrf.mxu0
    %v4409 = vadd.f32 0.0, %v4408
    %v4410 = vpop.f32.mrf.mxu0
    %v4411 = vpop.f32.mrf.mxu0
    %v4412 = vadd.f32 0.0, %v4411
    %v4413 = vpop.f32.mrf.mxu0
    %4414 = vmatprep.mubr.bf16.mxu0 0
    %4415 = vmatmul.mubr.bf16.gmra.mxu0 %v4256
    %v4416 = vpop.f32.mrf.mxu0
    %v4417 = vadd.f32 0.0, %v4416
    %v4418 = vpop.f32.mrf.mxu0
    %v4419 = vpop.f32.mrf.mxu0
    %v4420 = vadd.f32 0.0, %v4419
    %v4421 = vpop.f32.mrf.mxu0
    %4422 = vmatprep.mubr.bf16.mxu0 0
    %4423 = vmatmul.mubr.bf16.gmra.mxu0 %v4259
    %v4424 = vpop.f32.mrf.mxu0
    %v4425 = vadd.f32 0.0, %v4424
    %v4426 = vpop.f32.mrf.mxu0
    %v4427 = vpop.f32.mrf.mxu0
    %v4428 = vadd.f32 0.0, %v4427
    %v4429 = vpop.f32.mrf.mxu0
    %4430 = vmatprep.mubr.bf16.mxu0 0
    %4431 = vmatmul.mubr.bf16.gmra.mxu0 %v4262
    %v4432 = vpop.f32.mrf.mxu0
    %v4433 = vadd.f32 0.0, %v4432
    %v4434 = vpop.f32.mrf.mxu0
    %v4435 = vpop.f32.mrf.mxu0
    %v4436 = vadd.f32 0.0, %v4435
    %v4437 = vpop.f32.mrf.mxu0
    %4438 = vmatprep.mubr.bf16.mxu0 0
    %4439 = vmatmul.mubr.bf16.gmra.mxu0 %v4265
    %v4440 = vpop.f32.mrf.mxu0
    %v4441 = vadd.f32 0.0, %v4440
    %v4442 = vpop.f32.mrf.mxu0
    %v4443 = vpop.f32.mrf.mxu0
    %v4444 = vadd.f32 0.0, %v4443
    %v4445 = vpop.f32.mrf.mxu0
    %4446 = vdwg.mxu0
    %v4447 = vadd.f32 %v4139, %v4305
    %v4448 = vadd.f32 %v4140, %v4308
    %v4449 = vadd.f32 %v4141, %v4313
    %v4450 = vadd.f32 %v4142, %v4316
    %v4451 = vadd.f32 %v4143, %v4321
    %v4452 = vadd.f32 %v4144, %v4324
    %v4453 = vadd.f32 %v4145, %v4329
    %v4454 = vadd.f32 %v4146, %v4332
    %v4455 = vadd.f32 %v4147, %v4337
    %v4456 = vadd.f32 %v4148, %v4340
    %v4457 = vadd.f32 %v4149, %v4345
    %v4458 = vadd.f32 %v4150, %v4348
    %v4459 = vadd.f32 %v4151, %v4353
    %v4460 = vadd.f32 %v4152, %v4356
    %v4461 = vadd.f32 %v4153, %v4361
    %v4462 = vadd.f32 %v4154, %v4364
    %v4463 = vadd.f32 %v4155, %v4369
    %v4464 = vadd.f32 %v4156, %v4372
    %v4465 = vadd.f32 %v4157, %v4377
    %v4466 = vadd.f32 %v4158, %v4380
    %v4467 = vadd.f32 %v4159, %v4385
    %v4468 = vadd.f32 %v4160, %v4388
    %v4469 = vadd.f32 %v4161, %v4393
    %v4470 = vadd.f32 %v4162, %v4396
    %v4471 = vadd.f32 %v4163, %v4401
    %v4472 = vadd.f32 %v4164, %v4404
    %v4473 = vadd.f32 %v4165, %v4409
    %v4474 = vadd.f32 %v4166, %v4412
    %v4475 = vadd.f32 %v4167, %v4417
    %v4476 = vadd.f32 %v4168, %v4420
    %v4477 = vadd.f32 %v4169, %v4425
    %v4478 = vadd.f32 %v4170, %v4428
    %v4479 = vadd.f32 %v4171, %v4433
    %v4480 = vadd.f32 %v4172, %v4436
    %v4481 = vadd.f32 %v4173, %v4441
    %v4482 = vadd.f32 %v4174, %v4444
    %v4483 = vld [vmem:[%s1192] sm:$0x3]
    %v4486 = vunpack.c.l.b16 %v3406
    %v4487 = vunpack.c.l.b16 %v3407
    %v4488 = vpack.c.b16 %v4486, %v3773
    %v4489 = vpack.c.b16 %v4487, %v4487
    %v4490 = vrot.slane %v4488, 1
    %v4491 = vsel %vm884, %v4209, %v4490
    %v4492 = vrot.slane %v4489, 1
    %v4493 = vsel %vm884, %v4490, %v4492
    %v4495 = vsel %vm204, %v4491, 0
    %v4498 = vsel %vm204, %v4493, 0
    %v4501 = vsel %vm259, %v4483, 0
    %4503 = vmatprep.subr.bf16.mxu0 0
    %4504 = vmatpush1.bf16.msra.mxu0 0
    %4505 = vmatprep.subr.bf16.mxu0 0
    %4506 = vmatpush1.bf16.msra.mxu0 0
    %4507 = vmatprep.subr.bf16.mxu0 0
    %4508 = vmatpush1.bf16.msra.mxu0 0
    %4509 = vmatprep.subr.bf16.mxu0 0
    %4510 = vmatpush1.bf16.msra.mxu0 0
    %4511 = vmatprep.subr.bf16.mxu0 0
    %4512 = vmatpush1.bf16.msra.mxu0 0
    %4513 = vmatprep.subr.bf16.mxu0 0
    %4514 = vmatpush1.bf16.msra.mxu0 0
    %4515 = vmatprep.subr.bf16.mxu0 0
    %4516 = vmatpush1.bf16.msra.mxu0 0
    %4517 = vmatprep.subr.bf16.mxu0 0
    %4518 = vmatpush1.bf16.msra.mxu0 %v4501
    %4519 = vmatprep.subr.bf16.mxu0 0
    %4520 = vmatpush2.bf16.msra.mxu0 0
    %4521 = vmatprep.subr.bf16.mxu0 0
    %4522 = vmatpush2.bf16.msra.mxu0 0
    %4523 = vmatprep.subr.bf16.mxu0 0
    %4524 = vmatpush2.bf16.msra.mxu0 0
    %4525 = vmatprep.subr.bf16.mxu0 0
    %4526 = vmatpush2.bf16.msra.mxu0 0
    %4527 = vmatprep.subr.bf16.mxu0 0
    %4528 = vmatpush2.bf16.msra.mxu0 0
    %4529 = vmatprep.subr.bf16.mxu0 0
    %4530 = vmatpush2.bf16.msra.mxu0 0
    %4531 = vmatprep.subr.bf16.mxu0 0
    %4532 = vmatpush2.bf16.msra.mxu0 0
    %4533 = vmatprep.subr.bf16.mxu0 0
    %4534 = vmatpush2.bf16.msra.mxu0 0
    %4535 = vmatprep.mubr.bf16.mxu0 0
    %4536 = vmatmul.mubr.bf16.gmra.mxu0 %v4217
    %v4537 = vpop.f32.mrf.mxu0
    %v4538 = vadd.f32 0.0, %v4537
    %v4539 = vpop.f32.mrf.mxu0
    %v4540 = vpop.f32.mrf.mxu0
    %v4541 = vadd.f32 0.0, %v4540
    %v4542 = vpop.f32.mrf.mxu0
    %4543 = vmatprep.mubr.bf16.mxu0 0
    %4544 = vmatmul.mubr.bf16.gmra.mxu0 %v4220
    %v4545 = vpop.f32.mrf.mxu0
    %v4546 = vadd.f32 0.0, %v4545
    %v4547 = vpop.f32.mrf.mxu0
    %v4548 = vpop.f32.mrf.mxu0
    %v4549 = vadd.f32 0.0, %v4548
    %v4550 = vpop.f32.mrf.mxu0
    %4551 = vmatprep.mubr.bf16.mxu0 0
    %4552 = vmatmul.mubr.bf16.gmra.mxu0 %v4223
    %v4553 = vpop.f32.mrf.mxu0
    %v4554 = vadd.f32 0.0, %v4553
    %v4555 = vpop.f32.mrf.mxu0
    %v4556 = vpop.f32.mrf.mxu0
    %v4557 = vadd.f32 0.0, %v4556
    %v4558 = vpop.f32.mrf.mxu0
    %4559 = vmatprep.mubr.bf16.mxu0 0
    %4560 = vmatmul.mubr.bf16.gmra.mxu0 %v4226
    %v4561 = vpop.f32.mrf.mxu0
    %v4562 = vadd.f32 0.0, %v4561
    %v4563 = vpop.f32.mrf.mxu0
    %v4564 = vpop.f32.mrf.mxu0
    %v4565 = vadd.f32 0.0, %v4564
    %v4566 = vpop.f32.mrf.mxu0
    %4567 = vmatprep.mubr.bf16.mxu0 0
    %4568 = vmatmul.mubr.bf16.gmra.mxu0 %v4229
    %v4569 = vpop.f32.mrf.mxu0
    %v4570 = vadd.f32 0.0, %v4569
    %v4571 = vpop.f32.mrf.mxu0
    %v4572 = vpop.f32.mrf.mxu0
    %v4573 = vadd.f32 0.0, %v4572
    %v4574 = vpop.f32.mrf.mxu0
    %4575 = vmatprep.mubr.bf16.mxu0 0
    %4576 = vmatmul.mubr.bf16.gmra.mxu0 %v4232
    %v4577 = vpop.f32.mrf.mxu0
    %v4578 = vadd.f32 0.0, %v4577
    %v4579 = vpop.f32.mrf.mxu0
    %v4580 = vpop.f32.mrf.mxu0
    %v4581 = vadd.f32 0.0, %v4580
    %v4582 = vpop.f32.mrf.mxu0
    %4583 = vmatprep.mubr.bf16.mxu0 0
    %4584 = vmatmul.mubr.bf16.gmra.mxu0 %v4235
    %v4585 = vpop.f32.mrf.mxu0
    %v4586 = vadd.f32 0.0, %v4585
    %v4587 = vpop.f32.mrf.mxu0
    %v4588 = vpop.f32.mrf.mxu0
    %v4589 = vadd.f32 0.0, %v4588
    %v4590 = vpop.f32.mrf.mxu0
    %4591 = vmatprep.mubr.bf16.mxu0 0
    %4592 = vmatmul.mubr.bf16.gmra.mxu0 %v4238
    %v4593 = vpop.f32.mrf.mxu0
    %v4594 = vadd.f32 0.0, %v4593
    %v4595 = vpop.f32.mrf.mxu0
    %v4596 = vpop.f32.mrf.mxu0
    %v4597 = vadd.f32 0.0, %v4596
    %v4598 = vpop.f32.mrf.mxu0
    %4599 = vmatprep.mubr.bf16.mxu0 0
    %4600 = vmatmul.mubr.bf16.gmra.mxu0 %v4241
    %v4601 = vpop.f32.mrf.mxu0
    %v4602 = vadd.f32 0.0, %v4601
    %v4603 = vpop.f32.mrf.mxu0
    %v4604 = vpop.f32.mrf.mxu0
    %v4605 = vadd.f32 0.0, %v4604
    %v4606 = vpop.f32.mrf.mxu0
    %4607 = vmatprep.mubr.bf16.mxu0 0
    %4608 = vmatmul.mubr.bf16.gmra.mxu0 %v4244
    %v4609 = vpop.f32.mrf.mxu0
    %v4610 = vadd.f32 0.0, %v4609
    %v4611 = vpop.f32.mrf.mxu0
    %v4612 = vpop.f32.mrf.mxu0
    %v4613 = vadd.f32 0.0, %v4612
    %v4614 = vpop.f32.mrf.mxu0
    %4615 = vmatprep.mubr.bf16.mxu0 0
    %4616 = vmatmul.mubr.bf16.gmra.mxu0 %v4247
    %v4617 = vpop.f32.mrf.mxu0
    %v4618 = vadd.f32 0.0, %v4617
    %v4619 = vpop.f32.mrf.mxu0
    %v4620 = vpop.f32.mrf.mxu0
    %v4621 = vadd.f32 0.0, %v4620
    %v4622 = vpop.f32.mrf.mxu0
    %4623 = vmatprep.mubr.bf16.mxu0 0
    %4624 = vmatmul.mubr.bf16.gmra.mxu0 %v4250
    %v4625 = vpop.f32.mrf.mxu0
    %v4626 = vadd.f32 0.0, %v4625
    %v4627 = vpop.f32.mrf.mxu0
    %v4628 = vpop.f32.mrf.mxu0
    %v4629 = vadd.f32 0.0, %v4628
    %v4630 = vpop.f32.mrf.mxu0
    %4631 = vmatprep.mubr.bf16.mxu0 0
    %4632 = vmatmul.mubr.bf16.gmra.mxu0 %v4253
    %v4633 = vpop.f32.mrf.mxu0
    %v4634 = vadd.f32 0.0, %v4633
    %v4635 = vpop.f32.mrf.mxu0
    %v4636 = vpop.f32.mrf.mxu0
    %v4637 = vadd.f32 0.0, %v4636
    %v4638 = vpop.f32.mrf.mxu0
    %4639 = vmatprep.mubr.bf16.mxu0 0
    %4640 = vmatmul.mubr.bf16.gmra.mxu0 %v4256
    %v4641 = vpop.f32.mrf.mxu0
    %v4642 = vadd.f32 0.0, %v4641
    %v4643 = vpop.f32.mrf.mxu0
    %v4644 = vpop.f32.mrf.mxu0
    %v4645 = vadd.f32 0.0, %v4644
    %v4646 = vpop.f32.mrf.mxu0
    %4647 = vmatprep.mubr.bf16.mxu0 0
    %4648 = vmatmul.mubr.bf16.gmra.mxu0 %v4259
    %v4649 = vpop.f32.mrf.mxu0
    %v4650 = vadd.f32 0.0, %v4649
    %v4651 = vpop.f32.mrf.mxu0
    %v4652 = vpop.f32.mrf.mxu0
    %v4653 = vadd.f32 0.0, %v4652
    %v4654 = vpop.f32.mrf.mxu0
    %4655 = vmatprep.mubr.bf16.mxu0 0
    %4656 = vmatmul.mubr.bf16.gmra.mxu0 %v4262
    %v4657 = vpop.f32.mrf.mxu0
    %v4658 = vadd.f32 0.0, %v4657
    %v4659 = vpop.f32.mrf.mxu0
    %v4660 = vpop.f32.mrf.mxu0
    %v4661 = vadd.f32 0.0, %v4660
    %v4662 = vpop.f32.mrf.mxu0
    %4663 = vmatprep.mubr.bf16.mxu0 0
    %4664 = vmatmul.mubr.bf16.gmra.mxu0 %v4495
    %v4665 = vpop.f32.mrf.mxu0
    %v4666 = vadd.f32 0.0, %v4665
    %v4667 = vpop.f32.mrf.mxu0
    %v4668 = vpop.f32.mrf.mxu0
    %v4669 = vadd.f32 0.0, %v4668
    %v4670 = vpop.f32.mrf.mxu0
    %4671 = vmatprep.mubr.bf16.mxu0 0
    %4672 = vmatmul.mubr.bf16.gmra.mxu0 %v4498
    %v4673 = vpop.f32.mrf.mxu0
    %v4674 = vadd.f32 0.0, %v4673
    %v4675 = vpop.f32.mrf.mxu0
    %v4676 = vpop.f32.mrf.mxu0
    %v4677 = vadd.f32 0.0, %v4676
    %v4678 = vpop.f32.mrf.mxu0
    %4679 = vdwg.mxu0
    %v4680 = vadd.f32 %v4447, %v4538
    %v4681 = vadd.f32 %v4448, %v4541
    %v4682 = vadd.f32 %v4449, %v4546
    %v4683 = vadd.f32 %v4450, %v4549
    %v4684 = vadd.f32 %v4451, %v4554
    %v4685 = vadd.f32 %v4452, %v4557
    %v4686 = vadd.f32 %v4453, %v4562
    %v4687 = vadd.f32 %v4454, %v4565
    %v4688 = vadd.f32 %v4455, %v4570
    %v4689 = vadd.f32 %v4456, %v4573
    %v4690 = vadd.f32 %v4457, %v4578
    %v4691 = vadd.f32 %v4458, %v4581
    %v4692 = vadd.f32 %v4459, %v4586
    %v4693 = vadd.f32 %v4460, %v4589
    %v4694 = vadd.f32 %v4461, %v4594
    %v4695 = vadd.f32 %v4462, %v4597
    %v4696 = vadd.f32 %v4463, %v4602
    %v4697 = vadd.f32 %v4464, %v4605
    %v4698 = vadd.f32 %v4465, %v4610
    %v4699 = vadd.f32 %v4466, %v4613
    %v4700 = vadd.f32 %v4467, %v4618
    %v4701 = vadd.f32 %v4468, %v4621
    %v4702 = vadd.f32 %v4469, %v4626
    %v4703 = vadd.f32 %v4470, %v4629
    %v4704 = vadd.f32 %v4471, %v4634
    %v4705 = vadd.f32 %v4472, %v4637
    %v4706 = vadd.f32 %v4473, %v4642
    %v4707 = vadd.f32 %v4474, %v4645
    %v4708 = vadd.f32 %v4475, %v4650
    %v4709 = vadd.f32 %v4476, %v4653
    %v4710 = vadd.f32 %v4477, %v4658
    %v4711 = vadd.f32 %v4478, %v4661
    %v4712 = vadd.f32 %v4479, %v4666
    %v4713 = vadd.f32 %v4480, %v4669
    %v4714 = vadd.f32 %v4481, %v4674
    %v4715 = vadd.f32 %v4482, %v4677
    %v4716 = vld [vmem:[%s1426] sm:$0x3]
    %v4717 = vrot.slane %v3785, 1
    %v4718 = vrot.slane %v3781, 2
    %v4719 = vor.u32 %v4717, %v4718
    %v4720 = vrot.slane %v3792, 1
    %v4721 = vrot.slane %v3788, 2
    %v4722 = vor.u32 %v4720, %v4721
    %v4723 = vsel %vm1428, %v4719, %v4722
    %v4724 = vrot.slane %v3799, 1
    %v4725 = vrot.slane %v3795, 2
    %v4726 = vor.u32 %v4724, %v4725
    %v4727 = vsel %vm1428, %v4722, %v4726
    %v4728 = vrot.slane %v3806, 1
    %v4729 = vrot.slane %v3802, 2
    %v4730 = vor.u32 %v4728, %v4729
    %v4731 = vsel %vm1428, %v4726, %v4730
    %v4732 = vrot.slane %v3813, 1
    %v4733 = vrot.slane %v3809, 2
    %v4734 = vor.u32 %v4732, %v4733
    %v4735 = vsel %vm1428, %v4730, %v4734
    %v4736 = vrot.slane %v3820, 1
    %v4737 = vrot.slane %v3816, 2
    %v4738 = vor.u32 %v4736, %v4737
    %v4739 = vsel %vm1428, %v4734, %v4738
    %v4740 = vrot.slane %v3827, 1
    %v4741 = vrot.slane %v3823, 2
    %v4742 = vor.u32 %v4740, %v4741
    %v4743 = vsel %vm1428, %v4738, %v4742
    %v4744 = vrot.slane %v3834, 1
    %v4745 = vrot.slane %v3830, 2
    %v4746 = vor.u32 %v4744, %v4745
    %v4747 = vsel %vm1428, %v4742, %v4746
    %v4748 = vrot.slane %v3841, 1
    %v4749 = vrot.slane %v3837, 2
    %v4750 = vor.u32 %v4748, %v4749
    %v4751 = vsel %vm1428, %v4746, %v4750
    %v4752 = vrot.slane %v3848, 1
    %v4753 = vrot.slane %v3844, 2
    %v4754 = vor.u32 %v4752, %v4753
    %v4755 = vsel %vm1428, %v4750, %v4754
    %v4756 = vrot.slane %v3855, 1
    %v4757 = vrot.slane %v3851, 2
    %v4758 = vor.u32 %v4756, %v4757
    %v4759 = vsel %vm1428, %v4754, %v4758
    %v4760 = vrot.slane %v3862, 1
    %v4761 = vrot.slane %v3858, 2
    %v4762 = vor.u32 %v4760, %v4761
    %v4763 = vsel %vm1428, %v4758, %v4762
    %v4764 = vrot.slane %v3869, 1
    %v4765 = vrot.slane %v3865, 2
    %v4766 = vor.u32 %v4764, %v4765
    %v4767 = vsel %vm1428, %v4762, %v4766
    %v4768 = vrot.slane %v3876, 1
    %v4769 = vrot.slane %v3872, 2
    %v4770 = vor.u32 %v4768, %v4769
    %v4771 = vsel %vm1428, %v4766, %v4770
    %v4772 = vrot.slane %v3883, 1
    %v4773 = vrot.slane %v3879, 2
    %v4774 = vor.u32 %v4772, %v4773
    %v4775 = vsel %vm1428, %v4770, %v4774
    %v4776 = vrot.slane %v3890, 1
    %v4777 = vrot.slane %v3886, 2
    %v4778 = vor.u32 %v4776, %v4777
    %v4779 = vsel %vm1428, %v4774, %v4778
    %v4780 = vrot.slane %v3897, 1
    %v4781 = vrot.slane %v3893, 2
    %v4782 = vor.u32 %v4780, %v4781
    %v4783 = vsel %vm1428, %v4778, %v4782
    %v4785 = vshrl.u32 %v4488, 16
    %v4787 = vrot.slane %v4785, 1
    %v4788 = vshll.u32 %v4488, 16
    %v4790 = vrot.slane %v4788, 2
    %v4791 = vor.u32 %v4787, %v4790
    %v4792 = vsel %vm1428, %v4782, %v4791
    %v4794 = vshrl.u32 %v4489, 16
    %v4796 = vrot.slane %v4794, 1
    %v4797 = vshll.u32 %v4489, 16
    %v4799 = vrot.slane %v4797, 2
    %v4800 = vor.u32 %v4796, %v4799
    %v4801 = vsel %vm1428, %v4791, %v4800
    %v4803 = vsel %vm204, %v4723, 0
    %v4806 = vsel %vm204, %v4727, 0
    %v4809 = vsel %vm204, %v4731, 0
    %v4812 = vsel %vm204, %v4735, 0
    %v4815 = vsel %vm204, %v4739, 0
    %v4818 = vsel %vm204, %v4743, 0
    %v4821 = vsel %vm204, %v4747, 0
    %v4824 = vsel %vm204, %v4751, 0
    %v4827 = vsel %vm204, %v4755, 0
    %v4830 = vsel %vm204, %v4759, 0
    %v4833 = vsel %vm204, %v4763, 0
    %v4836 = vsel %vm204, %v4767, 0
    %v4839 = vsel %vm204, %v4771, 0
    %v4842 = vsel %vm204, %v4775, 0
    %v4845 = vsel %vm204, %v4779, 0
    %v4848 = vsel %vm204, %v4783, 0
    %v4851 = vsel %vm204, %v4792, 0
    %v4854 = vsel %vm204, %v4801, 0
    %v4857 = vsel %vm259, %v4716, 0
    %4859 = vmatprep.subr.bf16.mxu0 0
    %4860 = vmatpush1.bf16.msra.mxu0 0
    %4861 = vmatprep.subr.bf16.mxu0 0
    %4862 = vmatpush1.bf16.msra.mxu0 0
    %4863 = vmatprep.subr.bf16.mxu0 0
    %4864 = vmatpush1.bf16.msra.mxu0 0
    %4865 = vmatprep.subr.bf16.mxu0 0
    %4866 = vmatpush1.bf16.msra.mxu0 0
    %4867 = vmatprep.subr.bf16.mxu0 0
    %4868 = vmatpush1.bf16.msra.mxu0 0
    %4869 = vmatprep.subr.bf16.mxu0 0
    %4870 = vmatpush1.bf16.msra.mxu0 0
    %4871 = vmatprep.subr.bf16.mxu0 0
    %4872 = vmatpush1.bf16.msra.mxu0 0
    %4873 = vmatprep.subr.bf16.mxu0 0
    %4874 = vmatpush1.bf16.msra.mxu0 %v4857
    %4875 = vmatprep.subr.bf16.mxu0 0
    %4876 = vmatpush2.bf16.msra.mxu0 0
    %4877 = vmatprep.subr.bf16.mxu0 0
    %4878 = vmatpush2.bf16.msra.mxu0 0
    %4879 = vmatprep.subr.bf16.mxu0 0
    %4880 = vmatpush2.bf16.msra.mxu0 0
    %4881 = vmatprep.subr.bf16.mxu0 0
    %4882 = vmatpush2.bf16.msra.mxu0 0
    %4883 = vmatprep.subr.bf16.mxu0 0
    %4884 = vmatpush2.bf16.msra.mxu0 0
    %4885 = vmatprep.subr.bf16.mxu0 0
    %4886 = vmatpush2.bf16.msra.mxu0 0
    %4887 = vmatprep.subr.bf16.mxu0 0
    %4888 = vmatpush2.bf16.msra.mxu0 0
    %4889 = vmatprep.subr.bf16.mxu0 0
    %4890 = vmatpush2.bf16.msra.mxu0 0
    %4891 = vmatprep.mubr.bf16.mxu0 0
    %4892 = vmatmul.mubr.bf16.gmra.mxu0 %v4803
    %v4893 = vpop.f32.mrf.mxu0
    %v4894 = vadd.f32 0.0, %v4893
    %v4895 = vpop.f32.mrf.mxu0
    %v4896 = vpop.f32.mrf.mxu0
    %v4897 = vadd.f32 0.0, %v4896
    %v4898 = vpop.f32.mrf.mxu0
    %4899 = vmatprep.mubr.bf16.mxu0 0
    %4900 = vmatmul.mubr.bf16.gmra.mxu0 %v4806
    %v4901 = vpop.f32.mrf.mxu0
    %v4902 = vadd.f32 0.0, %v4901
    %v4903 = vpop.f32.mrf.mxu0
    %v4904 = vpop.f32.mrf.mxu0
    %v4905 = vadd.f32 0.0, %v4904
    %v4906 = vpop.f32.mrf.mxu0
    %4907 = vmatprep.mubr.bf16.mxu0 0
    %4908 = vmatmul.mubr.bf16.gmra.mxu0 %v4809
    %v4909 = vpop.f32.mrf.mxu0
    %v4910 = vadd.f32 0.0, %v4909
    %v4911 = vpop.f32.mrf.mxu0
    %v4912 = vpop.f32.mrf.mxu0
    %v4913 = vadd.f32 0.0, %v4912
    %v4914 = vpop.f32.mrf.mxu0
    %4915 = vmatprep.mubr.bf16.mxu0 0
    %4916 = vmatmul.mubr.bf16.gmra.mxu0 %v4812
    %v4917 = vpop.f32.mrf.mxu0
    %v4918 = vadd.f32 0.0, %v4917
    %v4919 = vpop.f32.mrf.mxu0
    %v4920 = vpop.f32.mrf.mxu0
    %v4921 = vadd.f32 0.0, %v4920
    %v4922 = vpop.f32.mrf.mxu0
    %4923 = vmatprep.mubr.bf16.mxu0 0
    %4924 = vmatmul.mubr.bf16.gmra.mxu0 %v4815
    %v4925 = vpop.f32.mrf.mxu0
    %v4926 = vadd.f32 0.0, %v4925
    %v4927 = vpop.f32.mrf.mxu0
    %v4928 = vpop.f32.mrf.mxu0
    %v4929 = vadd.f32 0.0, %v4928
    %v4930 = vpop.f32.mrf.mxu0
    %4931 = vmatprep.mubr.bf16.mxu0 0
    %4932 = vmatmul.mubr.bf16.gmra.mxu0 %v4818
    %v4933 = vpop.f32.mrf.mxu0
    %v4934 = vadd.f32 0.0, %v4933
    %v4935 = vpop.f32.mrf.mxu0
    %v4936 = vpop.f32.mrf.mxu0
    %v4937 = vadd.f32 0.0, %v4936
    %v4938 = vpop.f32.mrf.mxu0
    %4939 = vmatprep.mubr.bf16.mxu0 0
    %4940 = vmatmul.mubr.bf16.gmra.mxu0 %v4821
    %v4941 = vpop.f32.mrf.mxu0
    %v4942 = vadd.f32 0.0, %v4941
    %v4943 = vpop.f32.mrf.mxu0
    %v4944 = vpop.f32.mrf.mxu0
    %v4945 = vadd.f32 0.0, %v4944
    %v4946 = vpop.f32.mrf.mxu0
    %4947 = vmatprep.mubr.bf16.mxu0 0
    %4948 = vmatmul.mubr.bf16.gmra.mxu0 %v4824
    %v4949 = vpop.f32.mrf.mxu0
    %v4950 = vadd.f32 0.0, %v4949
    %v4951 = vpop.f32.mrf.mxu0
    %v4952 = vpop.f32.mrf.mxu0
    %v4953 = vadd.f32 0.0, %v4952
    %v4954 = vpop.f32.mrf.mxu0
    %4955 = vmatprep.mubr.bf16.mxu0 0
    %4956 = vmatmul.mubr.bf16.gmra.mxu0 %v4827
    %v4957 = vpop.f32.mrf.mxu0
    %v4958 = vadd.f32 0.0, %v4957
    %v4959 = vpop.f32.mrf.mxu0
    %v4960 = vpop.f32.mrf.mxu0
    %v4961 = vadd.f32 0.0, %v4960
    %v4962 = vpop.f32.mrf.mxu0
    %4963 = vmatprep.mubr.bf16.mxu0 0
    %4964 = vmatmul.mubr.bf16.gmra.mxu0 %v4830
    %v4965 = vpop.f32.mrf.mxu0
    %v4966 = vadd.f32 0.0, %v4965
    %v4967 = vpop.f32.mrf.mxu0
    %v4968 = vpop.f32.mrf.mxu0
    %v4969 = vadd.f32 0.0, %v4968
    %v4970 = vpop.f32.mrf.mxu0
    %4971 = vmatprep.mubr.bf16.mxu0 0
    %4972 = vmatmul.mubr.bf16.gmra.mxu0 %v4833
    %v4973 = vpop.f32.mrf.mxu0
    %v4974 = vadd.f32 0.0, %v4973
    %v4975 = vpop.f32.mrf.mxu0
    %v4976 = vpop.f32.mrf.mxu0
    %v4977 = vadd.f32 0.0, %v4976
    %v4978 = vpop.f32.mrf.mxu0
    %4979 = vmatprep.mubr.bf16.mxu0 0
    %4980 = vmatmul.mubr.bf16.gmra.mxu0 %v4836
    %v4981 = vpop.f32.mrf.mxu0
    %v4982 = vadd.f32 0.0, %v4981
    %v4983 = vpop.f32.mrf.mxu0
    %v4984 = vpop.f32.mrf.mxu0
    %v4985 = vadd.f32 0.0, %v4984
    %v4986 = vpop.f32.mrf.mxu0
    %4987 = vmatprep.mubr.bf16.mxu0 0
    %4988 = vmatmul.mubr.bf16.gmra.mxu0 %v4839
    %v4989 = vpop.f32.mrf.mxu0
    %v4990 = vadd.f32 0.0, %v4989
    %v4991 = vpop.f32.mrf.mxu0
    %v4992 = vpop.f32.mrf.mxu0
    %v4993 = vadd.f32 0.0, %v4992
    %v4994 = vpop.f32.mrf.mxu0
    %4995 = vmatprep.mubr.bf16.mxu0 0
    %4996 = vmatmul.mubr.bf16.gmra.mxu0 %v4842
    %v4997 = vpop.f32.mrf.mxu0
    %v4998 = vadd.f32 0.0, %v4997
    %v4999 = vpop.f32.mrf.mxu0
    %v5000 = vpop.f32.mrf.mxu0
    %v5001 = vadd.f32 0.0, %v5000
    %v5002 = vpop.f32.mrf.mxu0
    %5003 = vmatprep.mubr.bf16.mxu0 0
    %5004 = vmatmul.mubr.bf16.gmra.mxu0 %v4845
    %v5005 = vpop.f32.mrf.mxu0
    %v5006 = vadd.f32 0.0, %v5005
    %v5007 = vpop.f32.mrf.mxu0
    %v5008 = vpop.f32.mrf.mxu0
    %v5009 = vadd.f32 0.0, %v5008
    %v5010 = vpop.f32.mrf.mxu0
    %5011 = vmatprep.mubr.bf16.mxu0 0
    %5012 = vmatmul.mubr.bf16.gmra.mxu0 %v4848
    %v5013 = vpop.f32.mrf.mxu0
    %v5014 = vadd.f32 0.0, %v5013
    %v5015 = vpop.f32.mrf.mxu0
    %v5016 = vpop.f32.mrf.mxu0
    %v5017 = vadd.f32 0.0, %v5016
    %v5018 = vpop.f32.mrf.mxu0
    %5019 = vmatprep.mubr.bf16.mxu0 0
    %5020 = vmatmul.mubr.bf16.gmra.mxu0 %v4851
    %v5021 = vpop.f32.mrf.mxu0
    %v5022 = vadd.f32 0.0, %v5021
    %v5023 = vpop.f32.mrf.mxu0
    %v5024 = vpop.f32.mrf.mxu0
    %v5025 = vadd.f32 0.0, %v5024
    %v5026 = vpop.f32.mrf.mxu0
    %5027 = vmatprep.mubr.bf16.mxu0 0
    %5028 = vmatmul.mubr.bf16.gmra.mxu0 %v4854
    %v5029 = vpop.f32.mrf.mxu0
    %v5030 = vadd.f32 0.0, %v5029
    %v5031 = vpop.f32.mrf.mxu0
    %v5032 = vpop.f32.mrf.mxu0
    %v5033 = vadd.f32 0.0, %v5032
    %v5034 = vpop.f32.mrf.mxu0
    %5035 = vdwg.mxu0
    %v5036 = vadd.f32 %v4680, %v4894
    %v5037 = vadd.f32 %v4681, %v4897
    %v5038 = vadd.f32 %v4682, %v4902
    %v5039 = vadd.f32 %v4683, %v4905
    %v5040 = vadd.f32 %v4684, %v4910
    %v5041 = vadd.f32 %v4685, %v4913
    %v5042 = vadd.f32 %v4686, %v4918
    %v5043 = vadd.f32 %v4687, %v4921
    %v5044 = vadd.f32 %v4688, %v4926
    %v5045 = vadd.f32 %v4689, %v4929
    %v5046 = vadd.f32 %v4690, %v4934
    %v5047 = vadd.f32 %v4691, %v4937
    %v5048 = vadd.f32 %v4692, %v4942
    %v5049 = vadd.f32 %v4693, %v4945
    %v5050 = vadd.f32 %v4694, %v4950
    %v5051 = vadd.f32 %v4695, %v4953
    %v5052 = vadd.f32 %v4696, %v4958
    %v5053 = vadd.f32 %v4697, %v4961
    %v5054 = vadd.f32 %v4698, %v4966
    %v5055 = vadd.f32 %v4699, %v4969
    %v5056 = vadd.f32 %v4700, %v4974
    %v5057 = vadd.f32 %v4701, %v4977
    %v5058 = vadd.f32 %v4702, %v4982
    %v5059 = vadd.f32 %v4703, %v4985
    %v5060 = vadd.f32 %v4704, %v4990
    %v5061 = vadd.f32 %v4705, %v4993
    %v5062 = vadd.f32 %v4706, %v4998
    %v5063 = vadd.f32 %v4707, %v5001
    %v5064 = vadd.f32 %v4708, %v5006
    %v5065 = vadd.f32 %v4709, %v5009
    %v5066 = vadd.f32 %v4710, %v5014
    %v5067 = vadd.f32 %v4711, %v5017
    %v5068 = vadd.f32 %v4712, %v5022
    %v5069 = vadd.f32 %v4713, %v5025
    %v5070 = vadd.f32 %v4714, %v5030
    %v5071 = vadd.f32 %v4715, %v5033
    %v5072 = vld [vmem:[%s1784] sm:$0x3]
    %v5073 = vrot.slane %v3484, 2
    %v5074 = vrot.slane %v3485, 2
    %v5075 = vsel %vm1786, %v5073, %v5074
    %v5076 = vrot.slane %v3486, 2
    %v5077 = vsel %vm1786, %v5074, %v5076
    %v5078 = vrot.slane %v3487, 2
    %v5079 = vsel %vm1786, %v5076, %v5078
    %v5080 = vrot.slane %v3488, 2
    %v5081 = vsel %vm1786, %v5078, %v5080
    %v5082 = vrot.slane %v3489, 2
    %v5083 = vsel %vm1786, %v5080, %v5082
    %v5084 = vrot.slane %v3490, 2
    %v5085 = vsel %vm1786, %v5082, %v5084
    %v5086 = vrot.slane %v3491, 2
    %v5087 = vsel %vm1786, %v5084, %v5086
    %v5088 = vrot.slane %v3492, 2
    %v5089 = vsel %vm1786, %v5086, %v5088
    %v5090 = vrot.slane %v3493, 2
    %v5091 = vsel %vm1786, %v5088, %v5090
    %v5092 = vrot.slane %v3494, 2
    %v5093 = vsel %vm1786, %v5090, %v5092
    %v5094 = vrot.slane %v3495, 2
    %v5095 = vsel %vm1786, %v5092, %v5094
    %v5096 = vrot.slane %v3496, 2
    %v5097 = vsel %vm1786, %v5094, %v5096
    %v5098 = vrot.slane %v3497, 2
    %v5099 = vsel %vm1786, %v5096, %v5098
    %v5100 = vrot.slane %v3498, 2
    %v5101 = vsel %vm1786, %v5098, %v5100
    %v5102 = vrot.slane %v3499, 2
    %v5103 = vsel %vm1786, %v5100, %v5102
    %v5104 = vrot.slane %v3500, 2
    %v5105 = vsel %vm1786, %v5102, %v5104
    %v5106 = vrot.slane %v4488, 2
    %v5107 = vsel %vm1786, %v5104, %v5106
    %v5108 = vrot.slane %v4489, 2
    %v5109 = vsel %vm1786, %v5106, %v5108
    %v5111 = vsel %vm204, %v5075, 0
    %v5114 = vsel %vm204, %v5077, 0
    %v5117 = vsel %vm204, %v5079, 0
    %v5120 = vsel %vm204, %v5081, 0
    %v5123 = vsel %vm204, %v5083, 0
    %v5126 = vsel %vm204, %v5085, 0
    %v5129 = vsel %vm204, %v5087, 0
    %v5132 = vsel %vm204, %v5089, 0
    %v5135 = vsel %vm204, %v5091, 0
    %v5138 = vsel %vm204, %v5093, 0
    %v5141 = vsel %vm204, %v5095, 0
    %v5144 = vsel %vm204, %v5097, 0
    %v5147 = vsel %vm204, %v5099, 0
    %v5150 = vsel %vm204, %v5101, 0
    %v5153 = vsel %vm204, %v5103, 0
    %v5156 = vsel %vm204, %v5105, 0
    %v5159 = vsel %vm204, %v5107, 0
    %v5162 = vsel %vm204, %v5109, 0
    %v5165 = vsel %vm259, %v5072, 0
    %5167 = vmatprep.subr.bf16.mxu0 0
    %5168 = vmatpush1.bf16.msra.mxu0 0
    %5169 = vmatprep.subr.bf16.mxu0 0
    %5170 = vmatpush1.bf16.msra.mxu0 0
    %5171 = vmatprep.subr.bf16.mxu0 0
    %5172 = vmatpush1.bf16.msra.mxu0 0
    %5173 = vmatprep.subr.bf16.mxu0 0
    %5174 = vmatpush1.bf16.msra.mxu0 0
    %5175 = vmatprep.subr.bf16.mxu0 0
    %5176 = vmatpush1.bf16.msra.mxu0 0
    %5177 = vmatprep.subr.bf16.mxu0 0
    %5178 = vmatpush1.bf16.msra.mxu0 0
    %5179 = vmatprep.subr.bf16.mxu0 0
    %5180 = vmatpush1.bf16.msra.mxu0 0
    %5181 = vmatprep.subr.bf16.mxu0 0
    %5182 = vmatpush1.bf16.msra.mxu0 %v5165
    %5183 = vmatprep.subr.bf16.mxu0 0
    %5184 = vmatpush2.bf16.msra.mxu0 0
    %5185 = vmatprep.subr.bf16.mxu0 0
    %5186 = vmatpush2.bf16.msra.mxu0 0
    %5187 = vmatprep.subr.bf16.mxu0 0
    %5188 = vmatpush2.bf16.msra.mxu0 0
    %5189 = vmatprep.subr.bf16.mxu0 0
    %5190 = vmatpush2.bf16.msra.mxu0 0
    %5191 = vmatprep.subr.bf16.mxu0 0
    %5192 = vmatpush2.bf16.msra.mxu0 0
    %5193 = vmatprep.subr.bf16.mxu0 0
    %5194 = vmatpush2.bf16.msra.mxu0 0
    %5195 = vmatprep.subr.bf16.mxu0 0
    %5196 = vmatpush2.bf16.msra.mxu0 0
    %5197 = vmatprep.subr.bf16.mxu0 0
    %5198 = vmatpush2.bf16.msra.mxu0 0
    %5199 = vmatprep.mubr.bf16.mxu0 0
    %5200 = vmatmul.mubr.bf16.gmra.mxu0 %v5111
    %v5201 = vpop.f32.mrf.mxu0
    %v5202 = vadd.f32 0.0, %v5201
    %v5203 = vpop.f32.mrf.mxu0
    %v5204 = vpop.f32.mrf.mxu0
    %v5205 = vadd.f32 0.0, %v5204
    %v5206 = vpop.f32.mrf.mxu0
    %5207 = vmatprep.mubr.bf16.mxu0 0
    %5208 = vmatmul.mubr.bf16.gmra.mxu0 %v5114
    %v5209 = vpop.f32.mrf.mxu0
    %v5210 = vadd.f32 0.0, %v5209
    %v5211 = vpop.f32.mrf.mxu0
    %v5212 = vpop.f32.mrf.mxu0
    %v5213 = vadd.f32 0.0, %v5212
    %v5214 = vpop.f32.mrf.mxu0
    %5215 = vmatprep.mubr.bf16.mxu0 0
    %5216 = vmatmul.mubr.bf16.gmra.mxu0 %v5117
    %v5217 = vpop.f32.mrf.mxu0
    %v5218 = vadd.f32 0.0, %v5217
    %v5219 = vpop.f32.mrf.mxu0
    %v5220 = vpop.f32.mrf.mxu0
    %v5221 = vadd.f32 0.0, %v5220
    %v5222 = vpop.f32.mrf.mxu0
    %5223 = vmatprep.mubr.bf16.mxu0 0
    %5224 = vmatmul.mubr.bf16.gmra.mxu0 %v5120
    %v5225 = vpop.f32.mrf.mxu0
    %v5226 = vadd.f32 0.0, %v5225
    %v5227 = vpop.f32.mrf.mxu0
    %v5228 = vpop.f32.mrf.mxu0
    %v5229 = vadd.f32 0.0, %v5228
    %v5230 = vpop.f32.mrf.mxu0
    %5231 = vmatprep.mubr.bf16.mxu0 0
    %5232 = vmatmul.mubr.bf16.gmra.mxu0 %v5123
    %v5233 = vpop.f32.mrf.mxu0
    %v5234 = vadd.f32 0.0, %v5233
    %v5235 = vpop.f32.mrf.mxu0
    %v5236 = vpop.f32.mrf.mxu0
    %v5237 = vadd.f32 0.0, %v5236
    %v5238 = vpop.f32.mrf.mxu0
    %5239 = vmatprep.mubr.bf16.mxu0 0
    %5240 = vmatmul.mubr.bf16.gmra.mxu0 %v5126
    %v5241 = vpop.f32.mrf.mxu0
    %v5242 = vadd.f32 0.0, %v5241
    %v5243 = vpop.f32.mrf.mxu0
    %v5244 = vpop.f32.mrf.mxu0
    %v5245 = vadd.f32 0.0, %v5244
    %v5246 = vpop.f32.mrf.mxu0
    %5247 = vmatprep.mubr.bf16.mxu0 0
    %5248 = vmatmul.mubr.bf16.gmra.mxu0 %v5129
    %v5249 = vpop.f32.mrf.mxu0
    %v5250 = vadd.f32 0.0, %v5249
    %v5251 = vpop.f32.mrf.mxu0
    %v5252 = vpop.f32.mrf.mxu0
    %v5253 = vadd.f32 0.0, %v5252
    %v5254 = vpop.f32.mrf.mxu0
    %5255 = vmatprep.mubr.bf16.mxu0 0
    %5256 = vmatmul.mubr.bf16.gmra.mxu0 %v5132
    %v5257 = vpop.f32.mrf.mxu0
    %v5258 = vadd.f32 0.0, %v5257
    %v5259 = vpop.f32.mrf.mxu0
    %v5260 = vpop.f32.mrf.mxu0
    %v5261 = vadd.f32 0.0, %v5260
    %v5262 = vpop.f32.mrf.mxu0
    %5263 = vmatprep.mubr.bf16.mxu0 0
    %5264 = vmatmul.mubr.bf16.gmra.mxu0 %v5135
    %v5265 = vpop.f32.mrf.mxu0
    %v5266 = vadd.f32 0.0, %v5265
    %v5267 = vpop.f32.mrf.mxu0
    %v5268 = vpop.f32.mrf.mxu0
    %v5269 = vadd.f32 0.0, %v5268
    %v5270 = vpop.f32.mrf.mxu0
    %5271 = vmatprep.mubr.bf16.mxu0 0
    %5272 = vmatmul.mubr.bf16.gmra.mxu0 %v5138
    %v5273 = vpop.f32.mrf.mxu0
    %v5274 = vadd.f32 0.0, %v5273
    %v5275 = vpop.f32.mrf.mxu0
    %v5276 = vpop.f32.mrf.mxu0
    %v5277 = vadd.f32 0.0, %v5276
    %v5278 = vpop.f32.mrf.mxu0
    %5279 = vmatprep.mubr.bf16.mxu0 0
    %5280 = vmatmul.mubr.bf16.gmra.mxu0 %v5141
    %v5281 = vpop.f32.mrf.mxu0
    %v5282 = vadd.f32 0.0, %v5281
    %v5283 = vpop.f32.mrf.mxu0
    %v5284 = vpop.f32.mrf.mxu0
    %v5285 = vadd.f32 0.0, %v5284
    %v5286 = vpop.f32.mrf.mxu0
    %5287 = vmatprep.mubr.bf16.mxu0 0
    %5288 = vmatmul.mubr.bf16.gmra.mxu0 %v5144
    %v5289 = vpop.f32.mrf.mxu0
    %v5290 = vadd.f32 0.0, %v5289
    %v5291 = vpop.f32.mrf.mxu0
    %v5292 = vpop.f32.mrf.mxu0
    %v5293 = vadd.f32 0.0, %v5292
    %v5294 = vpop.f32.mrf.mxu0
    %5295 = vmatprep.mubr.bf16.mxu0 0
    %5296 = vmatmul.mubr.bf16.gmra.mxu0 %v5147
    %v5297 = vpop.f32.mrf.mxu0
    %v5298 = vadd.f32 0.0, %v5297
    %v5299 = vpop.f32.mrf.mxu0
    %v5300 = vpop.f32.mrf.mxu0
    %v5301 = vadd.f32 0.0, %v5300
    %v5302 = vpop.f32.mrf.mxu0
    %5303 = vmatprep.mubr.bf16.mxu0 0
    %5304 = vmatmul.mubr.bf16.gmra.mxu0 %v5150
    %v5305 = vpop.f32.mrf.mxu0
    %v5306 = vadd.f32 0.0, %v5305
    %v5307 = vpop.f32.mrf.mxu0
    %v5308 = vpop.f32.mrf.mxu0
    %v5309 = vadd.f32 0.0, %v5308
    %v5310 = vpop.f32.mrf.mxu0
    %5311 = vmatprep.mubr.bf16.mxu0 0
    %5312 = vmatmul.mubr.bf16.gmra.mxu0 %v5153
    %v5313 = vpop.f32.mrf.mxu0
    %v5314 = vadd.f32 0.0, %v5313
    %v5315 = vpop.f32.mrf.mxu0
    %v5316 = vpop.f32.mrf.mxu0
    %v5317 = vadd.f32 0.0, %v5316
    %v5318 = vpop.f32.mrf.mxu0
    %5319 = vmatprep.mubr.bf16.mxu0 0
    %5320 = vmatmul.mubr.bf16.gmra.mxu0 %v5156
    %v5321 = vpop.f32.mrf.mxu0
    %v5322 = vadd.f32 0.0, %v5321
    %v5323 = vpop.f32.mrf.mxu0
    %v5324 = vpop.f32.mrf.mxu0
    %v5325 = vadd.f32 0.0, %v5324
    %v5326 = vpop.f32.mrf.mxu0
    %5327 = vmatprep.mubr.bf16.mxu0 0
    %5328 = vmatmul.mubr.bf16.gmra.mxu0 %v5159
    %v5329 = vpop.f32.mrf.mxu0
    %v5330 = vadd.f32 0.0, %v5329
    %v5331 = vpop.f32.mrf.mxu0
    %v5332 = vpop.f32.mrf.mxu0
    %v5333 = vadd.f32 0.0, %v5332
    %v5334 = vpop.f32.mrf.mxu0
    %5335 = vmatprep.mubr.bf16.mxu0 0
    %5336 = vmatmul.mubr.bf16.gmra.mxu0 %v5162
    %v5337 = vpop.f32.mrf.mxu0
    %v5338 = vadd.f32 0.0, %v5337
    %v5339 = vpop.f32.mrf.mxu0
    %v5340 = vpop.f32.mrf.mxu0
    %v5341 = vadd.f32 0.0, %v5340
    %v5342 = vpop.f32.mrf.mxu0
    %5343 = vdwg.mxu0
    %v5344 = vadd.f32 %v5036, %v5202
    %v5345 = vadd.f32 %v5037, %v5205
    %v5346 = vadd.f32 %v5038, %v5210
    %v5347 = vadd.f32 %v5039, %v5213
    %v5348 = vadd.f32 %v5040, %v5218
    %v5349 = vadd.f32 %v5041, %v5221
    %v5350 = vadd.f32 %v5042, %v5226
    %v5351 = vadd.f32 %v5043, %v5229
    %v5352 = vadd.f32 %v5044, %v5234
    %v5353 = vadd.f32 %v5045, %v5237
    %v5354 = vadd.f32 %v5046, %v5242
    %v5355 = vadd.f32 %v5047, %v5245
    %v5356 = vadd.f32 %v5048, %v5250
    %v5357 = vadd.f32 %v5049, %v5253
    %v5358 = vadd.f32 %v5050, %v5258
    %v5359 = vadd.f32 %v5051, %v5261
    %v5360 = vadd.f32 %v5052, %v5266
    %v5361 = vadd.f32 %v5053, %v5269
    %v5362 = vadd.f32 %v5054, %v5274
    %v5363 = vadd.f32 %v5055, %v5277
    %v5364 = vadd.f32 %v5056, %v5282
    %v5365 = vadd.f32 %v5057, %v5285
    %v5366 = vadd.f32 %v5058, %v5290
    %v5367 = vadd.f32 %v5059, %v5293
    %v5368 = vadd.f32 %v5060, %v5298
    %v5369 = vadd.f32 %v5061, %v5301
    %v5370 = vadd.f32 %v5062, %v5306
    %v5371 = vadd.f32 %v5063, %v5309
    %v5372 = vadd.f32 %v5064, %v5314
    %v5373 = vadd.f32 %v5065, %v5317
    %v5374 = vadd.f32 %v5066, %v5322
    %v5375 = vadd.f32 %v5067, %v5325
    %v5376 = vadd.f32 %v5068, %v5330
    %v5377 = vadd.f32 %v5069, %v5333
    %v5378 = vadd.f32 %v5070, %v5338
    %v5379 = vadd.f32 %v5071, %v5341
    %v5380 = vld [vmem:[%s2094] sm:$0x3]
    %v5383 = vunpack.c.l.b16 %v3408
    %v5384 = vunpack.c.l.b16 %v3409
    %v5385 = vpack.c.b16 %v5383, %v4487
    %v5386 = vpack.c.b16 %v5384, %v5384
    %v5387 = vrot.slane %v5385, 2
    %v5388 = vsel %vm1786, %v5106, %v5387
    %v5389 = vrot.slane %v5386, 2
    %v5390 = vsel %vm1786, %v5387, %v5389
    %v5392 = vsel %vm204, %v5388, 0
    %v5395 = vsel %vm204, %v5390, 0
    %v5398 = vsel %vm259, %v5380, 0
    %5400 = vmatprep.subr.bf16.mxu0 0
    %5401 = vmatpush1.bf16.msra.mxu0 0
    %5402 = vmatprep.subr.bf16.mxu0 0
    %5403 = vmatpush1.bf16.msra.mxu0 0
    %5404 = vmatprep.subr.bf16.mxu0 0
    %5405 = vmatpush1.bf16.msra.mxu0 0
    %5406 = vmatprep.subr.bf16.mxu0 0
    %5407 = vmatpush1.bf16.msra.mxu0 0
    %5408 = vmatprep.subr.bf16.mxu0 0
    %5409 = vmatpush1.bf16.msra.mxu0 0
    %5410 = vmatprep.subr.bf16.mxu0 0
    %5411 = vmatpush1.bf16.msra.mxu0 0
    %5412 = vmatprep.subr.bf16.mxu0 0
    %5413 = vmatpush1.bf16.msra.mxu0 0
    %5414 = vmatprep.subr.bf16.mxu0 0
    %5415 = vmatpush1.bf16.msra.mxu0 %v5398
    %5416 = vmatprep.subr.bf16.mxu0 0
    %5417 = vmatpush2.bf16.msra.mxu0 0
    %5418 = vmatprep.subr.bf16.mxu0 0
    %5419 = vmatpush2.bf16.msra.mxu0 0
    %5420 = vmatprep.subr.bf16.mxu0 0
    %5421 = vmatpush2.bf16.msra.mxu0 0
    %5422 = vmatprep.subr.bf16.mxu0 0
    %5423 = vmatpush2.bf16.msra.mxu0 0
    %5424 = vmatprep.subr.bf16.mxu0 0
    %5425 = vmatpush2.bf16.msra.mxu0 0
    %5426 = vmatprep.subr.bf16.mxu0 0
    %5427 = vmatpush2.bf16.msra.mxu0 0
    %5428 = vmatprep.subr.bf16.mxu0 0
    %5429 = vmatpush2.bf16.msra.mxu0 0
    %5430 = vmatprep.subr.bf16.mxu0 0
    %5431 = vmatpush2.bf16.msra.mxu0 0
    %5432 = vmatprep.mubr.bf16.mxu0 0
    %5433 = vmatmul.mubr.bf16.gmra.mxu0 %v5114
    %v5434 = vpop.f32.mrf.mxu0
    %v5435 = vadd.f32 0.0, %v5434
    %v5436 = vpop.f32.mrf.mxu0
    %v5437 = vpop.f32.mrf.mxu0
    %v5438 = vadd.f32 0.0, %v5437
    %v5439 = vpop.f32.mrf.mxu0
    %5440 = vmatprep.mubr.bf16.mxu0 0
    %5441 = vmatmul.mubr.bf16.gmra.mxu0 %v5117
    %v5442 = vpop.f32.mrf.mxu0
    %v5443 = vadd.f32 0.0, %v5442
    %v5444 = vpop.f32.mrf.mxu0
    %v5445 = vpop.f32.mrf.mxu0
    %v5446 = vadd.f32 0.0, %v5445
    %v5447 = vpop.f32.mrf.mxu0
    %5448 = vmatprep.mubr.bf16.mxu0 0
    %5449 = vmatmul.mubr.bf16.gmra.mxu0 %v5120
    %v5450 = vpop.f32.mrf.mxu0
    %v5451 = vadd.f32 0.0, %v5450
    %v5452 = vpop.f32.mrf.mxu0
    %v5453 = vpop.f32.mrf.mxu0
    %v5454 = vadd.f32 0.0, %v5453
    %v5455 = vpop.f32.mrf.mxu0
    %5456 = vmatprep.mubr.bf16.mxu0 0
    %5457 = vmatmul.mubr.bf16.gmra.mxu0 %v5123
    %v5458 = vpop.f32.mrf.mxu0
    %v5459 = vadd.f32 0.0, %v5458
    %v5460 = vpop.f32.mrf.mxu0
    %v5461 = vpop.f32.mrf.mxu0
    %v5462 = vadd.f32 0.0, %v5461
    %v5463 = vpop.f32.mrf.mxu0
    %5464 = vmatprep.mubr.bf16.mxu0 0
    %5465 = vmatmul.mubr.bf16.gmra.mxu0 %v5126
    %v5466 = vpop.f32.mrf.mxu0
    %v5467 = vadd.f32 0.0, %v5466
    %v5468 = vpop.f32.mrf.mxu0
    %v5469 = vpop.f32.mrf.mxu0
    %v5470 = vadd.f32 0.0, %v5469
    %v5471 = vpop.f32.mrf.mxu0
    %5472 = vmatprep.mubr.bf16.mxu0 0
    %5473 = vmatmul.mubr.bf16.gmra.mxu0 %v5129
    %v5474 = vpop.f32.mrf.mxu0
    %v5475 = vadd.f32 0.0, %v5474
    %v5476 = vpop.f32.mrf.mxu0
    %v5477 = vpop.f32.mrf.mxu0
    %v5478 = vadd.f32 0.0, %v5477
    %v5479 = vpop.f32.mrf.mxu0
    %5480 = vmatprep.mubr.bf16.mxu0 0
    %5481 = vmatmul.mubr.bf16.gmra.mxu0 %v5132
    %v5482 = vpop.f32.mrf.mxu0
    %v5483 = vadd.f32 0.0, %v5482
    %v5484 = vpop.f32.mrf.mxu0
    %v5485 = vpop.f32.mrf.mxu0
    %v5486 = vadd.f32 0.0, %v5485
    %v5487 = vpop.f32.mrf.mxu0
    %5488 = vmatprep.mubr.bf16.mxu0 0
    %5489 = vmatmul.mubr.bf16.gmra.mxu0 %v5135
    %v5490 = vpop.f32.mrf.mxu0
    %v5491 = vadd.f32 0.0, %v5490
    %v5492 = vpop.f32.mrf.mxu0
    %v5493 = vpop.f32.mrf.mxu0
    %v5494 = vadd.f32 0.0, %v5493
    %v5495 = vpop.f32.mrf.mxu0
    %5496 = vmatprep.mubr.bf16.mxu0 0
    %5497 = vmatmul.mubr.bf16.gmra.mxu0 %v5138
    %v5498 = vpop.f32.mrf.mxu0
    %v5499 = vadd.f32 0.0, %v5498
    %v5500 = vpop.f32.mrf.mxu0
    %v5501 = vpop.f32.mrf.mxu0
    %v5502 = vadd.f32 0.0, %v5501
    %v5503 = vpop.f32.mrf.mxu0
    %5504 = vmatprep.mubr.bf16.mxu0 0
    %5505 = vmatmul.mubr.bf16.gmra.mxu0 %v5141
    %v5506 = vpop.f32.mrf.mxu0
    %v5507 = vadd.f32 0.0, %v5506
    %v5508 = vpop.f32.mrf.mxu0
    %v5509 = vpop.f32.mrf.mxu0
    %v5510 = vadd.f32 0.0, %v5509
    %v5511 = vpop.f32.mrf.mxu0
    %5512 = vmatprep.mubr.bf16.mxu0 0
    %5513 = vmatmul.mubr.bf16.gmra.mxu0 %v5144
    %v5514 = vpop.f32.mrf.mxu0
    %v5515 = vadd.f32 0.0, %v5514
    %v5516 = vpop.f32.mrf.mxu0
    %v5517 = vpop.f32.mrf.mxu0
    %v5518 = vadd.f32 0.0, %v5517
    %v5519 = vpop.f32.mrf.mxu0
    %5520 = vmatprep.mubr.bf16.mxu0 0
    %5521 = vmatmul.mubr.bf16.gmra.mxu0 %v5147
    %v5522 = vpop.f32.mrf.mxu0
    %v5523 = vadd.f32 0.0, %v5522
    %v5524 = vpop.f32.mrf.mxu0
    %v5525 = vpop.f32.mrf.mxu0
    %v5526 = vadd.f32 0.0, %v5525
    %v5527 = vpop.f32.mrf.mxu0
    %5528 = vmatprep.mubr.bf16.mxu0 0
    %5529 = vmatmul.mubr.bf16.gmra.mxu0 %v5150
    %v5530 = vpop.f32.mrf.mxu0
    %v5531 = vadd.f32 0.0, %v5530
    %v5532 = vpop.f32.mrf.mxu0
    %v5533 = vpop.f32.mrf.mxu0
    %v5534 = vadd.f32 0.0, %v5533
    %v5535 = vpop.f32.mrf.mxu0
    %5536 = vmatprep.mubr.bf16.mxu0 0
    %5537 = vmatmul.mubr.bf16.gmra.mxu0 %v5153
    %v5538 = vpop.f32.mrf.mxu0
    %v5539 = vadd.f32 0.0, %v5538
    %v5540 = vpop.f32.mrf.mxu0
    %v5541 = vpop.f32.mrf.mxu0
    %v5542 = vadd.f32 0.0, %v5541
    %v5543 = vpop.f32.mrf.mxu0
    %5544 = vmatprep.mubr.bf16.mxu0 0
    %5545 = vmatmul.mubr.bf16.gmra.mxu0 %v5156
    %v5546 = vpop.f32.mrf.mxu0
    %v5547 = vadd.f32 0.0, %v5546
    %v5548 = vpop.f32.mrf.mxu0
    %v5549 = vpop.f32.mrf.mxu0
    %v5550 = vadd.f32 0.0, %v5549
    %v5551 = vpop.f32.mrf.mxu0
    %5552 = vmatprep.mubr.bf16.mxu0 0
    %5553 = vmatmul.mubr.bf16.gmra.mxu0 %v5159
    %v5554 = vpop.f32.mrf.mxu0
    %v5555 = vadd.f32 0.0, %v5554
    %v5556 = vpop.f32.mrf.mxu0
    %v5557 = vpop.f32.mrf.mxu0
    %v5558 = vadd.f32 0.0, %v5557
    %v5559 = vpop.f32.mrf.mxu0
    %5560 = vmatprep.mubr.bf16.mxu0 0
    %5561 = vmatmul.mubr.bf16.gmra.mxu0 %v5392
    %v5562 = vpop.f32.mrf.mxu0
    %v5563 = vadd.f32 0.0, %v5562
    %v5564 = vpop.f32.mrf.mxu0
    %v5565 = vpop.f32.mrf.mxu0
    %v5566 = vadd.f32 0.0, %v5565
    %v5567 = vpop.f32.mrf.mxu0
    %5568 = vmatprep.mubr.bf16.mxu0 0
    %5569 = vmatmul.mubr.bf16.gmra.mxu0 %v5395
    %v5570 = vpop.f32.mrf.mxu0
    %v5571 = vadd.f32 0.0, %v5570
    %v5572 = vpop.f32.mrf.mxu0
    %v5573 = vpop.f32.mrf.mxu0
    %v5574 = vadd.f32 0.0, %v5573
    %v5575 = vpop.f32.mrf.mxu0
    %5576 = vdwg.mxu0
    %v5577 = vadd.f32 %v5344, %v5435
    %v5578 = vadd.f32 %v5345, %v5438
    %v5579 = vadd.f32 %v5346, %v5443
    %v5580 = vadd.f32 %v5347, %v5446
    %v5581 = vadd.f32 %v5348, %v5451
    %v5582 = vadd.f32 %v5349, %v5454
    %v5583 = vadd.f32 %v5350, %v5459
    %v5584 = vadd.f32 %v5351, %v5462
    %v5585 = vadd.f32 %v5352, %v5467
    %v5586 = vadd.f32 %v5353, %v5470
    %v5587 = vadd.f32 %v5354, %v5475
    %v5588 = vadd.f32 %v5355, %v5478
    %v5589 = vadd.f32 %v5356, %v5483
    %v5590 = vadd.f32 %v5357, %v5486
    %v5591 = vadd.f32 %v5358, %v5491
    %v5592 = vadd.f32 %v5359, %v5494
    %v5593 = vadd.f32 %v5360, %v5499
    %v5594 = vadd.f32 %v5361, %v5502
    %v5595 = vadd.f32 %v5362, %v5507
    %v5596 = vadd.f32 %v5363, %v5510
    %v5597 = vadd.f32 %v5364, %v5515
    %v5598 = vadd.f32 %v5365, %v5518
    %v5599 = vadd.f32 %v5366, %v5523
    %v5600 = vadd.f32 %v5367, %v5526
    %v5601 = vadd.f32 %v5368, %v5531
    %v5602 = vadd.f32 %v5369, %v5534
    %v5603 = vadd.f32 %v5370, %v5539
    %v5604 = vadd.f32 %v5371, %v5542
    %v5605 = vadd.f32 %v5372, %v5547
    %v5606 = vadd.f32 %v5373, %v5550
    %v5607 = vadd.f32 %v5374, %v5555
    %v5608 = vadd.f32 %v5375, %v5558
    %v5609 = vadd.f32 %v5376, %v5563
    %v5610 = vadd.f32 %v5377, %v5566
    %v5611 = vadd.f32 %v5378, %v5571
    %v5612 = vadd.f32 %v5379, %v5574
    %v5613 = vld [vmem:[%s2328] sm:$0x3]
    %v5614 = vrot.slane %v3792, 2
    %v5615 = vrot.slane %v3788, 3
    %v5616 = vor.u32 %v5614, %v5615
    %v5617 = vrot.slane %v3799, 2
    %v5618 = vrot.slane %v3795, 3
    %v5619 = vor.u32 %v5617, %v5618
    %v5620 = vsel %vm2330, %v5616, %v5619
    %v5621 = vrot.slane %v3806, 2
    %v5622 = vrot.slane %v3802, 3
    %v5623 = vor.u32 %v5621, %v5622
    %v5624 = vsel %vm2330, %v5619, %v5623
    %v5625 = vrot.slane %v3813, 2
    %v5626 = vrot.slane %v3809, 3
    %v5627 = vor.u32 %v5625, %v5626
    %v5628 = vsel %vm2330, %v5623, %v5627
    %v5629 = vrot.slane %v3820, 2
    %v5630 = vrot.slane %v3816, 3
    %v5631 = vor.u32 %v5629, %v5630
    %v5632 = vsel %vm2330, %v5627, %v5631
    %v5633 = vrot.slane %v3827, 2
    %v5634 = vrot.slane %v3823, 3
    %v5635 = vor.u32 %v5633, %v5634
    %v5636 = vsel %vm2330, %v5631, %v5635
    %v5637 = vrot.slane %v3834, 2
    %v5638 = vrot.slane %v3830, 3
    %v5639 = vor.u32 %v5637, %v5638
    %v5640 = vsel %vm2330, %v5635, %v5639
    %v5641 = vrot.slane %v3841, 2
    %v5642 = vrot.slane %v3837, 3
    %v5643 = vor.u32 %v5641, %v5642
    %v5644 = vsel %vm2330, %v5639, %v5643
    %v5645 = vrot.slane %v3848, 2
    %v5646 = vrot.slane %v3844, 3
    %v5647 = vor.u32 %v5645, %v5646
    %v5648 = vsel %vm2330, %v5643, %v5647
    %v5649 = vrot.slane %v3855, 2
    %v5650 = vrot.slane %v3851, 3
    %v5651 = vor.u32 %v5649, %v5650
    %v5652 = vsel %vm2330, %v5647, %v5651
    %v5653 = vrot.slane %v3862, 2
    %v5654 = vrot.slane %v3858, 3
    %v5655 = vor.u32 %v5653, %v5654
    %v5656 = vsel %vm2330, %v5651, %v5655
    %v5657 = vrot.slane %v3869, 2
    %v5658 = vrot.slane %v3865, 3
    %v5659 = vor.u32 %v5657, %v5658
    %v5660 = vsel %vm2330, %v5655, %v5659
    %v5661 = vrot.slane %v3876, 2
    %v5662 = vrot.slane %v3872, 3
    %v5663 = vor.u32 %v5661, %v5662
    %v5664 = vsel %vm2330, %v5659, %v5663
    %v5665 = vrot.slane %v3883, 2
    %v5666 = vrot.slane %v3879, 3
    %v5667 = vor.u32 %v5665, %v5666
    %v5668 = vsel %vm2330, %v5663, %v5667
    %v5669 = vrot.slane %v3890, 2
    %v5670 = vrot.slane %v3886, 3
    %v5671 = vor.u32 %v5669, %v5670
    %v5672 = vsel %vm2330, %v5667, %v5671
    %v5673 = vrot.slane %v3897, 2
    %v5674 = vrot.slane %v3893, 3
    %v5675 = vor.u32 %v5673, %v5674
    %v5676 = vsel %vm2330, %v5671, %v5675
    %v5677 = vrot.slane %v4785, 2
    %v5678 = vrot.slane %v4788, 3
    %v5679 = vor.u32 %v5677, %v5678
    %v5680 = vsel %vm2330, %v5675, %v5679
    %v5682 = vshrl.u32 %v5385, 16
    %v5684 = vrot.slane %v5682, 2
    %v5685 = vshll.u32 %v5385, 16
    %v5687 = vrot.slane %v5685, 3
    %v5688 = vor.u32 %v5684, %v5687
    %v5689 = vsel %vm2330, %v5679, %v5688
    %v5691 = vshrl.u32 %v5386, 16
    %v5693 = vrot.slane %v5691, 2
    %v5694 = vshll.u32 %v5386, 16
    %v5696 = vrot.slane %v5694, 3
    %v5697 = vor.u32 %v5693, %v5696
    %v5698 = vsel %vm2330, %v5688, %v5697
    %v5700 = vsel %vm204, %v5620, 0
    %v5703 = vsel %vm204, %v5624, 0
    %v5706 = vsel %vm204, %v5628, 0
    %v5709 = vsel %vm204, %v5632, 0
    %v5712 = vsel %vm204, %v5636, 0
    %v5715 = vsel %vm204, %v5640, 0
    %v5718 = vsel %vm204, %v5644, 0
    %v5721 = vsel %vm204, %v5648, 0
    %v5724 = vsel %vm204, %v5652, 0
    %v5727 = vsel %vm204, %v5656, 0
    %v5730 = vsel %vm204, %v5660, 0
    %v5733 = vsel %vm204, %v5664, 0
    %v5736 = vsel %vm204, %v5668, 0
    %v5739 = vsel %vm204, %v5672, 0
    %v5742 = vsel %vm204, %v5676, 0
    %v5745 = vsel %vm204, %v5680, 0
    %v5748 = vsel %vm204, %v5689, 0
    %v5751 = vsel %vm204, %v5698, 0
    %v5754 = vsel %vm259, %v5613, 0
    %5756 = vmatprep.subr.bf16.mxu0 0
    %5757 = vmatpush1.bf16.msra.mxu0 0
    %5758 = vmatprep.subr.bf16.mxu0 0
    %5759 = vmatpush1.bf16.msra.mxu0 0
    %5760 = vmatprep.subr.bf16.mxu0 0
    %5761 = vmatpush1.bf16.msra.mxu0 0
    %5762 = vmatprep.subr.bf16.mxu0 0
    %5763 = vmatpush1.bf16.msra.mxu0 0
    %5764 = vmatprep.subr.bf16.mxu0 0
    %5765 = vmatpush1.bf16.msra.mxu0 0
    %5766 = vmatprep.subr.bf16.mxu0 0
    %5767 = vmatpush1.bf16.msra.mxu0 0
    %5768 = vmatprep.subr.bf16.mxu0 0
    %5769 = vmatpush1.bf16.msra.mxu0 0
    %5770 = vmatprep.subr.bf16.mxu0 0
    %5771 = vmatpush1.bf16.msra.mxu0 %v5754
    %5772 = vmatprep.subr.bf16.mxu0 0
    %5773 = vmatpush2.bf16.msra.mxu0 0
    %5774 = vmatprep.subr.bf16.mxu0 0
    %5775 = vmatpush2.bf16.msra.mxu0 0
    %5776 = vmatprep.subr.bf16.mxu0 0
    %5777 = vmatpush2.bf16.msra.mxu0 0
    %5778 = vmatprep.subr.bf16.mxu0 0
    %5779 = vmatpush2.bf16.msra.mxu0 0
    %5780 = vmatprep.subr.bf16.mxu0 0
    %5781 = vmatpush2.bf16.msra.mxu0 0
    %5782 = vmatprep.subr.bf16.mxu0 0
    %5783 = vmatpush2.bf16.msra.mxu0 0
    %5784 = vmatprep.subr.bf16.mxu0 0
    %5785 = vmatpush2.bf16.msra.mxu0 0
    %5786 = vmatprep.subr.bf16.mxu0 0
    %5787 = vmatpush2.bf16.msra.mxu0 0
    %5788 = vmatprep.mubr.bf16.mxu0 0
    %5789 = vmatmul.mubr.bf16.gmra.mxu0 %v5700
    %v5790 = vpop.f32.mrf.mxu0
    %v5791 = vadd.f32 0.0, %v5790
    %v5792 = vpop.f32.mrf.mxu0
    %v5793 = vpop.f32.mrf.mxu0
    %v5794 = vadd.f32 0.0, %v5793
    %v5795 = vpop.f32.mrf.mxu0
    %5796 = vmatprep.mubr.bf16.mxu0 0
    %5797 = vmatmul.mubr.bf16.gmra.mxu0 %v5703
    %v5798 = vpop.f32.mrf.mxu0
    %v5799 = vadd.f32 0.0, %v5798
    %v5800 = vpop.f32.mrf.mxu0
    %v5801 = vpop.f32.mrf.mxu0
    %v5802 = vadd.f32 0.0, %v5801
    %v5803 = vpop.f32.mrf.mxu0
    %5804 = vmatprep.mubr.bf16.mxu0 0
    %5805 = vmatmul.mubr.bf16.gmra.mxu0 %v5706
    %v5806 = vpop.f32.mrf.mxu0
    %v5807 = vadd.f32 0.0, %v5806
    %v5808 = vpop.f32.mrf.mxu0
    %v5809 = vpop.f32.mrf.mxu0
    %v5810 = vadd.f32 0.0, %v5809
    %v5811 = vpop.f32.mrf.mxu0
    %5812 = vmatprep.mubr.bf16.mxu0 0
    %5813 = vmatmul.mubr.bf16.gmra.mxu0 %v5709
    %v5814 = vpop.f32.mrf.mxu0
    %v5815 = vadd.f32 0.0, %v5814
    %v5816 = vpop.f32.mrf.mxu0
    %v5817 = vpop.f32.mrf.mxu0
    %v5818 = vadd.f32 0.0, %v5817
    %v5819 = vpop.f32.mrf.mxu0
    %5820 = vmatprep.mubr.bf16.mxu0 0
    %5821 = vmatmul.mubr.bf16.gmra.mxu0 %v5712
    %v5822 = vpop.f32.mrf.mxu0
    %v5823 = vadd.f32 0.0, %v5822
    %v5824 = vpop.f32.mrf.mxu0
    %v5825 = vpop.f32.mrf.mxu0
    %v5826 = vadd.f32 0.0, %v5825
    %v5827 = vpop.f32.mrf.mxu0
    %5828 = vmatprep.mubr.bf16.mxu0 0
    %5829 = vmatmul.mubr.bf16.gmra.mxu0 %v5715
    %v5830 = vpop.f32.mrf.mxu0
    %v5831 = vadd.f32 0.0, %v5830
    %v5832 = vpop.f32.mrf.mxu0
    %v5833 = vpop.f32.mrf.mxu0
    %v5834 = vadd.f32 0.0, %v5833
    %v5835 = vpop.f32.mrf.mxu0
    %5836 = vmatprep.mubr.bf16.mxu0 0
    %5837 = vmatmul.mubr.bf16.gmra.mxu0 %v5718
    %v5838 = vpop.f32.mrf.mxu0
    %v5839 = vadd.f32 0.0, %v5838
    %v5840 = vpop.f32.mrf.mxu0
    %v5841 = vpop.f32.mrf.mxu0
    %v5842 = vadd.f32 0.0, %v5841
    %v5843 = vpop.f32.mrf.mxu0
    %5844 = vmatprep.mubr.bf16.mxu0 0
    %5845 = vmatmul.mubr.bf16.gmra.mxu0 %v5721
    %v5846 = vpop.f32.mrf.mxu0
    %v5847 = vadd.f32 0.0, %v5846
    %v5848 = vpop.f32.mrf.mxu0
    %v5849 = vpop.f32.mrf.mxu0
    %v5850 = vadd.f32 0.0, %v5849
    %v5851 = vpop.f32.mrf.mxu0
    %5852 = vmatprep.mubr.bf16.mxu0 0
    %5853 = vmatmul.mubr.bf16.gmra.mxu0 %v5724
    %v5854 = vpop.f32.mrf.mxu0
    %v5855 = vadd.f32 0.0, %v5854
    %v5856 = vpop.f32.mrf.mxu0
    %v5857 = vpop.f32.mrf.mxu0
    %v5858 = vadd.f32 0.0, %v5857
    %v5859 = vpop.f32.mrf.mxu0
    %5860 = vmatprep.mubr.bf16.mxu0 0
    %5861 = vmatmul.mubr.bf16.gmra.mxu0 %v5727
    %v5862 = vpop.f32.mrf.mxu0
    %v5863 = vadd.f32 0.0, %v5862
    %v5864 = vpop.f32.mrf.mxu0
    %v5865 = vpop.f32.mrf.mxu0
    %v5866 = vadd.f32 0.0, %v5865
    %v5867 = vpop.f32.mrf.mxu0
    %5868 = vmatprep.mubr.bf16.mxu0 0
    %5869 = vmatmul.mubr.bf16.gmra.mxu0 %v5730
    %v5870 = vpop.f32.mrf.mxu0
    %v5871 = vadd.f32 0.0, %v5870
    %v5872 = vpop.f32.mrf.mxu0
    %v5873 = vpop.f32.mrf.mxu0
    %v5874 = vadd.f32 0.0, %v5873
    %v5875 = vpop.f32.mrf.mxu0
    %5876 = vmatprep.mubr.bf16.mxu0 0
    %5877 = vmatmul.mubr.bf16.gmra.mxu0 %v5733
    %v5878 = vpop.f32.mrf.mxu0
    %v5879 = vadd.f32 0.0, %v5878
    %v5880 = vpop.f32.mrf.mxu0
    %v5881 = vpop.f32.mrf.mxu0
    %v5882 = vadd.f32 0.0, %v5881
    %v5883 = vpop.f32.mrf.mxu0
    %5884 = vmatprep.mubr.bf16.mxu0 0
    %5885 = vmatmul.mubr.bf16.gmra.mxu0 %v5736
    %v5886 = vpop.f32.mrf.mxu0
    %v5887 = vadd.f32 0.0, %v5886
    %v5888 = vpop.f32.mrf.mxu0
    %v5889 = vpop.f32.mrf.mxu0
    %v5890 = vadd.f32 0.0, %v5889
    %v5891 = vpop.f32.mrf.mxu0
    %5892 = vmatprep.mubr.bf16.mxu0 0
    %5893 = vmatmul.mubr.bf16.gmra.mxu0 %v5739
    %v5894 = vpop.f32.mrf.mxu0
    %v5895 = vadd.f32 0.0, %v5894
    %v5896 = vpop.f32.mrf.mxu0
    %v5897 = vpop.f32.mrf.mxu0
    %v5898 = vadd.f32 0.0, %v5897
    %v5899 = vpop.f32.mrf.mxu0
    %5900 = vmatprep.mubr.bf16.mxu0 0
    %5901 = vmatmul.mubr.bf16.gmra.mxu0 %v5742
    %v5902 = vpop.f32.mrf.mxu0
    %v5903 = vadd.f32 0.0, %v5902
    %v5904 = vpop.f32.mrf.mxu0
    %v5905 = vpop.f32.mrf.mxu0
    %v5906 = vadd.f32 0.0, %v5905
    %v5907 = vpop.f32.mrf.mxu0
    %5908 = vmatprep.mubr.bf16.mxu0 0
    %5909 = vmatmul.mubr.bf16.gmra.mxu0 %v5745
    %v5910 = vpop.f32.mrf.mxu0
    %v5911 = vadd.f32 0.0, %v5910
    %v5912 = vpop.f32.mrf.mxu0
    %v5913 = vpop.f32.mrf.mxu0
    %v5914 = vadd.f32 0.0, %v5913
    %v5915 = vpop.f32.mrf.mxu0
    %5916 = vmatprep.mubr.bf16.mxu0 0
    %5917 = vmatmul.mubr.bf16.gmra.mxu0 %v5748
    %v5918 = vpop.f32.mrf.mxu0
    %v5919 = vadd.f32 0.0, %v5918
    %v5920 = vpop.f32.mrf.mxu0
    %v5921 = vpop.f32.mrf.mxu0
    %v5922 = vadd.f32 0.0, %v5921
    %v5923 = vpop.f32.mrf.mxu0
    %5924 = vmatprep.mubr.bf16.mxu0 0
    %5925 = vmatmul.mubr.bf16.gmra.mxu0 %v5751
    %v5926 = vpop.f32.mrf.mxu0
    %v5927 = vadd.f32 0.0, %v5926
    %v5928 = vpop.f32.mrf.mxu0
    %v5929 = vpop.f32.mrf.mxu0
    %v5930 = vadd.f32 0.0, %v5929
    %v5931 = vpop.f32.mrf.mxu0
    %5932 = vdwg.mxu0
    %v5933 = vadd.f32 %v5577, %v5791
    %v5934 = vadd.f32 %v5578, %v5794
    %v5935 = vadd.f32 %v5579, %v5799
    %v5936 = vadd.f32 %v5580, %v5802
    %v5937 = vadd.f32 %v5581, %v5807
    %v5938 = vadd.f32 %v5582, %v5810
    %v5939 = vadd.f32 %v5583, %v5815
    %v5940 = vadd.f32 %v5584, %v5818
    %v5941 = vadd.f32 %v5585, %v5823
    %v5942 = vadd.f32 %v5586, %v5826
    %v5943 = vadd.f32 %v5587, %v5831
    %v5944 = vadd.f32 %v5588, %v5834
    %v5945 = vadd.f32 %v5589, %v5839
    %v5946 = vadd.f32 %v5590, %v5842
    %v5947 = vadd.f32 %v5591, %v5847
    %v5948 = vadd.f32 %v5592, %v5850
    %v5949 = vadd.f32 %v5593, %v5855
    %v5950 = vadd.f32 %v5594, %v5858
    %v5951 = vadd.f32 %v5595, %v5863
    %v5952 = vadd.f32 %v5596, %v5866
    %v5953 = vadd.f32 %v5597, %v5871
    %v5954 = vadd.f32 %v5598, %v5874
    %v5955 = vadd.f32 %v5599, %v5879
    %v5956 = vadd.f32 %v5600, %v5882
    %v5957 = vadd.f32 %v5601, %v5887
    %v5958 = vadd.f32 %v5602, %v5890
    %v5959 = vadd.f32 %v5603, %v5895
    %v5960 = vadd.f32 %v5604, %v5898
    %v5961 = vadd.f32 %v5605, %v5903
    %v5962 = vadd.f32 %v5606, %v5906
    %v5963 = vadd.f32 %v5607, %v5911
    %v5964 = vadd.f32 %v5608, %v5914
    %v5965 = vadd.f32 %v5609, %v5919
    %v5966 = vadd.f32 %v5610, %v5922
    %v5967 = vadd.f32 %v5611, %v5927
    %v5968 = vadd.f32 %v5612, %v5930
    %v5969 = vld [vmem:[%s2686] sm:$0x3]
    %v5970 = vrot.slane %v3485, 3
    %v5971 = vrot.slane %v3486, 3
    %v5972 = vsel %vm2688, %v5970, %v5971
    %v5973 = vrot.slane %v3487, 3
    %v5974 = vsel %vm2688, %v5971, %v5973
    %v5975 = vrot.slane %v3488, 3
    %v5976 = vsel %vm2688, %v5973, %v5975
    %v5977 = vrot.slane %v3489, 3
    %v5978 = vsel %vm2688, %v5975, %v5977
    %v5979 = vrot.slane %v3490, 3
    %v5980 = vsel %vm2688, %v5977, %v5979
    %v5981 = vrot.slane %v3491, 3
    %v5982 = vsel %vm2688, %v5979, %v5981
    %v5983 = vrot.slane %v3492, 3
    %v5984 = vsel %vm2688, %v5981, %v5983
    %v5985 = vrot.slane %v3493, 3
    %v5986 = vsel %vm2688, %v5983, %v5985
    %v5987 = vrot.slane %v3494, 3
    %v5988 = vsel %vm2688, %v5985, %v5987
    %v5989 = vrot.slane %v3495, 3
    %v5990 = vsel %vm2688, %v5987, %v5989
    %v5991 = vrot.slane %v3496, 3
    %v5992 = vsel %vm2688, %v5989, %v5991
    %v5993 = vrot.slane %v3497, 3
    %v5994 = vsel %vm2688, %v5991, %v5993
    %v5995 = vrot.slane %v3498, 3
    %v5996 = vsel %vm2688, %v5993, %v5995
    %v5997 = vrot.slane %v3499, 3
    %v5998 = vsel %vm2688, %v5995, %v5997
    %v5999 = vrot.slane %v3500, 3
    %v6000 = vsel %vm2688, %v5997, %v5999
    %v6001 = vrot.slane %v4488, 3
    %v6002 = vsel %vm2688, %v5999, %v6001
    %v6003 = vrot.slane %v5385, 3
    %v6004 = vsel %vm2688, %v6001, %v6003
    %v6005 = vrot.slane %v5386, 3
    %v6006 = vsel %vm2688, %v6003, %v6005
    %v6008 = vsel %vm204, %v5972, 0
    %v6011 = vsel %vm204, %v5974, 0
    %v6014 = vsel %vm204, %v5976, 0
    %v6017 = vsel %vm204, %v5978, 0
    %v6020 = vsel %vm204, %v5980, 0
    %v6023 = vsel %vm204, %v5982, 0
    %v6026 = vsel %vm204, %v5984, 0
    %v6029 = vsel %vm204, %v5986, 0
    %v6032 = vsel %vm204, %v5988, 0
    %v6035 = vsel %vm204, %v5990, 0
    %v6038 = vsel %vm204, %v5992, 0
    %v6041 = vsel %vm204, %v5994, 0
    %v6044 = vsel %vm204, %v5996, 0
    %v6047 = vsel %vm204, %v5998, 0
    %v6050 = vsel %vm204, %v6000, 0
    %v6053 = vsel %vm204, %v6002, 0
    %v6056 = vsel %vm204, %v6004, 0
    %v6059 = vsel %vm204, %v6006, 0
    %v6062 = vsel %vm259, %v5969, 0
    %6064 = vmatprep.subr.bf16.mxu0 0
    %6065 = vmatpush1.bf16.msra.mxu0 0
    %6066 = vmatprep.subr.bf16.mxu0 0
    %6067 = vmatpush1.bf16.msra.mxu0 0
    %6068 = vmatprep.subr.bf16.mxu0 0
    %6069 = vmatpush1.bf16.msra.mxu0 0
    %6070 = vmatprep.subr.bf16.mxu0 0
    %6071 = vmatpush1.bf16.msra.mxu0 0
    %6072 = vmatprep.subr.bf16.mxu0 0
    %6073 = vmatpush1.bf16.msra.mxu0 0
    %6074 = vmatprep.subr.bf16.mxu0 0
    %6075 = vmatpush1.bf16.msra.mxu0 0
    %6076 = vmatprep.subr.bf16.mxu0 0
    %6077 = vmatpush1.bf16.msra.mxu0 0
    %6078 = vmatprep.subr.bf16.mxu0 0
    %6079 = vmatpush1.bf16.msra.mxu0 %v6062
    %6080 = vmatprep.subr.bf16.mxu0 0
    %6081 = vmatpush2.bf16.msra.mxu0 0
    %6082 = vmatprep.subr.bf16.mxu0 0
    %6083 = vmatpush2.bf16.msra.mxu0 0
    %6084 = vmatprep.subr.bf16.mxu0 0
    %6085 = vmatpush2.bf16.msra.mxu0 0
    %6086 = vmatprep.subr.bf16.mxu0 0
    %6087 = vmatpush2.bf16.msra.mxu0 0
    %6088 = vmatprep.subr.bf16.mxu0 0
    %6089 = vmatpush2.bf16.msra.mxu0 0
    %6090 = vmatprep.subr.bf16.mxu0 0
    %6091 = vmatpush2.bf16.msra.mxu0 0
    %6092 = vmatprep.subr.bf16.mxu0 0
    %6093 = vmatpush2.bf16.msra.mxu0 0
    %6094 = vmatprep.subr.bf16.mxu0 0
    %6095 = vmatpush2.bf16.msra.mxu0 0
    %6096 = vmatprep.mubr.bf16.mxu0 0
    %6097 = vmatmul.mubr.bf16.gmra.mxu0 %v6008
    %v6098 = vpop.f32.mrf.mxu0
    %v6099 = vadd.f32 0.0, %v6098
    %v6100 = vpop.f32.mrf.mxu0
    %v6101 = vpop.f32.mrf.mxu0
    %v6102 = vadd.f32 0.0, %v6101
    %v6103 = vpop.f32.mrf.mxu0
    %6104 = vmatprep.mubr.bf16.mxu0 0
    %6105 = vmatmul.mubr.bf16.gmra.mxu0 %v6011
    %v6106 = vpop.f32.mrf.mxu0
    %v6107 = vadd.f32 0.0, %v6106
    %v6108 = vpop.f32.mrf.mxu0
    %v6109 = vpop.f32.mrf.mxu0
    %v6110 = vadd.f32 0.0, %v6109
    %v6111 = vpop.f32.mrf.mxu0
    %6112 = vmatprep.mubr.bf16.mxu0 0
    %6113 = vmatmul.mubr.bf16.gmra.mxu0 %v6014
    %v6114 = vpop.f32.mrf.mxu0
    %v6115 = vadd.f32 0.0, %v6114
    %v6116 = vpop.f32.mrf.mxu0
    %v6117 = vpop.f32.mrf.mxu0
    %v6118 = vadd.f32 0.0, %v6117
    %v6119 = vpop.f32.mrf.mxu0
    %6120 = vmatprep.mubr.bf16.mxu0 0
    %6121 = vmatmul.mubr.bf16.gmra.mxu0 %v6017
    %v6122 = vpop.f32.mrf.mxu0
    %v6123 = vadd.f32 0.0, %v6122
    %v6124 = vpop.f32.mrf.mxu0
    %v6125 = vpop.f32.mrf.mxu0
    %v6126 = vadd.f32 0.0, %v6125
    %v6127 = vpop.f32.mrf.mxu0
    %6128 = vmatprep.mubr.bf16.mxu0 0
    %6129 = vmatmul.mubr.bf16.gmra.mxu0 %v6020
    %v6130 = vpop.f32.mrf.mxu0
    %v6131 = vadd.f32 0.0, %v6130
    %v6132 = vpop.f32.mrf.mxu0
    %v6133 = vpop.f32.mrf.mxu0
    %v6134 = vadd.f32 0.0, %v6133
    %v6135 = vpop.f32.mrf.mxu0
    %6136 = vmatprep.mubr.bf16.mxu0 0
    %6137 = vmatmul.mubr.bf16.gmra.mxu0 %v6023
    %v6138 = vpop.f32.mrf.mxu0
    %v6139 = vadd.f32 0.0, %v6138
    %v6140 = vpop.f32.mrf.mxu0
    %v6141 = vpop.f32.mrf.mxu0
    %v6142 = vadd.f32 0.0, %v6141
    %v6143 = vpop.f32.mrf.mxu0
    %6144 = vmatprep.mubr.bf16.mxu0 0
    %6145 = vmatmul.mubr.bf16.gmra.mxu0 %v6026
    %v6146 = vpop.f32.mrf.mxu0
    %v6147 = vadd.f32 0.0, %v6146
    %v6148 = vpop.f32.mrf.mxu0
    %v6149 = vpop.f32.mrf.mxu0
    %v6150 = vadd.f32 0.0, %v6149
    %v6151 = vpop.f32.mrf.mxu0
    %6152 = vmatprep.mubr.bf16.mxu0 0
    %6153 = vmatmul.mubr.bf16.gmra.mxu0 %v6029
    %v6154 = vpop.f32.mrf.mxu0
    %v6155 = vadd.f32 0.0, %v6154
    %v6156 = vpop.f32.mrf.mxu0
    %v6157 = vpop.f32.mrf.mxu0
    %v6158 = vadd.f32 0.0, %v6157
    %v6159 = vpop.f32.mrf.mxu0
    %6160 = vmatprep.mubr.bf16.mxu0 0
    %6161 = vmatmul.mubr.bf16.gmra.mxu0 %v6032
    %v6162 = vpop.f32.mrf.mxu0
    %v6163 = vadd.f32 0.0, %v6162
    %v6164 = vpop.f32.mrf.mxu0
    %v6165 = vpop.f32.mrf.mxu0
    %v6166 = vadd.f32 0.0, %v6165
    %v6167 = vpop.f32.mrf.mxu0
    %6168 = vmatprep.mubr.bf16.mxu0 0
    %6169 = vmatmul.mubr.bf16.gmra.mxu0 %v6035
    %v6170 = vpop.f32.mrf.mxu0
    %v6171 = vadd.f32 0.0, %v6170
    %v6172 = vpop.f32.mrf.mxu0
    %v6173 = vpop.f32.mrf.mxu0
    %v6174 = vadd.f32 0.0, %v6173
    %v6175 = vpop.f32.mrf.mxu0
    %6176 = vmatprep.mubr.bf16.mxu0 0
    %6177 = vmatmul.mubr.bf16.gmra.mxu0 %v6038
    %v6178 = vpop.f32.mrf.mxu0
    %v6179 = vadd.f32 0.0, %v6178
    %v6180 = vpop.f32.mrf.mxu0
    %v6181 = vpop.f32.mrf.mxu0
    %v6182 = vadd.f32 0.0, %v6181
    %v6183 = vpop.f32.mrf.mxu0
    %6184 = vmatprep.mubr.bf16.mxu0 0
    %6185 = vmatmul.mubr.bf16.gmra.mxu0 %v6041
    %v6186 = vpop.f32.mrf.mxu0
    %v6187 = vadd.f32 0.0, %v6186
    %v6188 = vpop.f32.mrf.mxu0
    %v6189 = vpop.f32.mrf.mxu0
    %v6190 = vadd.f32 0.0, %v6189
    %v6191 = vpop.f32.mrf.mxu0
    %6192 = vmatprep.mubr.bf16.mxu0 0
    %6193 = vmatmul.mubr.bf16.gmra.mxu0 %v6044
    %v6194 = vpop.f32.mrf.mxu0
    %v6195 = vadd.f32 0.0, %v6194
    %v6196 = vpop.f32.mrf.mxu0
    %v6197 = vpop.f32.mrf.mxu0
    %v6198 = vadd.f32 0.0, %v6197
    %v6199 = vpop.f32.mrf.mxu0
    %6200 = vmatprep.mubr.bf16.mxu0 0
    %6201 = vmatmul.mubr.bf16.gmra.mxu0 %v6047
    %v6202 = vpop.f32.mrf.mxu0
    %v6203 = vadd.f32 0.0, %v6202
    %v6204 = vpop.f32.mrf.mxu0
    %v6205 = vpop.f32.mrf.mxu0
    %v6206 = vadd.f32 0.0, %v6205
    %v6207 = vpop.f32.mrf.mxu0
    %6208 = vmatprep.mubr.bf16.mxu0 0
    %6209 = vmatmul.mubr.bf16.gmra.mxu0 %v6050
    %v6210 = vpop.f32.mrf.mxu0
    %v6211 = vadd.f32 0.0, %v6210
    %v6212 = vpop.f32.mrf.mxu0
    %v6213 = vpop.f32.mrf.mxu0
    %v6214 = vadd.f32 0.0, %v6213
    %v6215 = vpop.f32.mrf.mxu0
    %6216 = vmatprep.mubr.bf16.mxu0 0
    %6217 = vmatmul.mubr.bf16.gmra.mxu0 %v6053
    %v6218 = vpop.f32.mrf.mxu0
    %v6219 = vadd.f32 0.0, %v6218
    %v6220 = vpop.f32.mrf.mxu0
    %v6221 = vpop.f32.mrf.mxu0
    %v6222 = vadd.f32 0.0, %v6221
    %v6223 = vpop.f32.mrf.mxu0
    %6224 = vmatprep.mubr.bf16.mxu0 0
    %6225 = vmatmul.mubr.bf16.gmra.mxu0 %v6056
    %v6226 = vpop.f32.mrf.mxu0
    %v6227 = vadd.f32 0.0, %v6226
    %v6228 = vpop.f32.mrf.mxu0
    %v6229 = vpop.f32.mrf.mxu0
    %v6230 = vadd.f32 0.0, %v6229
    %v6231 = vpop.f32.mrf.mxu0
    %6232 = vmatprep.mubr.bf16.mxu0 0
    %6233 = vmatmul.mubr.bf16.gmra.mxu0 %v6059
    %v6234 = vpop.f32.mrf.mxu0
    %v6235 = vadd.f32 0.0, %v6234
    %v6236 = vpop.f32.mrf.mxu0
    %v6237 = vpop.f32.mrf.mxu0
    %v6238 = vadd.f32 0.0, %v6237
    %v6239 = vpop.f32.mrf.mxu0
    %6240 = vdwg.mxu0
    %v6241 = vadd.f32 %v5933, %v6099
    %v6242 = vadd.f32 %v5934, %v6102
    %v6243 = vadd.f32 %v5935, %v6107
    %v6244 = vadd.f32 %v5936, %v6110
    %v6245 = vadd.f32 %v5937, %v6115
    %v6246 = vadd.f32 %v5938, %v6118
    %v6247 = vadd.f32 %v5939, %v6123
    %v6248 = vadd.f32 %v5940, %v6126
    %v6249 = vadd.f32 %v5941, %v6131
    %v6250 = vadd.f32 %v5942, %v6134
    %v6251 = vadd.f32 %v5943, %v6139
    %v6252 = vadd.f32 %v5944, %v6142
    %v6253 = vadd.f32 %v5945, %v6147
    %v6254 = vadd.f32 %v5946, %v6150
    %v6255 = vadd.f32 %v5947, %v6155
    %v6256 = vadd.f32 %v5948, %v6158
    %v6257 = vadd.f32 %v5949, %v6163
    %v6258 = vadd.f32 %v5950, %v6166
    %v6259 = vadd.f32 %v5951, %v6171
    %v6260 = vadd.f32 %v5952, %v6174
    %v6261 = vadd.f32 %v5953, %v6179
    %v6262 = vadd.f32 %v5954, %v6182
    %v6263 = vadd.f32 %v5955, %v6187
    %v6264 = vadd.f32 %v5956, %v6190
    %v6265 = vadd.f32 %v5957, %v6195
    %v6266 = vadd.f32 %v5958, %v6198
    %v6267 = vadd.f32 %v5959, %v6203
    %v6268 = vadd.f32 %v5960, %v6206
    %v6269 = vadd.f32 %v5961, %v6211
    %v6270 = vadd.f32 %v5962, %v6214
    %v6271 = vadd.f32 %v5963, %v6219
    %v6272 = vadd.f32 %v5964, %v6222
    %v6273 = vadd.f32 %v5965, %v6227
    %v6274 = vadd.f32 %v5966, %v6230
    %v6275 = vadd.f32 %v5967, %v6235
    %v6276 = vadd.f32 %v5968, %v6238
    %s6277 = scalar_lea.vmem [#allocation2], 288
    %6278 = vst [vmem:[%s6277] sm:$0xff] %v6241
    %6279 = vst [vmem:[%s6277 + $0x8] sm:$0xff] %v6242
    %6280 = vst [vmem:[%s6277 + $0x10] sm:$0xff] %v6243
    %6281 = vst [vmem:[%s6277 + $0x18] sm:$0xff] %v6244
    %6282 = vst [vmem:[%s6277 + $0x20] sm:$0xff] %v6245
    %6283 = vst [vmem:[%s6277 + $0x28] sm:$0xff] %v6246
    %6284 = vst [vmem:[%s6277 + $0x30] sm:$0xff] %v6247
    %6285 = vst [vmem:[%s6277 + $0x38] sm:$0xff] %v6248
    %6286 = vst [vmem:[%s6277 + $0x40] sm:$0xff] %v6249
    %6287 = vst [vmem:[%s6277 + $0x48] sm:$0xff] %v6250
    %6288 = vst [vmem:[%s6277 + $0x50] sm:$0xff] %v6251
    %6289 = vst [vmem:[%s6277 + $0x58] sm:$0xff] %v6252
    %6290 = vst [vmem:[%s6277 + $0x60] sm:$0xff] %v6253
    %6291 = vst [vmem:[%s6277 + $0x68] sm:$0xff] %v6254
    %6292 = vst [vmem:[%s6277 + $0x70] sm:$0xff] %v6255
    %6293 = vst [vmem:[%s6277 + $0x78] sm:$0xff] %v6256
    %6294 = vst [vmem:[%s6277 + $0x80] sm:$0xff] %v6257
    %6295 = vst [vmem:[%s6277 + $0x88] sm:$0xff] %v6258
    %6296 = vst [vmem:[%s6277 + $0x90] sm:$0xff] %v6259
    %6297 = vst [vmem:[%s6277 + $0x98] sm:$0xff] %v6260
    %6298 = vst [vmem:[%s6277 + $0xa0] sm:$0xff] %v6261
    %6299 = vst [vmem:[%s6277 + $0xa8] sm:$0xff] %v6262
    %6300 = vst [vmem:[%s6277 + $0xb0] sm:$0xff] %v6263
    %6301 = vst [vmem:[%s6277 + $0xb8] sm:$0xff] %v6264
    %6302 = vst [vmem:[%s6277 + $0xc0] sm:$0xff] %v6265
    %6303 = vst [vmem:[%s6277 + $0xc8] sm:$0xff] %v6266
    %6304 = vst [vmem:[%s6277 + $0xd0] sm:$0xff] %v6267
    %6305 = vst [vmem:[%s6277 + $0xd8] sm:$0xff] %v6268
    %6306 = vst [vmem:[%s6277 + $0xe0] sm:$0xff] %v6269
    %6307 = vst [vmem:[%s6277 + $0xe8] sm:$0xff] %v6270
    %6308 = vst [vmem:[%s6277 + $0xf0] sm:$0xff] %v6271
    %6309 = vst [vmem:[%s6277 + $0xf8] sm:$0xff] %v6272
    %6310 = vst [vmem:[%s6277 + $0x100] sm:$0xff] %v6273
    %6311 = vst [vmem:[%s6277 + $0x108] sm:$0xff] %v6274
    %6312 = vst [vmem:[%s6277 + $0x110] sm:$0xff] %v6275
    %6313 = vst [vmem:[%s6277 + $0x118] sm:$0xff] %v6276
    %v6314 = vmul.f32 %v6241, %v3035
    %v6315 = vmul.f32 %v6242, %v3040
    %v6316 = vmul.f32 %v6243, %v3045
    %v6317 = vmul.f32 %v6244, %v3050
    %v6318 = vmul.f32 %v6245, %v3055
    %v6319 = vmul.f32 %v6246, %v3060
    %v6320 = vmul.f32 %v6247, %v3065
    %v6321 = vmul.f32 %v6248, %v3070
    %v6322 = vmul.f32 %v6249, %v3075
    %v6323 = vmul.f32 %v6250, %v3080
    %v6324 = vmul.f32 %v6251, %v3085
    %v6325 = vmul.f32 %v6252, %v3090
    %v6326 = vmul.f32 %v6253, %v3095
    %v6327 = vmul.f32 %v6254, %v3100
    %v6328 = vmul.f32 %v6255, %v3105
    %v6329 = vmul.f32 %v6256, %v3110
    %v6330 = vmul.f32 %v6257, %v3115
    %v6331 = vmul.f32 %v6258, %v3120
    %v6332 = vmul.f32 %v6259, %v3125
    %v6333 = vmul.f32 %v6260, %v3130
    %v6334 = vmul.f32 %v6261, %v3135
    %v6335 = vmul.f32 %v6262, %v3140
    %v6336 = vmul.f32 %v6263, %v3145
    %v6337 = vmul.f32 %v6264, %v3150
    %v6338 = vmul.f32 %v6265, %v3155
    %v6339 = vmul.f32 %v6266, %v3160
    %v6340 = vmul.f32 %v6267, %v3165
    %v6341 = vmul.f32 %v6268, %v3170
    %v6342 = vmul.f32 %v6269, %v3175
    %v6343 = vmul.f32 %v6270, %v3180
    %v6344 = vmul.f32 %v6271, %v3185
    %v6345 = vmul.f32 %v6272, %v3190
    %v6346 = vmul.f32 %v6273, %v3195
    %v6347 = vmul.f32 %v6274, %v3200
    %v6348 = vmul.f32 %v6275, %v3205
    %v6349 = vmul.f32 %v6276, %v3210
    %v6350 = vadd.f32 %v6314, %v6315
    %v6351 = vadd.f32 %v6350, %v6316
    %v6352 = vadd.f32 %v6351, %v6317
    %v6353 = vadd.f32 %v6352, %v6318
    %v6354 = vadd.f32 %v6353, %v6319
    %v6355 = vadd.f32 %v6354, %v6320
    %v6356 = vadd.f32 %v6355, %v6321
    %v6357 = vadd.f32 %v6356, %v6322
    %v6358 = vadd.f32 %v6357, %v6323
    %v6359 = vadd.f32 %v6358, %v6324
    %v6360 = vadd.f32 %v6359, %v6325
    %v6361 = vadd.f32 %v6360, %v6326
    %v6362 = vadd.f32 %v6361, %v6327
    %v6363 = vadd.f32 %v6362, %v6328
    %v6364 = vadd.f32 %v6363, %v6329
    %v6365 = vadd.f32 %v6364, %v6330
    %v6366 = vadd.f32 %v6365, %v6331
    %v6367 = vadd.f32 %v6366, %v6332
    %v6368 = vadd.f32 %v6367, %v6333
    %v6369 = vadd.f32 %v6368, %v6334
    %v6370 = vadd.f32 %v6369, %v6335
    %v6371 = vadd.f32 %v6370, %v6336
    %v6372 = vadd.f32 %v6371, %v6337
    %v6373 = vadd.f32 %v6372, %v6338
    %v6374 = vadd.f32 %v6373, %v6339
    %v6375 = vadd.f32 %v6374, %v6340
    %v6376 = vadd.f32 %v6375, %v6341
    %v6377 = vadd.f32 %v6376, %v6342
    %v6378 = vadd.f32 %v6377, %v6343
    %v6379 = vadd.f32 %v6378, %v6344
    %v6380 = vadd.f32 %v6379, %v6345
    %v6381 = vadd.f32 %v6380, %v6346
    %v6382 = vadd.f32 %v6381, %v6347
    %v6383 = vadd.f32 %v6382, %v6348
    %v6384 = vadd.f32 %v6383, %v6349
    %v6385 = vrot.slane %v6384, 4
    %v6386 = vadd.f32 %v6384, %v6385
    %v6387 = vrot.slane %v6386, 2
    %v6388 = vadd.f32 %v6386, %v6387
    %v6389 = vrot.slane %v6388, 1
    %v6390 = vadd.f32 %v6388, %v6389
    %v6391 = vadd.f32 %v3289, %v6390
    %v6392 = vmul.f32 %v6241, %v6314
    %v6393 = vmul.f32 %v6242, %v6315
    %v6394 = vmul.f32 %v6243, %v6316
    %v6395 = vmul.f32 %v6244, %v6317
    %v6396 = vmul.f32 %v6245, %v6318
    %v6397 = vmul.f32 %v6246, %v6319
    %v6398 = vmul.f32 %v6247, %v6320
    %v6399 = vmul.f32 %v6248, %v6321
    %v6400 = vmul.f32 %v6249, %v6322
    %v6401 = vmul.f32 %v6250, %v6323
    %v6402 = vmul.f32 %v6251, %v6324
    %v6403 = vmul.f32 %v6252, %v6325
    %v6404 = vmul.f32 %v6253, %v6326
    %v6405 = vmul.f32 %v6254, %v6327
    %v6406 = vmul.f32 %v6255, %v6328
    %v6407 = vmul.f32 %v6256, %v6329
    %v6408 = vmul.f32 %v6257, %v6330
    %v6409 = vmul.f32 %v6258, %v6331
    %v6410 = vmul.f32 %v6259, %v6332
    %v6411 = vmul.f32 %v6260, %v6333
    %v6412 = vmul.f32 %v6261, %v6334
    %v6413 = vmul.f32 %v6262, %v6335
    %v6414 = vmul.f32 %v6263, %v6336
    %v6415 = vmul.f32 %v6264, %v6337
    %v6416 = vmul.f32 %v6265, %v6338
    %v6417 = vmul.f32 %v6266, %v6339
    %v6418 = vmul.f32 %v6267, %v6340
    %v6419 = vmul.f32 %v6268, %v6341
    %v6420 = vmul.f32 %v6269, %v6342
    %v6421 = vmul.f32 %v6270, %v6343
    %v6422 = vmul.f32 %v6271, %v6344
    %v6423 = vmul.f32 %v6272, %v6345
    %v6424 = vmul.f32 %v6273, %v6346
    %v6425 = vmul.f32 %v6274, %v6347
    %v6426 = vmul.f32 %v6275, %v6348
    %v6427 = vmul.f32 %v6276, %v6349
    %v6428 = vadd.f32 %v6392, %v6393
    %v6429 = vadd.f32 %v6428, %v6394
    %v6430 = vadd.f32 %v6429, %v6395
    %v6431 = vadd.f32 %v6430, %v6396
    %v6432 = vadd.f32 %v6431, %v6397
    %v6433 = vadd.f32 %v6432, %v6398
    %v6434 = vadd.f32 %v6433, %v6399
    %v6435 = vadd.f32 %v6434, %v6400
    %v6436 = vadd.f32 %v6435, %v6401
    %v6437 = vadd.f32 %v6436, %v6402
    %v6438 = vadd.f32 %v6437, %v6403
    %v6439 = vadd.f32 %v6438, %v6404
    %v6440 = vadd.f32 %v6439, %v6405
    %v6441 = vadd.f32 %v6440, %v6406
    %v6442 = vadd.f32 %v6441, %v6407
    %v6443 = vadd.f32 %v6442, %v6408
    %v6444 = vadd.f32 %v6443, %v6409
    %v6445 = vadd.f32 %v6444, %v6410
    %v6446 = vadd.f32 %v6445, %v6411
    %v6447 = vadd.f32 %v6446, %v6412
    %v6448 = vadd.f32 %v6447, %v6413
    %v6449 = vadd.f32 %v6448, %v6414
    %v6450 = vadd.f32 %v6449, %v6415
    %v6451 = vadd.f32 %v6450, %v6416
    %v6452 = vadd.f32 %v6451, %v6417
    %v6453 = vadd.f32 %v6452, %v6418
    %v6454 = vadd.f32 %v6453, %v6419
    %v6455 = vadd.f32 %v6454, %v6420
    %v6456 = vadd.f32 %v6455, %v6421
    %v6457 = vadd.f32 %v6456, %v6422
    %v6458 = vadd.f32 %v6457, %v6423
    %v6459 = vadd.f32 %v6458, %v6424
    %v6460 = vadd.f32 %v6459, %v6425
    %v6461 = vadd.f32 %v6460, %v6426
    %v6462 = vadd.f32 %v6461, %v6427
    %v6463 = vrot.slane %v6462, 4
    %v6464 = vadd.f32 %v6462, %v6463
    %v6465 = vrot.slane %v6464, 2
    %v6466 = vadd.f32 %v6464, %v6465
    %v6467 = vrot.slane %v6466, 1
    %v6468 = vadd.f32 %v6466, %v6467
    %v6469 = vadd.f32 %v3367, %v6468
    %v6470 = vld [vmem:[#allocation4] sm:$0x1]
    %v6471 = vadd.f32 %v6470, %v6391
    %6472 = vst [vmem:[#allocation4] sm:$0x1] %v6471
    %v6473 = vld [vmem:[#allocation6] sm:$0x1]
    %v6474 = vadd.f32 %v6473, %v6469
    %6475 = vst [vmem:[#allocation6] sm:$0x1] %v6474
    // Predicated region
    $region22: #{tpu_custom_call.1} parent=1 // pred_check
      _
    $region23: #{tpu_custom_call.1} parent=1 // pred_check_branch
      %6477 = sbr.rel (0) target = $region25
    $region24: #{tpu_custom_call.1} parent=1 // pred_region
      %s6479 = ssub.s32 9216, 9216
      %6480 = vsyncadd [#allocation3], %s6479
      %s6481 = sshll.u32 [#allocation2], 4
      %s6482 = int_to_ptr.vmem [resolvable:$true] %s6481
      %6487 = dma.vmem_to_hbm [thread:$0]  %s6482, 9216, %s4, [#allocation3], 128, 128, 8
    $region25: #{tpu_custom_call.1} parent=1 // pred_fallthru
      _
    // Predicated region
    $region26: #{tpu_custom_call.1} parent=1 // pred_check
      _
    $region27: #{tpu_custom_call.1} parent=1 // pred_check_branch
      %6489 = sbr.rel (0) target = $region29
    $region28: #{tpu_custom_call.1} parent=1 // pred_region
      %s6491 = ssub.s32 16, 16
      %6492 = vsyncadd [#allocation5], %s6491
      %s6494 = sshll.u32 [#allocation4], 4
      %s6495 = int_to_ptr.vmem [resolvable:$true] %s6494
      %6497 = dma.vmem_to_hbm [thread:$0]  %s6495, 16, %s5, [#allocation5]
    $region29: #{tpu_custom_call.1} parent=1 // pred_fallthru
      _
    // Predicated region
    $region30: #{tpu_custom_call.1} parent=1 // pred_check
      _
    $region31: #{tpu_custom_call.1} parent=1 // pred_check_branch
      %6499 = sbr.rel (0) target = $region33
    $region32: #{tpu_custom_call.1} parent=1 // pred_region
      %s6501 = ssub.s32 16, 16
      %6502 = vsyncadd [#allocation5], %s6501
      %s6504 = sshll.u32 [#allocation6], 4
      %s6505 = int_to_ptr.vmem [resolvable:$true] %s6504
      %6507 = dma.vmem_to_hbm [thread:$0]  %s6505, 16, %s6, [#allocation5]
    $region33: #{tpu_custom_call.1} parent=1 // pred_fallthru
      _
    // Predicated region
    $region34: #{tpu_custom_call.1} parent=1 // pred_check
      _
    $region35: #{tpu_custom_call.1} parent=1 // pred_check_branch
      %6509 = sbr.rel (0) target = $region37
    $region36: #{tpu_custom_call.1} parent=1 // pred_region
      %6510 = dma.done [#allocation3], 9216
    $region37: #{tpu_custom_call.1} parent=1 // pred_fallthru
      _
    // Predicated region
    $region38: #{tpu_custom_call.1} parent=1 // pred_check
      _
    $region39: #{tpu_custom_call.1} parent=1 // pred_check_branch
      %6512 = sbr.rel (0) target = $region41
    $region40: #{tpu_custom_call.1} parent=1 // pred_region
      %6513 = dma.done [#allocation5], 16
    $region41: #{tpu_custom_call.1} parent=1 // pred_fallthru
      _
    // Predicated region
    $region42: #{tpu_custom_call.1} parent=1 // pred_check
      _
    $region43: #{tpu_custom_call.1} parent=1 // pred_check_branch
      %6515 = sbr.rel (0) target = $region45
    $region44: #{tpu_custom_call.1} parent=1 // pred_region
      %6516 = dma.done [#allocation5], 16
    $region45: #{tpu_custom_call.1} parent=1 // pred_fallthru
      _
    %6517 = vsyncpa [#allocation3], 1
    %6518 = vsyncpa [#allocation5], 1

</llo_original>
